<compile_context>
chip_gen: v7x
topology: tpu7x:2x2x1
jax: 0.10.0
libtpu: 0.0.40
codegen_flags: <defaults>
</compile_context>

<pallas_src>
import functools

import jax
import jax.numpy as jnp
from jax import lax
from jax.experimental import pallas as pl
from jax.experimental.pallas import tpu as pltpu

EPS = 1e-5        # torch BatchNorm1d default eps
DP = 128          # lane-dense padded feature width
BF = jnp.bfloat16


# ---------------- shared math ----------------

def _bn_relu(y, g, b):
    # two-pass training-mode BatchNorm1d (batch stats, biased var) + ReLU (ref)
    mean = jnp.mean(y, axis=0, keepdims=True)
    var = jnp.mean((y - mean) ** 2, axis=0, keepdims=True)
    yn = (y - mean) * lax.rsqrt(var + EPS)
    return jnp.maximum(yn * g + b, 0.0)


def _bn_relu_fold(y, g, b, inv_rows):
    # single-pass BN (+ReLU): var = E[y^2]-mean^2, scale/shift folded to one FMA
    mean = jnp.sum(y, axis=0, keepdims=True) * inv_rows
    ex2 = jnp.sum(y * y, axis=0, keepdims=True) * inv_rows
    var = jnp.maximum(ex2 - mean * mean, 0.0)
    scale = g * lax.rsqrt(var + EPS)
    shift = b - mean * scale
    return jnp.maximum(y * scale + shift, 0.0)


# ---------------- fused Pallas kernel ----------------

def _fused_mpnn_kernel(
    x_ref, src_col_ref, dst_col_ref, dst_row_ref, batch_row_ref, ea_ref,
    w_in_ref, b_in_ref,
    m1w_ref, m1b_ref, m1g_ref, m1be_ref,
    m2w_ref, m2b_ref, m2g_ref, m2be_ref,
    u1w_ref, u1b_ref, u1g_ref, u1be_ref,
    u2w_ref, u2b_ref, u2g_ref, u2be_ref,
    wp_ref, bp_ref,
    out_ref,
    h_scr,
    *, emb_dim,
):
    N = x_ref.shape[0]
    E = ea_ref.shape[0]
    B = out_ref.shape[0]
    L = m1w_ref.shape[0]
    inv_E = 1.0 / E
    inv_N = 1.0 / N

    # ---- in-kernel one-hot construction (iota + compare; VPU-only, no HBM).
    #      0/1 values are exact in bf16 -> build directly in MXU operand dtype.
    node_iota_e = lax.broadcasted_iota(jnp.int32, (E, N), 1)
    oh_dst = (dst_col_ref[...] == node_iota_e).astype(BF)     # (E,N) gather h_i
    oh_src = (src_col_ref[...] == node_iota_e).astype(BF)     # (E,N) gather h_j
    edge_iota_n = lax.broadcasted_iota(jnp.int32, (N, E), 0)
    oh_agg = (dst_row_ref[...] == edge_iota_n).astype(BF)     # (N,E) scatter-add
    graph_iota = lax.broadcasted_iota(jnp.int32, (B, N), 0)
    pool_cmp = batch_row_ref[...] == graph_iota
    oh_pool = pool_cmp.astype(BF)                             # (B,N) mean pool

    # pool counts (independent of h): hoisted off the kernel tail, exact divide
    cnt = jnp.maximum(
        jnp.sum(pool_cmp.astype(jnp.float32), axis=1, keepdims=True), 1.0)
    inv_cnt = 1.0 / cnt

    # edge_attr already lane-shifted to cols [2*emb_dim, 2*emb_dim+edge_dim)
    ea_sh = ea_ref[...]

    # ---- lin_in (h stays resident in VMEM scratch for the whole forward) ----
    h_scr[...] = jnp.dot(x_ref[...].astype(BF), w_in_ref[...],
                         preferred_element_type=jnp.float32) + b_in_ref[...]

    # ---- L x MPNNLayer (aggr='add'), residual h = h + conv(h, ...) ----
    def layer(l, carry):
        h = h_scr[...]
        hb = h.astype(BF)
        h_i = jnp.dot(oh_dst, hb, preferred_element_type=jnp.float32)
        h_j = jnp.dot(oh_src, hb, preferred_element_type=jnp.float32)

        # lane-pack cat([h_i, h_j, edge_attr]) into ONE (E,128) tile:
        #   h_i at lanes [0,D), roll(h_j,+D) at [D,2D), edge_attr at [2D,2D+ed)
        # (padded lanes of h are provably 0, so the rolled-around lanes are 0)
        packed_msg = h_i + pltpu.roll(h_j, emb_dim, 1) + ea_sh
        m = jnp.dot(packed_msg.astype(BF), m1w_ref[l],
                    preferred_element_type=jnp.float32) + m1b_ref[l]
        m = _bn_relu_fold(m, m1g_ref[l], m1be_ref[l], inv_E)
        m = jnp.dot(m.astype(BF), m2w_ref[l],
                    preferred_element_type=jnp.float32) + m2b_ref[l]
        m = _bn_relu_fold(m, m2g_ref[l], m2be_ref[l], inv_E)

        # scatter-add over target nodes as one-hot MXU matmul
        aggr = jnp.dot(oh_agg, m.astype(BF),
                       preferred_element_type=jnp.float32)

        # lane-pack cat([h, aggr]) the same way for mlp_upd
        packed_upd = h + pltpu.roll(aggr, emb_dim, 1)
        u = jnp.dot(packed_upd.astype(BF), u1w_ref[l],
                    preferred_element_type=jnp.float32) + u1b_ref[l]
        u = _bn_relu_fold(u, u1g_ref[l], u1be_ref[l], inv_N)
        u = jnp.dot(u.astype(BF), u2w_ref[l],
                    preferred_element_type=jnp.float32) + u2b_ref[l]
        u = _bn_relu_fold(u, u2g_ref[l], u2be_ref[l], inv_N)

        h_scr[...] = h + u            # residual, in-place in VMEM
        return carry

    layer_unroll = True if L <= 4 else 2   # cap unroll for deep models
    lax.fori_loop(0, L, layer, 0, unroll=layer_unroll)

    # ---- global_mean_pool + lin_pred ----
    h_graph = (jnp.dot(oh_pool, h_scr[...].astype(BF),
                       preferred_element_type=jnp.float32) * inv_cnt)
    out_ref[...] = jnp.dot(h_graph.astype(BF), wp_ref[...],
                           preferred_element_type=jnp.float32) + bp_ref[...]


# ---------------- wrapper: pad / pack / stack params, one pallas_call ----------

def _pad2(a, rows, cols):
    return jnp.pad(a, ((0, rows - a.shape[0]), (0, cols - a.shape[1])))


def mpnn_forward_pallas(params, x, edge_index, edge_attr, batch, num_graphs):
    N, _ = x.shape
    E, edge_dim = edge_attr.shape
    layers = params['layers']
    L = len(layers)
    B = int(num_graphs)

    w_in, b_in = params['lin_in']
    D = w_in.shape[1]
    w_pred, b_pred = params['lin_pred']
    out_dim = w_pred.shape[1]

    assert 2 * D + edge_dim <= DP, "lane-packing needs 2*emb_dim + edge_dim <= 128"

    # activations / indices (feature axes padded lane-dense to 128)
    x_p = _pad2(x, N, DP)
    # edge_attr pre-shifted to lanes [2D, 2D+edge_dim): folds straight into the
    # packed message tile, no in-kernel roll needed for it.
    ea_sh = jnp.pad(edge_attr, ((0, 0), (2 * D, DP - 2 * D - edge_dim)))
    src = edge_index[0].astype(jnp.int32)
    dst = edge_index[1].astype(jnp.int32)
    src_col = src.reshape(E, 1)
    dst_col = dst.reshape(E, 1)
    dst_row = dst.reshape(1, E)
    batch_row = batch.astype(jnp.int32).reshape(1, N)

    # weights zero-padded to (128,128) and cast to bf16 (MXU operand dtype);
    # biases / BN affine kept f32 (VPU/EUP math stays f32 -- v5e-safe).
    # NOTE: padding msg1 (2D+edge_dim,D) / upd1 (2D,D) as-is keeps their row
    # layout exactly matching the lane-packed inputs, so no weight splitting.
    w_in_p = _pad2(w_in, DP, DP).astype(BF)
    b_in_p = _pad2(b_in, 1, DP)
    w_pred_p = _pad2(w_pred, DP, DP).astype(BF)
    b_pred_p = _pad2(b_pred, 1, DP)

    def stack_w(key):
        return jnp.stack([_pad2(lp[key][0], DP, DP) for lp in layers]).astype(BF)

    def stack_v(key, idx):
        return jnp.stack([_pad2(lp[key][idx], 1, DP) for lp in layers])

    m1w, m1b, m1g, m1be = stack_w('msg1'), stack_v('msg1', 1), stack_v('msg1', 2), stack_v('msg1', 3)
    m2w, m2b, m2g, m2be = stack_w('msg2'), stack_v('msg2', 1), stack_v('msg2', 2), stack_v('msg2', 3)
    u1w, u1b, u1g, u1be = stack_w('upd1'), stack_v('upd1', 1), stack_v('upd1', 2), stack_v('upd1', 3)
    u2w, u2b, u2g, u2be = stack_w('upd2'), stack_v('upd2', 1), stack_v('upd2', 2), stack_v('upd2', 3)

    args = (x_p, src_col, dst_col, dst_row, batch_row, ea_sh,
            w_in_p, b_in_p,
            m1w, m1b, m1g, m1be,
            m2w, m2b, m2g, m2be,
            u1w, u1b, u1g, u1be,
            u2w, u2b, u2g, u2be,
            w_pred_p, b_pred_p)

    flops = 2 * (N * DP * DP
                 + L * (2 * E * N * DP + 2 * E * DP * DP + N * E * DP + 3 * N * DP * DP)
                 + B * N * DP + B * DP * DP)
    bytes_accessed = sum(int(a.size) * a.dtype.itemsize for a in args) + B * DP * 4

    kernel = functools.partial(_fused_mpnn_kernel, emb_dim=D)

    out_pad = pl.pallas_call(
        kernel,
        out_shape=jax.ShapeDtypeStruct((B, DP), jnp.float32),
        in_specs=[pl.BlockSpec(memory_space=pltpu.MemorySpace.VMEM)] * len(args),
        out_specs=pl.BlockSpec(memory_space=pltpu.MemorySpace.VMEM),
        scratch_shapes=[pltpu.VMEM((N, DP), jnp.float32)],   # h resident across layers
        compiler_params=pltpu.CompilerParams(
            vmem_limit_bytes=48 * 1024 * 1024),
        cost_estimate=pl.CostEstimate(flops=int(flops),
                                      transcendentals=int(L * 4 * DP + B),
                                      bytes_accessed=int(bytes_accessed)),
    )(*args)

    return out_pad[:, :out_dim].reshape(-1)   # out.view(-1)


# ---------------- pure-JAX reference (unpadded, concat form of the module) ------

def mpnn_forward_ref(params, x, edge_index, edge_attr, batch, num_graphs):
    N = x.shape[0]
    src, dst = edge_index[0], edge_index[1]
    w, b = params['lin_in']
    h = x @ w + b
    for lp in params['layers']:
        h_i = jnp.take(h, dst, axis=0)
        h_j = jnp.take(h, src, axis=0)
        msg_in = jnp.concatenate([h_i, h_j, edge_attr], axis=-1)
        w1, b1, g1, be1 = lp['msg1']
        m = _bn_relu(msg_in @ w1 + b1, g1, be1)
        w2, b2, g2, be2 = lp['msg2']
        m = _bn_relu(m @ w2 + b2, g2, be2)
        onehot = (dst[None, :] == jnp.arange(N)[:, None]).astype(jnp.float32)
        aggr = onehot @ m
        upd_in = jnp.concatenate([h, aggr], axis=-1)
        w3, b3, g3, be3 = lp['upd1']
        u = _bn_relu(upd_in @ w3 + b3, g3, be3)
        w4, b4, g4, be4 = lp['upd2']
        u = _bn_relu(u @ w4 + b4, g4, be4)
        h = h + u
    onehot_pool = (batch[None, :] == jnp.arange(num_graphs)[:, None]).astype(jnp.float32)
    counts = jnp.maximum(jnp.sum(onehot_pool, axis=1, keepdims=True), 1.0)
    h_graph = (onehot_pool @ h) / counts
    w, b = params['lin_pred']
    return (h_graph @ w + b).reshape(-1)


# ---------------- parameters ----------------

def init_params(key, num_layers, emb_dim, in_dim, edge_dim, out_dim):
    def dense(k, fan_in, fan_out):
        k1, k2 = jax.random.split(k)
        w = jax.random.normal(k1, (fan_in, fan_out), jnp.float32) / jnp.sqrt(float(fan_in))
        b = 0.1 * jax.random.normal(k2, (1, fan_out), jnp.float32)
        return (w, b)

    def bn(k, dim):
        k1, k2 = jax.random.split(k)
        g = 1.0 + 0.1 * jax.random.normal(k1, (1, dim), jnp.float32)
        be = 0.1 * jax.random.normal(k2, (1, dim), jnp.float32)
        return (g, be)

    keys = jax.random.split(key, 2 + num_layers)
    params = {
        'lin_in': dense(keys[0], in_dim, emb_dim),
        'lin_pred': dense(keys[1], emb_dim, out_dim),
        'layers': [],
    }
    for l in range(num_layers):
        ks = jax.random.split(keys[2 + l], 8)
        params['layers'].append({
            'msg1': dense(ks[0], 2 * emb_dim + edge_dim, emb_dim) + bn(ks[1], emb_dim),
            'msg2': dense(ks[2], emb_dim, emb_dim) + bn(ks[3], emb_dim),
            'upd1': dense(ks[4], 2 * emb_dim, emb_dim) + bn(ks[5], emb_dim),
            'upd2': dense(ks[6], emb_dim, emb_dim) + bn(ks[7], emb_dim),
        })
    return params


# ---------------- main ----------------

if __name__ == "__main__":
    key = jax.random.PRNGKey(0)
    num_layers, emb_dim, in_dim, edge_dim, out_dim = 2, 32, 12, 8, 1
    N, E, B = 16, 40, 2

    kp, kx, ke, ki = jax.random.split(key, 4)
    params = init_params(kp, num_layers, emb_dim, in_dim, edge_dim, out_dim)
    x = jax.random.normal(kx, (N, in_dim), jnp.float32)
    edge_attr = jax.random.normal(ke, (E, edge_dim), jnp.float32)
    edge_index = jax.random.randint(ki, (2, E), 0, N, dtype=jnp.int32)
    batch = jnp.concatenate([jnp.zeros(N // 2, jnp.int32),
                             jnp.ones(N - N // 2, jnp.int32)])

    out = mpnn_forward_pallas(params, x, edge_index, edge_attr, batch, B)
    out = jax.block_until_ready(out)

    ref = mpnn_forward_ref(params, x, edge_index, edge_attr, batch, B)

    assert out.shape == (B * out_dim,), out.shape
    assert bool(jnp.all(jnp.isfinite(out)))
    assert bool(jnp.allclose(out, ref, rtol=5e-2, atol=5e-2)), (out, ref)
    print("KERNEL_OK")
</pallas_src>

<mosaic_0001>
module attributes {stable_mosaic.version = 11 : i64} {
  func.func @_fused_mpnn_kernel(%arg0: memref<16x128xf32, #tpu.memory_space<vmem>>, %arg1: memref<40x1xi32, #tpu.memory_space<vmem>>, %arg2: memref<40x1xi32, #tpu.memory_space<vmem>>, %arg3: memref<1x40xi32, #tpu.memory_space<vmem>>, %arg4: memref<1x16xi32, #tpu.memory_space<vmem>>, %arg5: memref<40x128xf32, #tpu.memory_space<vmem>>, %arg6: memref<128x128xbf16, #tpu.memory_space<vmem>>, %arg7: memref<1x128xf32, #tpu.memory_space<vmem>>, %arg8: memref<2x128x128xbf16, #tpu.memory_space<vmem>>, %arg9: memref<2x1x128xf32, #tpu.memory_space<vmem>>, %arg10: memref<2x1x128xf32, #tpu.memory_space<vmem>>, %arg11: memref<2x1x128xf32, #tpu.memory_space<vmem>>, %arg12: memref<2x128x128xbf16, #tpu.memory_space<vmem>>, %arg13: memref<2x1x128xf32, #tpu.memory_space<vmem>>, %arg14: memref<2x1x128xf32, #tpu.memory_space<vmem>>, %arg15: memref<2x1x128xf32, #tpu.memory_space<vmem>>, %arg16: memref<2x128x128xbf16, #tpu.memory_space<vmem>>, %arg17: memref<2x1x128xf32, #tpu.memory_space<vmem>>, %arg18: memref<2x1x128xf32, #tpu.memory_space<vmem>>, %arg19: memref<2x1x128xf32, #tpu.memory_space<vmem>>, %arg20: memref<2x128x128xbf16, #tpu.memory_space<vmem>>, %arg21: memref<2x1x128xf32, #tpu.memory_space<vmem>>, %arg22: memref<2x1x128xf32, #tpu.memory_space<vmem>>, %arg23: memref<2x1x128xf32, #tpu.memory_space<vmem>>, %arg24: memref<128x128xbf16, #tpu.memory_space<vmem>>, %arg25: memref<1x128xf32, #tpu.memory_space<vmem>>, %arg26: memref<2x128xf32, #tpu.memory_space<vmem>>, %arg27: memref<16x128xf32, #tpu.memory_space<vmem>>) attributes {dimension_semantics = [], scalar_prefetch = 0 : i64, scratch_operands = 1 : i64, tpu.core_type = #tpu.core_type<tc>} {
    %0 = tpu.iota {dimensions = array<i32: 1>} : vector<40x16xi32>
    %c0 = arith.constant 0 : index
    %c0_0 = arith.constant 0 : index
    %1 = vector.load %arg2[%c0, %c0_0] : memref<40x1xi32, #tpu.memory_space<vmem>>, vector<40x1xi32>
    %2 = vector.broadcast %1 : vector<40x1xi32> to vector<40x16xi32>
    %3 = arith.cmpi eq, %2, %0 : vector<40x16xi32>
    %4 = arith.extui %3 : vector<40x16xi1> to vector<40x16xi32>
    %5 = arith.sitofp %4 : vector<40x16xi32> to vector<40x16xf32>
    %6 = arith.truncf %5 : vector<40x16xf32> to vector<40x16xbf16>
    %c0_1 = arith.constant 0 : index
    %c0_2 = arith.constant 0 : index
    %7 = vector.load %arg1[%c0_1, %c0_2] : memref<40x1xi32, #tpu.memory_space<vmem>>, vector<40x1xi32>
    %8 = vector.broadcast %7 : vector<40x1xi32> to vector<40x16xi32>
    %9 = arith.cmpi eq, %8, %0 : vector<40x16xi32>
    %10 = arith.extui %9 : vector<40x16xi1> to vector<40x16xi32>
    %11 = arith.sitofp %10 : vector<40x16xi32> to vector<40x16xf32>
    %12 = arith.truncf %11 : vector<40x16xf32> to vector<40x16xbf16>
    %13 = tpu.iota {dimensions = array<i32: 0>} : vector<16x40xi32>
    %c0_3 = arith.constant 0 : index
    %c0_4 = arith.constant 0 : index
    %14 = vector.load %arg3[%c0_3, %c0_4] : memref<1x40xi32, #tpu.memory_space<vmem>>, vector<1x40xi32>
    %15 = vector.broadcast %14 : vector<1x40xi32> to vector<16x40xi32>
    %16 = arith.cmpi eq, %15, %13 : vector<16x40xi32>
    %17 = arith.extui %16 : vector<16x40xi1> to vector<16x40xi32>
    %18 = arith.sitofp %17 : vector<16x40xi32> to vector<16x40xf32>
    %19 = arith.truncf %18 : vector<16x40xf32> to vector<16x40xbf16>
    %20 = tpu.iota {dimensions = array<i32: 0>} : vector<2x16xi32>
    %c0_5 = arith.constant 0 : index
    %c0_6 = arith.constant 0 : index
    %21 = vector.load %arg4[%c0_5, %c0_6] : memref<1x16xi32, #tpu.memory_space<vmem>>, vector<1x16xi32>
    %22 = vector.broadcast %21 : vector<1x16xi32> to vector<2x16xi32>
    %23 = arith.cmpi eq, %22, %20 : vector<2x16xi32>
    %24 = arith.extui %23 : vector<2x16xi1> to vector<2x16xi32>
    %25 = arith.sitofp %24 : vector<2x16xi32> to vector<2x16xf32>
    %26 = arith.truncf %25 : vector<2x16xf32> to vector<2x16xbf16>
    %27 = arith.extui %23 : vector<2x16xi1> to vector<2x16xi32>
    %28 = arith.sitofp %27 : vector<2x16xi32> to vector<2x16xf32>
    %cst = arith.constant dense<0.000000e+00> : vector<2xf32>
    %29 = vector.multi_reduction <add>, %28, %cst [1] : vector<2x16xf32> to vector<2xf32>
    %30 = vector.shape_cast %29 : vector<2xf32> to vector<2x1xf32>
    %cst_7 = arith.constant 1.000000e+00 : f32
    %31 = vector.broadcast %cst_7 : f32 to vector<2x1xf32>
    %32 = arith.maximumf %30, %31 : vector<2x1xf32>
    %cst_8 = arith.constant 1.000000e+00 : f32
    %33 = vector.broadcast %cst_8 : f32 to vector<2x1xf32>
    %34 = arith.divf %33, %32 : vector<2x1xf32>
    %c0_9 = arith.constant 0 : index
    %c0_10 = arith.constant 0 : index
    %35 = vector.load %arg5[%c0_9, %c0_10] : memref<40x128xf32, #tpu.memory_space<vmem>>, vector<40x128xf32>
    %c0_11 = arith.constant 0 : index
    %c0_12 = arith.constant 0 : index
    %36 = vector.load %arg0[%c0_11, %c0_12] : memref<16x128xf32, #tpu.memory_space<vmem>>, vector<16x128xf32>
    %37 = arith.truncf %36 : vector<16x128xf32> to vector<16x128xbf16>
    %c0_13 = arith.constant 0 : index
    %c0_14 = arith.constant 0 : index
    %38 = vector.load %arg6[%c0_13, %c0_14] : memref<128x128xbf16, #tpu.memory_space<vmem>>, vector<128x128xbf16>
    %cst_15 = arith.constant dense<0.000000e+00> : vector<16x128xf32>
    %39 = tpu.matmul %37, %38, %cst_15 {dimension_numbers = #tpu.dot_dimension_numbers<[1], [0], [0], [1], [0, 0, 1, 1], [], []>} : vector<16x128xbf16>, vector<128x128xbf16>, vector<16x128xf32> -> vector<16x128xf32>
    %c0_16 = arith.constant 0 : index
    %c0_17 = arith.constant 0 : index
    %40 = vector.load %arg7[%c0_16, %c0_17] : memref<1x128xf32, #tpu.memory_space<vmem>>, vector<1x128xf32>
    %41 = vector.broadcast %40 : vector<1x128xf32> to vector<16x128xf32>
    %42 = arith.addf %39, %41 : vector<16x128xf32>
    %c0_18 = arith.constant 0 : index
    %c0_19 = arith.constant 0 : index
    %43 = vector.load %arg27[%c0_18, %c0_19] : memref<16x128xf32, #tpu.memory_space<vmem>>, vector<16x128xf32>
    tpu.vector_store %arg27[%c0_18, %c0_19], %42 {strides = array<i32>} : memref<16x128xf32, #tpu.memory_space<vmem>>, vector<16x128xf32>,
    %c0_i32 = arith.constant 0 : i32
    %c0_20 = arith.constant 0 : index
    %c0_21 = arith.constant 0 : index
    %44 = vector.load %arg27[%c0_20, %c0_21] : memref<16x128xf32, #tpu.memory_space<vmem>>, vector<16x128xf32>
    %45 = arith.truncf %44 : vector<16x128xf32> to vector<16x128xbf16>
    %cst_22 = arith.constant dense<0.000000e+00> : vector<40x128xf32>
    %46 = tpu.matmul %6, %45, %cst_22 {dimension_numbers = #tpu.dot_dimension_numbers<[1], [0], [0], [1], [0, 0, 1, 1], [], []>} : vector<40x16xbf16>, vector<16x128xbf16>, vector<40x128xf32> -> vector<40x128xf32>
    %cst_23 = arith.constant dense<0.000000e+00> : vector<40x128xf32>
    %47 = tpu.matmul %12, %45, %cst_23 {dimension_numbers = #tpu.dot_dimension_numbers<[1], [0], [0], [1], [0, 0, 1, 1], [], []>} : vector<40x16xbf16>, vector<16x128xbf16>, vector<40x128xf32> -> vector<40x128xf32>
    %c32_i32 = arith.constant 32 : i32
    %48 = tpu.dynamic_rotate %47 by %c32_i32 dim 1 : vector<40x128xf32>, i32 -> vector<40x128xf32>
    %49 = arith.addf %46, %48 : vector<40x128xf32>
    %50 = arith.addf %49, %35 : vector<40x128xf32>
    %51 = arith.truncf %50 : vector<40x128xf32> to vector<40x128xbf16>
    %52 = arith.index_cast %c0_i32 : i32 to index
    %c0_24 = arith.constant 0 : index
    %c0_25 = arith.constant 0 : index
    %53 = vector.load %arg8[%52, %c0_24, %c0_25] : memref<2x128x128xbf16, #tpu.memory_space<vmem>>, vector<1x128x128xbf16>
    %54 = vector.shape_cast %53 : vector<1x128x128xbf16> to vector<128x128xbf16>
    %cst_26 = arith.constant dense<0.000000e+00> : vector<40x128xf32>
    %55 = tpu.matmul %51, %54, %cst_26 {dimension_numbers = #tpu.dot_dimension_numbers<[1], [0], [0], [1], [0, 0, 1, 1], [], []>} : vector<40x128xbf16>, vector<128x128xbf16>, vector<40x128xf32> -> vector<40x128xf32>
    %56 = arith.index_cast %c0_i32 : i32 to index
    %c0_27 = arith.constant 0 : index
    %c0_28 = arith.constant 0 : index
    %57 = vector.load %arg9[%56, %c0_27, %c0_28] : memref<2x1x128xf32, #tpu.memory_space<vmem>>, vector<1x1x128xf32>
    %58 = vector.shape_cast %57 : vector<1x1x128xf32> to vector<1x128xf32>
    %59 = vector.broadcast %58 : vector<1x128xf32> to vector<40x128xf32>
    %60 = arith.addf %55, %59 : vector<40x128xf32>
    %61 = arith.index_cast %c0_i32 : i32 to index
    %c0_29 = arith.constant 0 : index
    %c0_30 = arith.constant 0 : index
    %62 = vector.load %arg10[%61, %c0_29, %c0_30] : memref<2x1x128xf32, #tpu.memory_space<vmem>>, vector<1x1x128xf32>
    %63 = vector.shape_cast %62 : vector<1x1x128xf32> to vector<1x128xf32>
    %64 = arith.index_cast %c0_i32 : i32 to index
    %c0_31 = arith.constant 0 : index
    %c0_32 = arith.constant 0 : index
    %65 = vector.load %arg11[%64, %c0_31, %c0_32] : memref<2x1x128xf32, #tpu.memory_space<vmem>>, vector<1x1x128xf32>
    %66 = vector.shape_cast %65 : vector<1x1x128xf32> to vector<1x128xf32>
    %cst_33 = arith.constant dense<0.000000e+00> : vector<128xf32>
    %67 = vector.multi_reduction <add>, %60, %cst_33 [0] : vector<40x128xf32> to vector<128xf32>
    %68 = vector.shape_cast %67 : vector<128xf32> to vector<1x128xf32>
    %cst_34 = arith.constant 2.500000e-02 : f32
    %69 = vector.broadcast %cst_34 : f32 to vector<1x128xf32>
    %70 = arith.mulf %68, %69 : vector<1x128xf32>
    %71 = arith.mulf %60, %60 : vector<40x128xf32>
    %cst_35 = arith.constant dense<0.000000e+00> : vector<128xf32>
    %72 = vector.multi_reduction <add>, %71, %cst_35 [0] : vector<40x128xf32> to vector<128xf32>
    %73 = vector.shape_cast %72 : vector<128xf32> to vector<1x128xf32>
    %cst_36 = arith.constant 2.500000e-02 : f32
    %74 = vector.broadcast %cst_36 : f32 to vector<1x128xf32>
    %75 = arith.mulf %73, %74 : vector<1x128xf32>
    %76 = arith.mulf %70, %70 : vector<1x128xf32>
    %77 = arith.subf %75, %76 : vector<1x128xf32>
    %cst_37 = arith.constant 0.000000e+00 : f32
    %78 = vector.broadcast %cst_37 : f32 to vector<1x128xf32>
    %79 = arith.maximumf %77, %78 : vector<1x128xf32>
    %cst_38 = arith.constant 9.99999974E-6 : f32
    %80 = vector.broadcast %cst_38 : f32 to vector<1x128xf32>
    %81 = arith.addf %79, %80 : vector<1x128xf32>
    %82 = math.rsqrt %81 : vector<1x128xf32>
    %83 = arith.mulf %63, %82 : vector<1x128xf32>
    %84 = arith.mulf %70, %83 : vector<1x128xf32>
    %85 = arith.subf %66, %84 : vector<1x128xf32>
    %86 = vector.broadcast %83 : vector<1x128xf32> to vector<40x128xf32>
    %87 = arith.mulf %60, %86 : vector<40x128xf32>
    %88 = vector.broadcast %85 : vector<1x128xf32> to vector<40x128xf32>
    %89 = arith.addf %87, %88 : vector<40x128xf32>
    %cst_39 = arith.constant 0.000000e+00 : f32
    %90 = vector.broadcast %cst_39 : f32 to vector<40x128xf32>
    %91 = arith.maximumf %89, %90 : vector<40x128xf32>
    %92 = arith.truncf %91 : vector<40x128xf32> to vector<40x128xbf16>
    %93 = arith.index_cast %c0_i32 : i32 to index
    %c0_40 = arith.constant 0 : index
    %c0_41 = arith.constant 0 : index
    %94 = vector.load %arg12[%93, %c0_40, %c0_41] : memref<2x128x128xbf16, #tpu.memory_space<vmem>>, vector<1x128x128xbf16>
    %95 = vector.shape_cast %94 : vector<1x128x128xbf16> to vector<128x128xbf16>
    %cst_42 = arith.constant dense<0.000000e+00> : vector<40x128xf32>
    %96 = tpu.matmul %92, %95, %cst_42 {dimension_numbers = #tpu.dot_dimension_numbers<[1], [0], [0], [1], [0, 0, 1, 1], [], []>} : vector<40x128xbf16>, vector<128x128xbf16>, vector<40x128xf32> -> vector<40x128xf32>
    %97 = arith.index_cast %c0_i32 : i32 to index
    %c0_43 = arith.constant 0 : index
    %c0_44 = arith.constant 0 : index
    %98 = vector.load %arg13[%97, %c0_43, %c0_44] : memref<2x1x128xf32, #tpu.memory_space<vmem>>, vector<1x1x128xf32>
    %99 = vector.shape_cast %98 : vector<1x1x128xf32> to vector<1x128xf32>
    %100 = vector.broadcast %99 : vector<1x128xf32> to vector<40x128xf32>
    %101 = arith.addf %96, %100 : vector<40x128xf32>
    %102 = arith.index_cast %c0_i32 : i32 to index
    %c0_45 = arith.constant 0 : index
    %c0_46 = arith.constant 0 : index
    %103 = vector.load %arg14[%102, %c0_45, %c0_46] : memref<2x1x128xf32, #tpu.memory_space<vmem>>, vector<1x1x128xf32>
    %104 = vector.shape_cast %103 : vector<1x1x128xf32> to vector<1x128xf32>
    %105 = arith.index_cast %c0_i32 : i32 to index
    %c0_47 = arith.constant 0 : index
    %c0_48 = arith.constant 0 : index
    %106 = vector.load %arg15[%105, %c0_47, %c0_48] : memref<2x1x128xf32, #tpu.memory_space<vmem>>, vector<1x1x128xf32>
    %107 = vector.shape_cast %106 : vector<1x1x128xf32> to vector<1x128xf32>
    %cst_49 = arith.constant dense<0.000000e+00> : vector<128xf32>
    %108 = vector.multi_reduction <add>, %101, %cst_49 [0] : vector<40x128xf32> to vector<128xf32>
    %109 = vector.shape_cast %108 : vector<128xf32> to vector<1x128xf32>
    %cst_50 = arith.constant 2.500000e-02 : f32
    %110 = vector.broadcast %cst_50 : f32 to vector<1x128xf32>
    %111 = arith.mulf %109, %110 : vector<1x128xf32>
    %112 = arith.mulf %101, %101 : vector<40x128xf32>
    %cst_51 = arith.constant dense<0.000000e+00> : vector<128xf32>
    %113 = vector.multi_reduction <add>, %112, %cst_51 [0] : vector<40x128xf32> to vector<128xf32>
    %114 = vector.shape_cast %113 : vector<128xf32> to vector<1x128xf32>
    %cst_52 = arith.constant 2.500000e-02 : f32
    %115 = vector.broadcast %cst_52 : f32 to vector<1x128xf32>
    %116 = arith.mulf %114, %115 : vector<1x128xf32>
    %117 = arith.mulf %111, %111 : vector<1x128xf32>
    %118 = arith.subf %116, %117 : vector<1x128xf32>
    %cst_53 = arith.constant 0.000000e+00 : f32
    %119 = vector.broadcast %cst_53 : f32 to vector<1x128xf32>
    %120 = arith.maximumf %118, %119 : vector<1x128xf32>
    %cst_54 = arith.constant 9.99999974E-6 : f32
    %121 = vector.broadcast %cst_54 : f32 to vector<1x128xf32>
    %122 = arith.addf %120, %121 : vector<1x128xf32>
    %123 = math.rsqrt %122 : vector<1x128xf32>
    %124 = arith.mulf %104, %123 : vector<1x128xf32>
    %125 = arith.mulf %111, %124 : vector<1x128xf32>
    %126 = arith.subf %107, %125 : vector<1x128xf32>
    %127 = vector.broadcast %124 : vector<1x128xf32> to vector<40x128xf32>
    %128 = arith.mulf %101, %127 : vector<40x128xf32>
    %129 = vector.broadcast %126 : vector<1x128xf32> to vector<40x128xf32>
    %130 = arith.addf %128, %129 : vector<40x128xf32>
    %cst_55 = arith.constant 0.000000e+00 : f32
    %131 = vector.broadcast %cst_55 : f32 to vector<40x128xf32>
    %132 = arith.maximumf %130, %131 : vector<40x128xf32>
    %133 = arith.truncf %132 : vector<40x128xf32> to vector<40x128xbf16>
    %cst_56 = arith.constant dense<0.000000e+00> : vector<16x128xf32>
    %134 = tpu.matmul %19, %133, %cst_56 {dimension_numbers = #tpu.dot_dimension_numbers<[1], [0], [0], [1], [0, 0, 1, 1], [], []>} : vector<16x40xbf16>, vector<40x128xbf16>, vector<16x128xf32> -> vector<16x128xf32>
    %c32_i32_57 = arith.constant 32 : i32
    %135 = tpu.dynamic_rotate %134 by %c32_i32_57 dim 1 : vector<16x128xf32>, i32 -> vector<16x128xf32>
    %136 = arith.addf %44, %135 : vector<16x128xf32>
    %137 = arith.truncf %136 : vector<16x128xf32> to vector<16x128xbf16>
    %138 = arith.index_cast %c0_i32 : i32 to index
    %c0_58 = arith.constant 0 : index
    %c0_59 = arith.constant 0 : index
    %139 = vector.load %arg16[%138, %c0_58, %c0_59] : memref<2x128x128xbf16, #tpu.memory_space<vmem>>, vector<1x128x128xbf16>
    %140 = vector.shape_cast %139 : vector<1x128x128xbf16> to vector<128x128xbf16>
    %cst_60 = arith.constant dense<0.000000e+00> : vector<16x128xf32>
    %141 = tpu.matmul %137, %140, %cst_60 {dimension_numbers = #tpu.dot_dimension_numbers<[1], [0], [0], [1], [0, 0, 1, 1], [], []>} : vector<16x128xbf16>, vector<128x128xbf16>, vector<16x128xf32> -> vector<16x128xf32>
    %142 = arith.index_cast %c0_i32 : i32 to index
    %c0_61 = arith.constant 0 : index
    %c0_62 = arith.constant 0 : index
    %143 = vector.load %arg17[%142, %c0_61, %c0_62] : memref<2x1x128xf32, #tpu.memory_space<vmem>>, vector<1x1x128xf32>
    %144 = vector.shape_cast %143 : vector<1x1x128xf32> to vector<1x128xf32>
    %145 = vector.broadcast %144 : vector<1x128xf32> to vector<16x128xf32>
    %146 = arith.addf %141, %145 : vector<16x128xf32>
    %147 = arith.index_cast %c0_i32 : i32 to index
    %c0_63 = arith.constant 0 : index
    %c0_64 = arith.constant 0 : index
    %148 = vector.load %arg18[%147, %c0_63, %c0_64] : memref<2x1x128xf32, #tpu.memory_space<vmem>>, vector<1x1x128xf32>
    %149 = vector.shape_cast %148 : vector<1x1x128xf32> to vector<1x128xf32>
    %150 = arith.index_cast %c0_i32 : i32 to index
    %c0_65 = arith.constant 0 : index
    %c0_66 = arith.constant 0 : index
    %151 = vector.load %arg19[%150, %c0_65, %c0_66] : memref<2x1x128xf32, #tpu.memory_space<vmem>>, vector<1x1x128xf32>
    %152 = vector.shape_cast %151 : vector<1x1x128xf32> to vector<1x128xf32>
    %cst_67 = arith.constant dense<0.000000e+00> : vector<128xf32>
    %153 = vector.multi_reduction <add>, %146, %cst_67 [0] : vector<16x128xf32> to vector<128xf32>
    %154 = vector.shape_cast %153 : vector<128xf32> to vector<1x128xf32>
    %cst_68 = arith.constant 6.250000e-02 : f32
    %155 = vector.broadcast %cst_68 : f32 to vector<1x128xf32>
    %156 = arith.mulf %154, %155 : vector<1x128xf32>
    %157 = arith.mulf %146, %146 : vector<16x128xf32>
    %cst_69 = arith.constant dense<0.000000e+00> : vector<128xf32>
    %158 = vector.multi_reduction <add>, %157, %cst_69 [0] : vector<16x128xf32> to vector<128xf32>
    %159 = vector.shape_cast %158 : vector<128xf32> to vector<1x128xf32>
    %cst_70 = arith.constant 6.250000e-02 : f32
    %160 = vector.broadcast %cst_70 : f32 to vector<1x128xf32>
    %161 = arith.mulf %159, %160 : vector<1x128xf32>
    %162 = arith.mulf %156, %156 : vector<1x128xf32>
    %163 = arith.subf %161, %162 : vector<1x128xf32>
    %cst_71 = arith.constant 0.000000e+00 : f32
    %164 = vector.broadcast %cst_71 : f32 to vector<1x128xf32>
    %165 = arith.maximumf %163, %164 : vector<1x128xf32>
    %cst_72 = arith.constant 9.99999974E-6 : f32
    %166 = vector.broadcast %cst_72 : f32 to vector<1x128xf32>
    %167 = arith.addf %165, %166 : vector<1x128xf32>
    %168 = math.rsqrt %167 : vector<1x128xf32>
    %169 = arith.mulf %149, %168 : vector<1x128xf32>
    %170 = arith.mulf %156, %169 : vector<1x128xf32>
    %171 = arith.subf %152, %170 : vector<1x128xf32>
    %172 = vector.broadcast %169 : vector<1x128xf32> to vector<16x128xf32>
    %173 = arith.mulf %146, %172 : vector<16x128xf32>
    %174 = vector.broadcast %171 : vector<1x128xf32> to vector<16x128xf32>
    %175 = arith.addf %173, %174 : vector<16x128xf32>
    %cst_73 = arith.constant 0.000000e+00 : f32
    %176 = vector.broadcast %cst_73 : f32 to vector<16x128xf32>
    %177 = arith.maximumf %175, %176 : vector<16x128xf32>
    %178 = arith.truncf %177 : vector<16x128xf32> to vector<16x128xbf16>
    %179 = arith.index_cast %c0_i32 : i32 to index
    %c0_74 = arith.constant 0 : index
    %c0_75 = arith.constant 0 : index
    %180 = vector.load %arg20[%179, %c0_74, %c0_75] : memref<2x128x128xbf16, #tpu.memory_space<vmem>>, vector<1x128x128xbf16>
    %181 = vector.shape_cast %180 : vector<1x128x128xbf16> to vector<128x128xbf16>
    %cst_76 = arith.constant dense<0.000000e+00> : vector<16x128xf32>
    %182 = tpu.matmul %178, %181, %cst_76 {dimension_numbers = #tpu.dot_dimension_numbers<[1], [0], [0], [1], [0, 0, 1, 1], [], []>} : vector<16x128xbf16>, vector<128x128xbf16>, vector<16x128xf32> -> vector<16x128xf32>
    %183 = arith.index_cast %c0_i32 : i32 to index
    %c0_77 = arith.constant 0 : index
    %c0_78 = arith.constant 0 : index
    %184 = vector.load %arg21[%183, %c0_77, %c0_78] : memref<2x1x128xf32, #tpu.memory_space<vmem>>, vector<1x1x128xf32>
    %185 = vector.shape_cast %184 : vector<1x1x128xf32> to vector<1x128xf32>
    %186 = vector.broadcast %185 : vector<1x128xf32> to vector<16x128xf32>
    %187 = arith.addf %182, %186 : vector<16x128xf32>
    %188 = arith.index_cast %c0_i32 : i32 to index
    %c0_79 = arith.constant 0 : index
    %c0_80 = arith.constant 0 : index
    %189 = vector.load %arg22[%188, %c0_79, %c0_80] : memref<2x1x128xf32, #tpu.memory_space<vmem>>, vector<1x1x128xf32>
    %190 = vector.shape_cast %189 : vector<1x1x128xf32> to vector<1x128xf32>
    %191 = arith.index_cast %c0_i32 : i32 to index
    %c0_81 = arith.constant 0 : index
    %c0_82 = arith.constant 0 : index
    %192 = vector.load %arg23[%191, %c0_81, %c0_82] : memref<2x1x128xf32, #tpu.memory_space<vmem>>, vector<1x1x128xf32>
    %193 = vector.shape_cast %192 : vector<1x1x128xf32> to vector<1x128xf32>
    %cst_83 = arith.constant dense<0.000000e+00> : vector<128xf32>
    %194 = vector.multi_reduction <add>, %187, %cst_83 [0] : vector<16x128xf32> to vector<128xf32>
    %195 = vector.shape_cast %194 : vector<128xf32> to vector<1x128xf32>
    %cst_84 = arith.constant 6.250000e-02 : f32
    %196 = vector.broadcast %cst_84 : f32 to vector<1x128xf32>
    %197 = arith.mulf %195, %196 : vector<1x128xf32>
    %198 = arith.mulf %187, %187 : vector<16x128xf32>
    %cst_85 = arith.constant dense<0.000000e+00> : vector<128xf32>
    %199 = vector.multi_reduction <add>, %198, %cst_85 [0] : vector<16x128xf32> to vector<128xf32>
    %200 = vector.shape_cast %199 : vector<128xf32> to vector<1x128xf32>
    %cst_86 = arith.constant 6.250000e-02 : f32
    %201 = vector.broadcast %cst_86 : f32 to vector<1x128xf32>
    %202 = arith.mulf %200, %201 : vector<1x128xf32>
    %203 = arith.mulf %197, %197 : vector<1x128xf32>
    %204 = arith.subf %202, %203 : vector<1x128xf32>
    %cst_87 = arith.constant 0.000000e+00 : f32
    %205 = vector.broadcast %cst_87 : f32 to vector<1x128xf32>
    %206 = arith.maximumf %204, %205 : vector<1x128xf32>
    %cst_88 = arith.constant 9.99999974E-6 : f32
    %207 = vector.broadcast %cst_88 : f32 to vector<1x128xf32>
    %208 = arith.addf %206, %207 : vector<1x128xf32>
    %209 = math.rsqrt %208 : vector<1x128xf32>
    %210 = arith.mulf %190, %209 : vector<1x128xf32>
    %211 = arith.mulf %197, %210 : vector<1x128xf32>
    %212 = arith.subf %193, %211 : vector<1x128xf32>
    %213 = vector.broadcast %210 : vector<1x128xf32> to vector<16x128xf32>
    %214 = arith.mulf %187, %213 : vector<16x128xf32>
    %215 = vector.broadcast %212 : vector<1x128xf32> to vector<16x128xf32>
    %216 = arith.addf %214, %215 : vector<16x128xf32>
    %cst_89 = arith.constant 0.000000e+00 : f32
    %217 = vector.broadcast %cst_89 : f32 to vector<16x128xf32>
    %218 = arith.maximumf %216, %217 : vector<16x128xf32>
    %219 = arith.addf %44, %218 : vector<16x128xf32>
    %c0_90 = arith.constant 0 : index
    %c0_91 = arith.constant 0 : index
    %220 = vector.load %arg27[%c0_90, %c0_91] : memref<16x128xf32, #tpu.memory_space<vmem>>, vector<16x128xf32>
    tpu.vector_store %arg27[%c0_90, %c0_91], %219 {strides = array<i32>} : memref<16x128xf32, #tpu.memory_space<vmem>>, vector<16x128xf32>,
    %c1_i32 = arith.constant 1 : i32
    %c0_92 = arith.constant 0 : index
    %c0_93 = arith.constant 0 : index
    %221 = vector.load %arg27[%c0_92, %c0_93] : memref<16x128xf32, #tpu.memory_space<vmem>>, vector<16x128xf32>
    %222 = arith.truncf %221 : vector<16x128xf32> to vector<16x128xbf16>
    %cst_94 = arith.constant dense<0.000000e+00> : vector<40x128xf32>
    %223 = tpu.matmul %6, %222, %cst_94 {dimension_numbers = #tpu.dot_dimension_numbers<[1], [0], [0], [1], [0, 0, 1, 1], [], []>} : vector<40x16xbf16>, vector<16x128xbf16>, vector<40x128xf32> -> vector<40x128xf32>
    %cst_95 = arith.constant dense<0.000000e+00> : vector<40x128xf32>
    %224 = tpu.matmul %12, %222, %cst_95 {dimension_numbers = #tpu.dot_dimension_numbers<[1], [0], [0], [1], [0, 0, 1, 1], [], []>} : vector<40x16xbf16>, vector<16x128xbf16>, vector<40x128xf32> -> vector<40x128xf32>
    %c32_i32_96 = arith.constant 32 : i32
    %225 = tpu.dynamic_rotate %224 by %c32_i32_96 dim 1 : vector<40x128xf32>, i32 -> vector<40x128xf32>
    %226 = arith.addf %223, %225 : vector<40x128xf32>
    %227 = arith.addf %226, %35 : vector<40x128xf32>
    %228 = arith.truncf %227 : vector<40x128xf32> to vector<40x128xbf16>
    %229 = arith.index_cast %c1_i32 : i32 to index
    %c0_97 = arith.constant 0 : index
    %c0_98 = arith.constant 0 : index
    %230 = vector.load %arg8[%229, %c0_97, %c0_98] : memref<2x128x128xbf16, #tpu.memory_space<vmem>>, vector<1x128x128xbf16>
    %231 = vector.shape_cast %230 : vector<1x128x128xbf16> to vector<128x128xbf16>
    %cst_99 = arith.constant dense<0.000000e+00> : vector<40x128xf32>
    %232 = tpu.matmul %228, %231, %cst_99 {dimension_numbers = #tpu.dot_dimension_numbers<[1], [0], [0], [1], [0, 0, 1, 1], [], []>} : vector<40x128xbf16>, vector<128x128xbf16>, vector<40x128xf32> -> vector<40x128xf32>
    %233 = arith.index_cast %c1_i32 : i32 to index
    %c0_100 = arith.constant 0 : index
    %c0_101 = arith.constant 0 : index
    %234 = vector.load %arg9[%233, %c0_100, %c0_101] : memref<2x1x128xf32, #tpu.memory_space<vmem>>, vector<1x1x128xf32>
    %235 = vector.shape_cast %234 : vector<1x1x128xf32> to vector<1x128xf32>
    %236 = vector.broadcast %235 : vector<1x128xf32> to vector<40x128xf32>
    %237 = arith.addf %232, %236 : vector<40x128xf32>
    %238 = arith.index_cast %c1_i32 : i32 to index
    %c0_102 = arith.constant 0 : index
    %c0_103 = arith.constant 0 : index
    %239 = vector.load %arg10[%238, %c0_102, %c0_103] : memref<2x1x128xf32, #tpu.memory_space<vmem>>, vector<1x1x128xf32>
    %240 = vector.shape_cast %239 : vector<1x1x128xf32> to vector<1x128xf32>
    %241 = arith.index_cast %c1_i32 : i32 to index
    %c0_104 = arith.constant 0 : index
    %c0_105 = arith.constant 0 : index
    %242 = vector.load %arg11[%241, %c0_104, %c0_105] : memref<2x1x128xf32, #tpu.memory_space<vmem>>, vector<1x1x128xf32>
    %243 = vector.shape_cast %242 : vector<1x1x128xf32> to vector<1x128xf32>
    %cst_106 = arith.constant dense<0.000000e+00> : vector<128xf32>
    %244 = vector.multi_reduction <add>, %237, %cst_106 [0] : vector<40x128xf32> to vector<128xf32>
    %245 = vector.shape_cast %244 : vector<128xf32> to vector<1x128xf32>
    %cst_107 = arith.constant 2.500000e-02 : f32
    %246 = vector.broadcast %cst_107 : f32 to vector<1x128xf32>
    %247 = arith.mulf %245, %246 : vector<1x128xf32>
    %248 = arith.mulf %237, %237 : vector<40x128xf32>
    %cst_108 = arith.constant dense<0.000000e+00> : vector<128xf32>
    %249 = vector.multi_reduction <add>, %248, %cst_108 [0] : vector<40x128xf32> to vector<128xf32>
    %250 = vector.shape_cast %249 : vector<128xf32> to vector<1x128xf32>
    %cst_109 = arith.constant 2.500000e-02 : f32
    %251 = vector.broadcast %cst_109 : f32 to vector<1x128xf32>
    %252 = arith.mulf %250, %251 : vector<1x128xf32>
    %253 = arith.mulf %247, %247 : vector<1x128xf32>
    %254 = arith.subf %252, %253 : vector<1x128xf32>
    %cst_110 = arith.constant 0.000000e+00 : f32
    %255 = vector.broadcast %cst_110 : f32 to vector<1x128xf32>
    %256 = arith.maximumf %254, %255 : vector<1x128xf32>
    %cst_111 = arith.constant 9.99999974E-6 : f32
    %257 = vector.broadcast %cst_111 : f32 to vector<1x128xf32>
    %258 = arith.addf %256, %257 : vector<1x128xf32>
    %259 = math.rsqrt %258 : vector<1x128xf32>
    %260 = arith.mulf %240, %259 : vector<1x128xf32>
    %261 = arith.mulf %247, %260 : vector<1x128xf32>
    %262 = arith.subf %243, %261 : vector<1x128xf32>
    %263 = vector.broadcast %260 : vector<1x128xf32> to vector<40x128xf32>
    %264 = arith.mulf %237, %263 : vector<40x128xf32>
    %265 = vector.broadcast %262 : vector<1x128xf32> to vector<40x128xf32>
    %266 = arith.addf %264, %265 : vector<40x128xf32>
    %cst_112 = arith.constant 0.000000e+00 : f32
    %267 = vector.broadcast %cst_112 : f32 to vector<40x128xf32>
    %268 = arith.maximumf %266, %267 : vector<40x128xf32>
    %269 = arith.truncf %268 : vector<40x128xf32> to vector<40x128xbf16>
    %270 = arith.index_cast %c1_i32 : i32 to index
    %c0_113 = arith.constant 0 : index
    %c0_114 = arith.constant 0 : index
    %271 = vector.load %arg12[%270, %c0_113, %c0_114] : memref<2x128x128xbf16, #tpu.memory_space<vmem>>, vector<1x128x128xbf16>
    %272 = vector.shape_cast %271 : vector<1x128x128xbf16> to vector<128x128xbf16>
    %cst_115 = arith.constant dense<0.000000e+00> : vector<40x128xf32>
    %273 = tpu.matmul %269, %272, %cst_115 {dimension_numbers = #tpu.dot_dimension_numbers<[1], [0], [0], [1], [0, 0, 1, 1], [], []>} : vector<40x128xbf16>, vector<128x128xbf16>, vector<40x128xf32> -> vector<40x128xf32>
    %274 = arith.index_cast %c1_i32 : i32 to index
    %c0_116 = arith.constant 0 : index
    %c0_117 = arith.constant 0 : index
    %275 = vector.load %arg13[%274, %c0_116, %c0_117] : memref<2x1x128xf32, #tpu.memory_space<vmem>>, vector<1x1x128xf32>
    %276 = vector.shape_cast %275 : vector<1x1x128xf32> to vector<1x128xf32>
    %277 = vector.broadcast %276 : vector<1x128xf32> to vector<40x128xf32>
    %278 = arith.addf %273, %277 : vector<40x128xf32>
    %279 = arith.index_cast %c1_i32 : i32 to index
    %c0_118 = arith.constant 0 : index
    %c0_119 = arith.constant 0 : index
    %280 = vector.load %arg14[%279, %c0_118, %c0_119] : memref<2x1x128xf32, #tpu.memory_space<vmem>>, vector<1x1x128xf32>
    %281 = vector.shape_cast %280 : vector<1x1x128xf32> to vector<1x128xf32>
    %282 = arith.index_cast %c1_i32 : i32 to index
    %c0_120 = arith.constant 0 : index
    %c0_121 = arith.constant 0 : index
    %283 = vector.load %arg15[%282, %c0_120, %c0_121] : memref<2x1x128xf32, #tpu.memory_space<vmem>>, vector<1x1x128xf32>
    %284 = vector.shape_cast %283 : vector<1x1x128xf32> to vector<1x128xf32>
    %cst_122 = arith.constant dense<0.000000e+00> : vector<128xf32>
    %285 = vector.multi_reduction <add>, %278, %cst_122 [0] : vector<40x128xf32> to vector<128xf32>
    %286 = vector.shape_cast %285 : vector<128xf32> to vector<1x128xf32>
    %cst_123 = arith.constant 2.500000e-02 : f32
    %287 = vector.broadcast %cst_123 : f32 to vector<1x128xf32>
    %288 = arith.mulf %286, %287 : vector<1x128xf32>
    %289 = arith.mulf %278, %278 : vector<40x128xf32>
    %cst_124 = arith.constant dense<0.000000e+00> : vector<128xf32>
    %290 = vector.multi_reduction <add>, %289, %cst_124 [0] : vector<40x128xf32> to vector<128xf32>
    %291 = vector.shape_cast %290 : vector<128xf32> to vector<1x128xf32>
    %cst_125 = arith.constant 2.500000e-02 : f32
    %292 = vector.broadcast %cst_125 : f32 to vector<1x128xf32>
    %293 = arith.mulf %291, %292 : vector<1x128xf32>
    %294 = arith.mulf %288, %288 : vector<1x128xf32>
    %295 = arith.subf %293, %294 : vector<1x128xf32>
    %cst_126 = arith.constant 0.000000e+00 : f32
    %296 = vector.broadcast %cst_126 : f32 to vector<1x128xf32>
    %297 = arith.maximumf %295, %296 : vector<1x128xf32>
    %cst_127 = arith.constant 9.99999974E-6 : f32
    %298 = vector.broadcast %cst_127 : f32 to vector<1x128xf32>
    %299 = arith.addf %297, %298 : vector<1x128xf32>
    %300 = math.rsqrt %299 : vector<1x128xf32>
    %301 = arith.mulf %281, %300 : vector<1x128xf32>
    %302 = arith.mulf %288, %301 : vector<1x128xf32>
    %303 = arith.subf %284, %302 : vector<1x128xf32>
    %304 = vector.broadcast %301 : vector<1x128xf32> to vector<40x128xf32>
    %305 = arith.mulf %278, %304 : vector<40x128xf32>
    %306 = vector.broadcast %303 : vector<1x128xf32> to vector<40x128xf32>
    %307 = arith.addf %305, %306 : vector<40x128xf32>
    %cst_128 = arith.constant 0.000000e+00 : f32
    %308 = vector.broadcast %cst_128 : f32 to vector<40x128xf32>
    %309 = arith.maximumf %307, %308 : vector<40x128xf32>
    %310 = arith.truncf %309 : vector<40x128xf32> to vector<40x128xbf16>
    %cst_129 = arith.constant dense<0.000000e+00> : vector<16x128xf32>
    %311 = tpu.matmul %19, %310, %cst_129 {dimension_numbers = #tpu.dot_dimension_numbers<[1], [0], [0], [1], [0, 0, 1, 1], [], []>} : vector<16x40xbf16>, vector<40x128xbf16>, vector<16x128xf32> -> vector<16x128xf32>
    %c32_i32_130 = arith.constant 32 : i32
    %312 = tpu.dynamic_rotate %311 by %c32_i32_130 dim 1 : vector<16x128xf32>, i32 -> vector<16x128xf32>
    %313 = arith.addf %221, %312 : vector<16x128xf32>
    %314 = arith.truncf %313 : vector<16x128xf32> to vector<16x128xbf16>
    %315 = arith.index_cast %c1_i32 : i32 to index
    %c0_131 = arith.constant 0 : index
    %c0_132 = arith.constant 0 : index
    %316 = vector.load %arg16[%315, %c0_131, %c0_132] : memref<2x128x128xbf16, #tpu.memory_space<vmem>>, vector<1x128x128xbf16>
    %317 = vector.shape_cast %316 : vector<1x128x128xbf16> to vector<128x128xbf16>
    %cst_133 = arith.constant dense<0.000000e+00> : vector<16x128xf32>
    %318 = tpu.matmul %314, %317, %cst_133 {dimension_numbers = #tpu.dot_dimension_numbers<[1], [0], [0], [1], [0, 0, 1, 1], [], []>} : vector<16x128xbf16>, vector<128x128xbf16>, vector<16x128xf32> -> vector<16x128xf32>
    %319 = arith.index_cast %c1_i32 : i32 to index
    %c0_134 = arith.constant 0 : index
    %c0_135 = arith.constant 0 : index
    %320 = vector.load %arg17[%319, %c0_134, %c0_135] : memref<2x1x128xf32, #tpu.memory_space<vmem>>, vector<1x1x128xf32>
    %321 = vector.shape_cast %320 : vector<1x1x128xf32> to vector<1x128xf32>
    %322 = vector.broadcast %321 : vector<1x128xf32> to vector<16x128xf32>
    %323 = arith.addf %318, %322 : vector<16x128xf32>
    %324 = arith.index_cast %c1_i32 : i32 to index
    %c0_136 = arith.constant 0 : index
    %c0_137 = arith.constant 0 : index
    %325 = vector.load %arg18[%324, %c0_136, %c0_137] : memref<2x1x128xf32, #tpu.memory_space<vmem>>, vector<1x1x128xf32>
    %326 = vector.shape_cast %325 : vector<1x1x128xf32> to vector<1x128xf32>
    %327 = arith.index_cast %c1_i32 : i32 to index
    %c0_138 = arith.constant 0 : index
    %c0_139 = arith.constant 0 : index
    %328 = vector.load %arg19[%327, %c0_138, %c0_139] : memref<2x1x128xf32, #tpu.memory_space<vmem>>, vector<1x1x128xf32>
    %329 = vector.shape_cast %328 : vector<1x1x128xf32> to vector<1x128xf32>
    %cst_140 = arith.constant dense<0.000000e+00> : vector<128xf32>
    %330 = vector.multi_reduction <add>, %323, %cst_140 [0] : vector<16x128xf32> to vector<128xf32>
    %331 = vector.shape_cast %330 : vector<128xf32> to vector<1x128xf32>
    %cst_141 = arith.constant 6.250000e-02 : f32
    %332 = vector.broadcast %cst_141 : f32 to vector<1x128xf32>
    %333 = arith.mulf %331, %332 : vector<1x128xf32>
    %334 = arith.mulf %323, %323 : vector<16x128xf32>
    %cst_142 = arith.constant dense<0.000000e+00> : vector<128xf32>
    %335 = vector.multi_reduction <add>, %334, %cst_142 [0] : vector<16x128xf32> to vector<128xf32>
    %336 = vector.shape_cast %335 : vector<128xf32> to vector<1x128xf32>
    %cst_143 = arith.constant 6.250000e-02 : f32
    %337 = vector.broadcast %cst_143 : f32 to vector<1x128xf32>
    %338 = arith.mulf %336, %337 : vector<1x128xf32>
    %339 = arith.mulf %333, %333 : vector<1x128xf32>
    %340 = arith.subf %338, %339 : vector<1x128xf32>
    %cst_144 = arith.constant 0.000000e+00 : f32
    %341 = vector.broadcast %cst_144 : f32 to vector<1x128xf32>
    %342 = arith.maximumf %340, %341 : vector<1x128xf32>
    %cst_145 = arith.constant 9.99999974E-6 : f32
    %343 = vector.broadcast %cst_145 : f32 to vector<1x128xf32>
    %344 = arith.addf %342, %343 : vector<1x128xf32>
    %345 = math.rsqrt %344 : vector<1x128xf32>
    %346 = arith.mulf %326, %345 : vector<1x128xf32>
    %347 = arith.mulf %333, %346 : vector<1x128xf32>
    %348 = arith.subf %329, %347 : vector<1x128xf32>
    %349 = vector.broadcast %346 : vector<1x128xf32> to vector<16x128xf32>
    %350 = arith.mulf %323, %349 : vector<16x128xf32>
    %351 = vector.broadcast %348 : vector<1x128xf32> to vector<16x128xf32>
    %352 = arith.addf %350, %351 : vector<16x128xf32>
    %cst_146 = arith.constant 0.000000e+00 : f32
    %353 = vector.broadcast %cst_146 : f32 to vector<16x128xf32>
    %354 = arith.maximumf %352, %353 : vector<16x128xf32>
    %355 = arith.truncf %354 : vector<16x128xf32> to vector<16x128xbf16>
    %356 = arith.index_cast %c1_i32 : i32 to index
    %c0_147 = arith.constant 0 : index
    %c0_148 = arith.constant 0 : index
    %357 = vector.load %arg20[%356, %c0_147, %c0_148] : memref<2x128x128xbf16, #tpu.memory_space<vmem>>, vector<1x128x128xbf16>
    %358 = vector.shape_cast %357 : vector<1x128x128xbf16> to vector<128x128xbf16>
    %cst_149 = arith.constant dense<0.000000e+00> : vector<16x128xf32>
    %359 = tpu.matmul %355, %358, %cst_149 {dimension_numbers = #tpu.dot_dimension_numbers<[1], [0], [0], [1], [0, 0, 1, 1], [], []>} : vector<16x128xbf16>, vector<128x128xbf16>, vector<16x128xf32> -> vector<16x128xf32>
    %360 = arith.index_cast %c1_i32 : i32 to index
    %c0_150 = arith.constant 0 : index
    %c0_151 = arith.constant 0 : index
    %361 = vector.load %arg21[%360, %c0_150, %c0_151] : memref<2x1x128xf32, #tpu.memory_space<vmem>>, vector<1x1x128xf32>
    %362 = vector.shape_cast %361 : vector<1x1x128xf32> to vector<1x128xf32>
    %363 = vector.broadcast %362 : vector<1x128xf32> to vector<16x128xf32>
    %364 = arith.addf %359, %363 : vector<16x128xf32>
    %365 = arith.index_cast %c1_i32 : i32 to index
    %c0_152 = arith.constant 0 : index
    %c0_153 = arith.constant 0 : index
    %366 = vector.load %arg22[%365, %c0_152, %c0_153] : memref<2x1x128xf32, #tpu.memory_space<vmem>>, vector<1x1x128xf32>
    %367 = vector.shape_cast %366 : vector<1x1x128xf32> to vector<1x128xf32>
    %368 = arith.index_cast %c1_i32 : i32 to index
    %c0_154 = arith.constant 0 : index
    %c0_155 = arith.constant 0 : index
    %369 = vector.load %arg23[%368, %c0_154, %c0_155] : memref<2x1x128xf32, #tpu.memory_space<vmem>>, vector<1x1x128xf32>
    %370 = vector.shape_cast %369 : vector<1x1x128xf32> to vector<1x128xf32>
    %cst_156 = arith.constant dense<0.000000e+00> : vector<128xf32>
    %371 = vector.multi_reduction <add>, %364, %cst_156 [0] : vector<16x128xf32> to vector<128xf32>
    %372 = vector.shape_cast %371 : vector<128xf32> to vector<1x128xf32>
    %cst_157 = arith.constant 6.250000e-02 : f32
    %373 = vector.broadcast %cst_157 : f32 to vector<1x128xf32>
    %374 = arith.mulf %372, %373 : vector<1x128xf32>
    %375 = arith.mulf %364, %364 : vector<16x128xf32>
    %cst_158 = arith.constant dense<0.000000e+00> : vector<128xf32>
    %376 = vector.multi_reduction <add>, %375, %cst_158 [0] : vector<16x128xf32> to vector<128xf32>
    %377 = vector.shape_cast %376 : vector<128xf32> to vector<1x128xf32>
    %cst_159 = arith.constant 6.250000e-02 : f32
    %378 = vector.broadcast %cst_159 : f32 to vector<1x128xf32>
    %379 = arith.mulf %377, %378 : vector<1x128xf32>
    %380 = arith.mulf %374, %374 : vector<1x128xf32>
    %381 = arith.subf %379, %380 : vector<1x128xf32>
    %cst_160 = arith.constant 0.000000e+00 : f32
    %382 = vector.broadcast %cst_160 : f32 to vector<1x128xf32>
    %383 = arith.maximumf %381, %382 : vector<1x128xf32>
    %cst_161 = arith.constant 9.99999974E-6 : f32
    %384 = vector.broadcast %cst_161 : f32 to vector<1x128xf32>
    %385 = arith.addf %383, %384 : vector<1x128xf32>
    %386 = math.rsqrt %385 : vector<1x128xf32>
    %387 = arith.mulf %367, %386 : vector<1x128xf32>
    %388 = arith.mulf %374, %387 : vector<1x128xf32>
    %389 = arith.subf %370, %388 : vector<1x128xf32>
    %390 = vector.broadcast %387 : vector<1x128xf32> to vector<16x128xf32>
    %391 = arith.mulf %364, %390 : vector<16x128xf32>
    %392 = vector.broadcast %389 : vector<1x128xf32> to vector<16x128xf32>
    %393 = arith.addf %391, %392 : vector<16x128xf32>
    %cst_162 = arith.constant 0.000000e+00 : f32
    %394 = vector.broadcast %cst_162 : f32 to vector<16x128xf32>
    %395 = arith.maximumf %393, %394 : vector<16x128xf32>
    %396 = arith.addf %221, %395 : vector<16x128xf32>
    %c0_163 = arith.constant 0 : index
    %c0_164 = arith.constant 0 : index
    %397 = vector.load %arg27[%c0_163, %c0_164] : memref<16x128xf32, #tpu.memory_space<vmem>>, vector<16x128xf32>
    tpu.vector_store %arg27[%c0_163, %c0_164], %396 {strides = array<i32>} : memref<16x128xf32, #tpu.memory_space<vmem>>, vector<16x128xf32>,
    %c2_i32 = arith.constant 2 : i32
    %c0_165 = arith.constant 0 : index
    %c0_166 = arith.constant 0 : index
    %398 = vector.load %arg27[%c0_165, %c0_166] : memref<16x128xf32, #tpu.memory_space<vmem>>, vector<16x128xf32>
    %399 = arith.truncf %398 : vector<16x128xf32> to vector<16x128xbf16>
    %cst_167 = arith.constant dense<0.000000e+00> : vector<2x128xf32>
    %400 = tpu.matmul %26, %399, %cst_167 {dimension_numbers = #tpu.dot_dimension_numbers<[1], [0], [0], [1], [0, 0, 1, 1], [], []>} : vector<2x16xbf16>, vector<16x128xbf16>, vector<2x128xf32> -> vector<2x128xf32>
    %401 = vector.broadcast %34 : vector<2x1xf32> to vector<2x128xf32>
    %402 = arith.mulf %400, %401 : vector<2x128xf32>
    %403 = arith.truncf %402 : vector<2x128xf32> to vector<2x128xbf16>
    %c0_168 = arith.constant 0 : index
    %c0_169 = arith.constant 0 : index
    %404 = vector.load %arg24[%c0_168, %c0_169] : memref<128x128xbf16, #tpu.memory_space<vmem>>, vector<128x128xbf16>
    %cst_170 = arith.constant dense<0.000000e+00> : vector<2x128xf32>
    %405 = tpu.matmul %403, %404, %cst_170 {dimension_numbers = #tpu.dot_dimension_numbers<[1], [0], [0], [1], [0, 0, 1, 1], [], []>} : vector<2x128xbf16>, vector<128x128xbf16>, vector<2x128xf32> -> vector<2x128xf32>
    %c0_171 = arith.constant 0 : index
    %c0_172 = arith.constant 0 : index
    %406 = vector.load %arg25[%c0_171, %c0_172] : memref<1x128xf32, #tpu.memory_space<vmem>>, vector<1x128xf32>
    %407 = vector.broadcast %406 : vector<1x128xf32> to vector<2x128xf32>
    %408 = arith.addf %405, %407 : vector<2x128xf32>
    %c0_173 = arith.constant 0 : index
    %c0_174 = arith.constant 0 : index
    %409 = vector.load %arg26[%c0_173, %c0_174] : memref<2x128xf32, #tpu.memory_space<vmem>>, vector<2x128xf32>
    tpu.vector_store %arg26[%c0_173, %c0_174], %408 {strides = array<i32>} : memref<2x128xf32, #tpu.memory_space<vmem>>, vector<2x128xf32>,
    return
  }
}

</mosaic_0001>

<llo_original>
// kernel: tpu_custom_call.1
$region0: #{tpu_custom_call.1}
  #allocation0 [shape = 'u32[]', space=smem, size = 0x4, offset = 0x4, fixed_abs, tag = 'smem constant byte address 0x4 - core index']
  #allocation1 [shape = 'u32[144,128]{1,0:T(1,128)}', space=vmem, size = 0x12000, scoped, tag = 'internal scratch']
  #allocation2 [shape = 'f32[16,128]{1,0:T(8,128)}', space=vmem, size = 0x2000, scoped, tag = 'scratch operand']
  %s0 = inlined_call_operand.hbm [shape: f32[16,128], index: 0, kind: input, shape index: {}]
  %s1 = inlined_call_operand.vmem [shape: s32[40,1], index: 1, kind: input, shape index: {}]
  %s2 = inlined_call_operand.vmem [shape: s32[40,1], index: 2, kind: input, shape index: {}]
  %s3 = inlined_call_operand.hbm [shape: s32[1,40], index: 3, kind: input, shape index: {}]
  %s4 = inlined_call_operand.hbm [shape: s32[1,16], index: 4, kind: input, shape index: {}]
  %s5 = inlined_call_operand.hbm [shape: f32[40,128], index: 5, kind: input, shape index: {}]
  %s6 = inlined_call_operand.hbm [shape: bf16[128,128], index: 6, kind: input, shape index: {}]
  %s7 = inlined_call_operand.hbm [shape: f32[1,128], index: 7, kind: input, shape index: {}]
  %s8 = inlined_call_operand.hbm [shape: bf16[2,128,128], index: 8, kind: input, shape index: {}]
  %s9 = inlined_call_operand.vmem [shape: f32[2,1,128], index: 9, kind: input, shape index: {}]
  %s10 = inlined_call_operand.vmem [shape: f32[2,1,128], index: 10, kind: input, shape index: {}]
  %s11 = inlined_call_operand.vmem [shape: f32[2,1,128], index: 11, kind: input, shape index: {}]
  %s12 = inlined_call_operand.hbm [shape: bf16[2,128,128], index: 12, kind: input, shape index: {}]
  %s13 = inlined_call_operand.vmem [shape: f32[2,1,128], index: 13, kind: input, shape index: {}]
  %s14 = inlined_call_operand.vmem [shape: f32[2,1,128], index: 14, kind: input, shape index: {}]
  %s15 = inlined_call_operand.vmem [shape: f32[2,1,128], index: 15, kind: input, shape index: {}]
  %s16 = inlined_call_operand.vmem [shape: bf16[2,128,128], index: 16, kind: input, shape index: {}]
  %s17 = inlined_call_operand.vmem [shape: f32[2,1,128], index: 17, kind: input, shape index: {}]
  %s18 = inlined_call_operand.vmem [shape: f32[2,1,128], index: 18, kind: input, shape index: {}]
  %s19 = inlined_call_operand.vmem [shape: f32[2,1,128], index: 19, kind: input, shape index: {}]
  %s20 = inlined_call_operand.hbm [shape: bf16[2,128,128], index: 20, kind: input, shape index: {}]
  %s21 = inlined_call_operand.vmem [shape: f32[2,1,128], index: 21, kind: input, shape index: {}]
  %s22 = inlined_call_operand.vmem [shape: f32[2,1,128], index: 22, kind: input, shape index: {}]
  %s23 = inlined_call_operand.vmem [shape: f32[2,1,128], index: 23, kind: input, shape index: {}]
  %s24 = inlined_call_operand.hbm [shape: bf16[128,128], index: 24, kind: input, shape index: {}]
  %s25 = inlined_call_operand.vmem [shape: f32[1,128], index: 25, kind: input, shape index: {}]
  %s26 = inlined_call_operand.hbm [shape: f32[2,128], index: 26, kind: output, shape index: {}]
  %s27 = sld [smem:[#allocation0]]
  $region154: #{tpu_custom_call.1} parent=0
    _
  %s29 = ssub.s32 1, %s27
  %s30 = scalar_select 0, %s29, %s27
  $region1: #{tpu_custom_call.1} parent=0
    #allocation3 [shape = 'u8[8192]{0}', space=vmem, size = 0x2000, scoped, tag = 'input window, operand 0, single buffered']
    #allocation4 [shape = 's32[1]{0}', space=sflag, size = 0x4, scoped, tag = 'scoped memory for tpu_custom_call.1']
    #allocation5 [shape = 's32[1]{0}', space=sflag, size = 0x4, scoped, tag = 'scoped memory for tpu_custom_call.1']
    #allocation6 [shape = 'u8[512]{0}', space=vmem, size = 0x400, scoped, tag = 'input window, operand 3, single buffered']
    #allocation7 [shape = 's32[1]{0}', space=sflag, size = 0x4, scoped, tag = 'scoped memory for tpu_custom_call.1']
    #allocation8 [shape = 'u8[512]{0}', space=vmem, size = 0x400, scoped, tag = 'input window, operand 4, single buffered']
    #allocation9 [shape = 'u8[20480]{0}', space=vmem, size = 0x5000, scoped, tag = 'input window, operand 5, single buffered']
    #allocation10 [shape = 's32[1]{0}', space=sflag, size = 0x4, scoped, tag = 'scoped memory for tpu_custom_call.1']
    #allocation11 [shape = 'u8[32768]{0}', space=vmem, size = 0x8000, scoped, tag = 'input window, operand 6, single buffered']
    #allocation12 [shape = 'u8[512]{0}', space=vmem, size = 0x400, scoped, tag = 'input window, operand 7, single buffered']
    #allocation13 [shape = 's32[1]{0}', space=sflag, size = 0x4, scoped, tag = 'scoped memory for tpu_custom_call.1']
    #allocation14 [shape = 'u8[65536]{0}', space=vmem, size = 0x10000, scoped, tag = 'input window, operand 8, single buffered']
    #allocation15 [shape = 'u8[65536]{0}', space=vmem, size = 0x10000, scoped, tag = 'input window, operand 12, single buffered']
    #allocation16 [shape = 's32[1]{0}', space=sflag, size = 0x4, scoped, tag = 'scoped memory for tpu_custom_call.1']
    #allocation17 [shape = 'u8[65536]{0}', space=vmem, size = 0x10000, scoped, tag = 'input window, operand 20, single buffered']
    #allocation18 [shape = 'u8[32768]{0}', space=vmem, size = 0x8000, scoped, tag = 'input window, operand 24, single buffered']
    #allocation19 [shape = 's32[1]{0}', space=sflag, size = 0x4, scoped, tag = 'scoped memory for tpu_custom_call.1']
    #allocation20 [shape = 'u8[1024]{0}', space=vmem, size = 0x400, scoped, tag = 'output window, operand 0, single buffered']
    %31 = vsyncpa [#allocation4], 0
    %32 = vsyncpa [#allocation7], 0
    %33 = vsyncpa [#allocation10], 0
    %34 = vsyncpa [#allocation13], 0
    %35 = vsyncpa [#allocation16], 0
    %36 = vsyncpa [#allocation19], 0
    %37 = vsyncpa [#allocation5], 0
    // Predicated region
    $region2: #{tpu_custom_call.1} parent=1 // pred_check
      _
    $region3: #{tpu_custom_call.1} parent=1 // pred_check_branch
      %39 = sbr.rel (0) target = $region5
    $region4: #{tpu_custom_call.1} parent=1 // pred_region
      %s41 = ssub.s32 256, 256
      %42 = vsyncadd [#allocation4], %s41
      %s43 = sshll.u32 [#allocation3], 4
      %s44 = int_to_ptr.vmem [resolvable:$true] %s43
      %49 = dma.hbm_to_vmem [thread:$0]  %s0, 256, %s44, [#allocation4], 128, 128, 8
    $region5: #{tpu_custom_call.1} parent=1 // pred_fallthru
      _
    // Predicated region
    $region6: #{tpu_custom_call.1} parent=1 // pred_check
      _
    $region7: #{tpu_custom_call.1} parent=1 // pred_check_branch
      %51 = sbr.rel (0) target = $region9
    $region8: #{tpu_custom_call.1} parent=1 // pred_region
      _
    $region9: #{tpu_custom_call.1} parent=1 // pred_fallthru
      _
    // Predicated region
    $region10: #{tpu_custom_call.1} parent=1 // pred_check
      _
    $region11: #{tpu_custom_call.1} parent=1 // pred_check_branch
      %53 = sbr.rel (0) target = $region13
    $region12: #{tpu_custom_call.1} parent=1 // pred_region
      _
    $region13: #{tpu_custom_call.1} parent=1 // pred_fallthru
      _
    // Predicated region
    $region14: #{tpu_custom_call.1} parent=1 // pred_check
      _
    $region15: #{tpu_custom_call.1} parent=1 // pred_check_branch
      %55 = sbr.rel (0) target = $region17
    $region16: #{tpu_custom_call.1} parent=1 // pred_region
      %s57 = ssub.s32 16, 16
      %58 = vsyncadd [#allocation7], %s57
      %s60 = sshll.u32 [#allocation6], 4
      %s61 = int_to_ptr.vmem [resolvable:$true] %s60
      %63 = dma.hbm_to_vmem [thread:$0]  %s3, 16, %s61, [#allocation7]
    $region17: #{tpu_custom_call.1} parent=1 // pred_fallthru
      _
    // Predicated region
    $region18: #{tpu_custom_call.1} parent=1 // pred_check
      _
    $region19: #{tpu_custom_call.1} parent=1 // pred_check_branch
      %65 = sbr.rel (0) target = $region21
    $region20: #{tpu_custom_call.1} parent=1 // pred_region
      %s67 = ssub.s32 16, 16
      %68 = vsyncadd [#allocation7], %s67
      %s70 = sshll.u32 [#allocation8], 4
      %s71 = int_to_ptr.vmem [resolvable:$true] %s70
      %73 = dma.hbm_to_vmem [thread:$0]  %s4, 16, %s71, [#allocation7]
    $region21: #{tpu_custom_call.1} parent=1 // pred_fallthru
      _
    // Predicated region
    $region22: #{tpu_custom_call.1} parent=1 // pred_check
      _
    $region23: #{tpu_custom_call.1} parent=1 // pred_check_branch
      %75 = sbr.rel (0) target = $region25
    $region24: #{tpu_custom_call.1} parent=1 // pred_region
      %s77 = ssub.s32 640, 640
      %78 = vsyncadd [#allocation10], %s77
      %s79 = sshll.u32 [#allocation9], 4
      %s80 = int_to_ptr.vmem [resolvable:$true] %s79
      %85 = dma.hbm_to_vmem [thread:$0]  %s5, 640, %s80, [#allocation10], 128, 128, 8
    $region25: #{tpu_custom_call.1} parent=1 // pred_fallthru
      _
    // Predicated region
    $region26: #{tpu_custom_call.1} parent=1 // pred_check
      _
    $region27: #{tpu_custom_call.1} parent=1 // pred_check_branch
      %87 = sbr.rel (0) target = $region29
    $region28: #{tpu_custom_call.1} parent=1 // pred_region
      %s89 = ssub.s32 1024, 1024
      %90 = vsyncadd [#allocation10], %s89
      %s91 = sshll.u32 [#allocation11], 4
      %s92 = int_to_ptr.vmem [resolvable:$true] %s91
      %97 = dma.hbm_to_vmem [thread:$0]  %s6, 1024, %s92, [#allocation10], 64, 64, 4
    $region29: #{tpu_custom_call.1} parent=1 // pred_fallthru
      _
    // Predicated region
    $region30: #{tpu_custom_call.1} parent=1 // pred_check
      _
    $region31: #{tpu_custom_call.1} parent=1 // pred_check_branch
      %99 = sbr.rel (0) target = $region33
    $region32: #{tpu_custom_call.1} parent=1 // pred_region
      %s101 = ssub.s32 16, 16
      %102 = vsyncadd [#allocation13], %s101
      %s104 = sshll.u32 [#allocation12], 4
      %s105 = int_to_ptr.vmem [resolvable:$true] %s104
      %107 = dma.hbm_to_vmem [thread:$0]  %s7, 16, %s105, [#allocation13]
    $region33: #{tpu_custom_call.1} parent=1 // pred_fallthru
      _
    // Predicated region
    $region34: #{tpu_custom_call.1} parent=1 // pred_check
      _
    $region35: #{tpu_custom_call.1} parent=1 // pred_check_branch
      %109 = sbr.rel (0) target = $region37
    $region36: #{tpu_custom_call.1} parent=1 // pred_region
      %s111 = ssub.s32 2048, 2048
      %112 = vsyncadd [#allocation13], %s111
      %s113 = sshll.u32 [#allocation14], 4
      %s114 = int_to_ptr.vmem [resolvable:$true] %s113
      %119 = dma.hbm_to_vmem [thread:$0]  %s8, 2048, %s114, [#allocation13], 64, 64, 4
    $region37: #{tpu_custom_call.1} parent=1 // pred_fallthru
      _
    // Predicated region
    $region38: #{tpu_custom_call.1} parent=1 // pred_check
      _
    $region39: #{tpu_custom_call.1} parent=1 // pred_check_branch
      %121 = sbr.rel (0) target = $region41
    $region40: #{tpu_custom_call.1} parent=1 // pred_region
      _
    $region41: #{tpu_custom_call.1} parent=1 // pred_fallthru
      _
    // Predicated region
    $region42: #{tpu_custom_call.1} parent=1 // pred_check
      _
    $region43: #{tpu_custom_call.1} parent=1 // pred_check_branch
      %123 = sbr.rel (0) target = $region45
    $region44: #{tpu_custom_call.1} parent=1 // pred_region
      _
    $region45: #{tpu_custom_call.1} parent=1 // pred_fallthru
      _
    // Predicated region
    $region46: #{tpu_custom_call.1} parent=1 // pred_check
      _
    $region47: #{tpu_custom_call.1} parent=1 // pred_check_branch
      %125 = sbr.rel (0) target = $region49
    $region48: #{tpu_custom_call.1} parent=1 // pred_region
      _
    $region49: #{tpu_custom_call.1} parent=1 // pred_fallthru
      _
    // Predicated region
    $region50: #{tpu_custom_call.1} parent=1 // pred_check
      _
    $region51: #{tpu_custom_call.1} parent=1 // pred_check_branch
      %127 = sbr.rel (0) target = $region53
    $region52: #{tpu_custom_call.1} parent=1 // pred_region
      %s129 = ssub.s32 2048, 2048
      %130 = vsyncadd [#allocation16], %s129
      %s131 = sshll.u32 [#allocation15], 4
      %s132 = int_to_ptr.vmem [resolvable:$true] %s131
      %137 = dma.hbm_to_vmem [thread:$0]  %s12, 2048, %s132, [#allocation16], 64, 64, 4
    $region53: #{tpu_custom_call.1} parent=1 // pred_fallthru
      _
    // Predicated region
    $region54: #{tpu_custom_call.1} parent=1 // pred_check
      _
    $region55: #{tpu_custom_call.1} parent=1 // pred_check_branch
      %139 = sbr.rel (0) target = $region57
    $region56: #{tpu_custom_call.1} parent=1 // pred_region
      _
    $region57: #{tpu_custom_call.1} parent=1 // pred_fallthru
      _
    // Predicated region
    $region58: #{tpu_custom_call.1} parent=1 // pred_check
      _
    $region59: #{tpu_custom_call.1} parent=1 // pred_check_branch
      %141 = sbr.rel (0) target = $region61
    $region60: #{tpu_custom_call.1} parent=1 // pred_region
      _
    $region61: #{tpu_custom_call.1} parent=1 // pred_fallthru
      _
    // Predicated region
    $region62: #{tpu_custom_call.1} parent=1 // pred_check
      _
    $region63: #{tpu_custom_call.1} parent=1 // pred_check_branch
      %143 = sbr.rel (0) target = $region65
    $region64: #{tpu_custom_call.1} parent=1 // pred_region
      _
    $region65: #{tpu_custom_call.1} parent=1 // pred_fallthru
      _
    // Predicated region
    $region66: #{tpu_custom_call.1} parent=1 // pred_check
      _
    $region67: #{tpu_custom_call.1} parent=1 // pred_check_branch
      %145 = sbr.rel (0) target = $region69
    $region68: #{tpu_custom_call.1} parent=1 // pred_region
      _
    $region69: #{tpu_custom_call.1} parent=1 // pred_fallthru
      _
    // Predicated region
    $region70: #{tpu_custom_call.1} parent=1 // pred_check
      _
    $region71: #{tpu_custom_call.1} parent=1 // pred_check_branch
      %147 = sbr.rel (0) target = $region73
    $region72: #{tpu_custom_call.1} parent=1 // pred_region
      _
    $region73: #{tpu_custom_call.1} parent=1 // pred_fallthru
      _
    // Predicated region
    $region74: #{tpu_custom_call.1} parent=1 // pred_check
      _
    $region75: #{tpu_custom_call.1} parent=1 // pred_check_branch
      %149 = sbr.rel (0) target = $region77
    $region76: #{tpu_custom_call.1} parent=1 // pred_region
      _
    $region77: #{tpu_custom_call.1} parent=1 // pred_fallthru
      _
    // Predicated region
    $region78: #{tpu_custom_call.1} parent=1 // pred_check
      _
    $region79: #{tpu_custom_call.1} parent=1 // pred_check_branch
      %151 = sbr.rel (0) target = $region81
    $region80: #{tpu_custom_call.1} parent=1 // pred_region
      _
    $region81: #{tpu_custom_call.1} parent=1 // pred_fallthru
      _
    // Predicated region
    $region82: #{tpu_custom_call.1} parent=1 // pred_check
      _
    $region83: #{tpu_custom_call.1} parent=1 // pred_check_branch
      %153 = sbr.rel (0) target = $region85
    $region84: #{tpu_custom_call.1} parent=1 // pred_region
      %s155 = ssub.s32 2048, 2048
      %156 = vsyncadd [#allocation16], %s155
      %s157 = sshll.u32 [#allocation17], 4
      %s158 = int_to_ptr.vmem [resolvable:$true] %s157
      %163 = dma.hbm_to_vmem [thread:$0]  %s20, 2048, %s158, [#allocation16], 64, 64, 4
    $region85: #{tpu_custom_call.1} parent=1 // pred_fallthru
      _
    // Predicated region
    $region86: #{tpu_custom_call.1} parent=1 // pred_check
      _
    $region87: #{tpu_custom_call.1} parent=1 // pred_check_branch
      %165 = sbr.rel (0) target = $region89
    $region88: #{tpu_custom_call.1} parent=1 // pred_region
      _
    $region89: #{tpu_custom_call.1} parent=1 // pred_fallthru
      _
    // Predicated region
    $region90: #{tpu_custom_call.1} parent=1 // pred_check
      _
    $region91: #{tpu_custom_call.1} parent=1 // pred_check_branch
      %167 = sbr.rel (0) target = $region93
    $region92: #{tpu_custom_call.1} parent=1 // pred_region
      _
    $region93: #{tpu_custom_call.1} parent=1 // pred_fallthru
      _
    // Predicated region
    $region94: #{tpu_custom_call.1} parent=1 // pred_check
      _
    $region95: #{tpu_custom_call.1} parent=1 // pred_check_branch
      %169 = sbr.rel (0) target = $region97
    $region96: #{tpu_custom_call.1} parent=1 // pred_region
      _
    $region97: #{tpu_custom_call.1} parent=1 // pred_fallthru
      _
    // Predicated region
    $region98: #{tpu_custom_call.1} parent=1 // pred_check
      _
    $region99: #{tpu_custom_call.1} parent=1 // pred_check_branch
      %171 = sbr.rel (0) target = $region101
    $region100: #{tpu_custom_call.1} parent=1 // pred_region
      %s173 = ssub.s32 1024, 1024
      %174 = vsyncadd [#allocation19], %s173
      %s175 = sshll.u32 [#allocation18], 4
      %s176 = int_to_ptr.vmem [resolvable:$true] %s175
      %181 = dma.hbm_to_vmem [thread:$0]  %s24, 1024, %s176, [#allocation19], 64, 64, 4
    $region101: #{tpu_custom_call.1} parent=1 // pred_fallthru
      _
    // Predicated region
    $region102: #{tpu_custom_call.1} parent=1 // pred_check
      _
    $region103: #{tpu_custom_call.1} parent=1 // pred_check_branch
      %183 = sbr.rel (0) target = $region105
    $region104: #{tpu_custom_call.1} parent=1 // pred_region
      _
    $region105: #{tpu_custom_call.1} parent=1 // pred_fallthru
      _
    // Predicated region
    $region106: #{tpu_custom_call.1} parent=1 // pred_check
      _
    $region107: #{tpu_custom_call.1} parent=1 // pred_check_branch
      %185 = sbr.rel (0) target = $region109
    $region108: #{tpu_custom_call.1} parent=1 // pred_region
      %186 = dma.done [#allocation4], 256
    $region109: #{tpu_custom_call.1} parent=1 // pred_fallthru
      _
    // Predicated region
    $region110: #{tpu_custom_call.1} parent=1 // pred_check
      _
    $region111: #{tpu_custom_call.1} parent=1 // pred_check_branch
      %188 = sbr.rel (0) target = $region113
    $region112: #{tpu_custom_call.1} parent=1 // pred_region
      %189 = dma.done [#allocation7], 16
    $region113: #{tpu_custom_call.1} parent=1 // pred_fallthru
      _
    // Predicated region
    $region114: #{tpu_custom_call.1} parent=1 // pred_check
      _
    $region115: #{tpu_custom_call.1} parent=1 // pred_check_branch
      %191 = sbr.rel (0) target = $region117
    $region116: #{tpu_custom_call.1} parent=1 // pred_region
      %192 = dma.done [#allocation7], 16
    $region117: #{tpu_custom_call.1} parent=1 // pred_fallthru
      _
    // Predicated region
    $region118: #{tpu_custom_call.1} parent=1 // pred_check
      _
    $region119: #{tpu_custom_call.1} parent=1 // pred_check_branch
      %194 = sbr.rel (0) target = $region121
    $region120: #{tpu_custom_call.1} parent=1 // pred_region
      %195 = dma.done [#allocation10], 640
    $region121: #{tpu_custom_call.1} parent=1 // pred_fallthru
      _
    // Predicated region
    $region122: #{tpu_custom_call.1} parent=1 // pred_check
      _
    $region123: #{tpu_custom_call.1} parent=1 // pred_check_branch
      %197 = sbr.rel (0) target = $region125
    $region124: #{tpu_custom_call.1} parent=1 // pred_region
      %198 = dma.done [#allocation10], 1024
    $region125: #{tpu_custom_call.1} parent=1 // pred_fallthru
      _
    // Predicated region
    $region126: #{tpu_custom_call.1} parent=1 // pred_check
      _
    $region127: #{tpu_custom_call.1} parent=1 // pred_check_branch
      %200 = sbr.rel (0) target = $region129
    $region128: #{tpu_custom_call.1} parent=1 // pred_region
      %201 = dma.done [#allocation13], 16
    $region129: #{tpu_custom_call.1} parent=1 // pred_fallthru
      _
    // Predicated region
    $region130: #{tpu_custom_call.1} parent=1 // pred_check
      _
    $region131: #{tpu_custom_call.1} parent=1 // pred_check_branch
      %203 = sbr.rel (0) target = $region133
    $region132: #{tpu_custom_call.1} parent=1 // pred_region
      %204 = dma.done [#allocation13], 2048
    $region133: #{tpu_custom_call.1} parent=1 // pred_fallthru
      _
    // Predicated region
    $region134: #{tpu_custom_call.1} parent=1 // pred_check
      _
    $region135: #{tpu_custom_call.1} parent=1 // pred_check_branch
      %206 = sbr.rel (0) target = $region137
    $region136: #{tpu_custom_call.1} parent=1 // pred_region
      %207 = dma.done [#allocation16], 2048
    $region137: #{tpu_custom_call.1} parent=1 // pred_fallthru
      _
    // Predicated region
    $region138: #{tpu_custom_call.1} parent=1 // pred_check
      _
    $region139: #{tpu_custom_call.1} parent=1 // pred_check_branch
      %209 = sbr.rel (0) target = $region141
    $region140: #{tpu_custom_call.1} parent=1 // pred_region
      %210 = dma.done [#allocation16], 2048
    $region141: #{tpu_custom_call.1} parent=1 // pred_fallthru
      _
    // Predicated region
    $region142: #{tpu_custom_call.1} parent=1 // pred_check
      _
    $region143: #{tpu_custom_call.1} parent=1 // pred_check_branch
      %212 = sbr.rel (0) target = $region145
    $region144: #{tpu_custom_call.1} parent=1 // pred_region
      %213 = dma.done [#allocation19], 1024
    $region145: #{tpu_custom_call.1} parent=1 // pred_fallthru
      _
    %v215 = vlaneseq
    %v216 = vand.u32 %v215, 127
    %v217 = vld [vmem:[%s2] sm:$0xff]
    %v218 = vld [vmem:[%s2 + $0x8] sm:$0xff]
    %v219 = vld [vmem:[%s2 + $0x10] sm:$0xff]
    %v220 = vld [vmem:[%s2 + $0x18] sm:$0xff]
    %v221 = vld [vmem:[%s2 + $0x20] sm:$0xff]
    %222 = vset.pattern.permute.xlu0 0
    %223 = vperm.xlu0 %222, %v217
    %v224 = vpop.permute.xlu0 %223
    %225 = vset.pattern.permute.xlu0 0
    %226 = vperm.xlu0 %225, %v218
    %v227 = vpop.permute.xlu0 %226
    %228 = vset.pattern.permute.xlu0 0
    %229 = vperm.xlu0 %228, %v219
    %v230 = vpop.permute.xlu0 %229
    %231 = vset.pattern.permute.xlu0 0
    %232 = vperm.xlu0 %231, %v220
    %v233 = vpop.permute.xlu0 %232
    %234 = vset.pattern.permute.xlu0 0
    %235 = vperm.xlu0 %234, %v221
    %v236 = vpop.permute.xlu0 %235
    %vm237 = vcmp.eq.s32.totalorder %v224, %v216
    %vm238 = vcmp.eq.s32.totalorder %v227, %v216
    %vm239 = vcmp.eq.s32.totalorder %v230, %v216
    %vm240 = vcmp.eq.s32.totalorder %v233, %v216
    %vm241 = vcmp.eq.s32.totalorder %v236, %v216
    %v242 = vsel %vm237, 1, 0
    %v243 = vsel %vm238, 1, 0
    %v244 = vsel %vm239, 1, 0
    %v245 = vsel %vm240, 1, 0
    %v246 = vsel %vm241, 1, 0
    %v247 = vcvt.s32.f32 %v242
    %v248 = vcvt.s32.f32 %v243
    %v249 = vcvt.s32.f32 %v244
    %v250 = vcvt.s32.f32 %v245
    %v251 = vcvt.s32.f32 %v246
    %v252 = vpack.c.bf16 %v248, %v247
    %v253 = vpack.c.bf16 %v250, %v249
    %v254 = vpack.c.bf16 %v251, %v251
    %v255 = vld [vmem:[%s1] sm:$0xff]
    %v256 = vld [vmem:[%s1 + $0x8] sm:$0xff]
    %v257 = vld [vmem:[%s1 + $0x10] sm:$0xff]
    %v258 = vld [vmem:[%s1 + $0x18] sm:$0xff]
    %v259 = vld [vmem:[%s1 + $0x20] sm:$0xff]
    %260 = vset.pattern.permute.xlu0 0
    %261 = vperm.xlu0 %260, %v255
    %v262 = vpop.permute.xlu0 %261
    %263 = vset.pattern.permute.xlu0 0
    %264 = vperm.xlu0 %263, %v256
    %v265 = vpop.permute.xlu0 %264
    %266 = vset.pattern.permute.xlu0 0
    %267 = vperm.xlu0 %266, %v257
    %v268 = vpop.permute.xlu0 %267
    %269 = vset.pattern.permute.xlu0 0
    %270 = vperm.xlu0 %269, %v258
    %v271 = vpop.permute.xlu0 %270
    %272 = vset.pattern.permute.xlu0 0
    %273 = vperm.xlu0 %272, %v259
    %v274 = vpop.permute.xlu0 %273
    %vm275 = vcmp.eq.s32.totalorder %v262, %v216
    %vm276 = vcmp.eq.s32.totalorder %v265, %v216
    %vm277 = vcmp.eq.s32.totalorder %v268, %v216
    %vm278 = vcmp.eq.s32.totalorder %v271, %v216
    %vm279 = vcmp.eq.s32.totalorder %v274, %v216
    %v280 = vsel %vm275, 1, 0
    %v281 = vsel %vm276, 1, 0
    %v282 = vsel %vm277, 1, 0
    %v283 = vsel %vm278, 1, 0
    %v284 = vsel %vm279, 1, 0
    %v285 = vcvt.s32.f32 %v280
    %v286 = vcvt.s32.f32 %v281
    %v287 = vcvt.s32.f32 %v282
    %v288 = vcvt.s32.f32 %v283
    %v289 = vcvt.s32.f32 %v284
    %v290 = vpack.c.bf16 %v286, %v285
    %v291 = vpack.c.bf16 %v288, %v287
    %v292 = vpack.c.bf16 %v289, %v289
    %v293 = vlaneseq
    %v294 = vshrl.u32 %v293, 7
    %v295 = vadd.s32 %v294, 8
    %v296 = vld [vmem:[#allocation6] sm:$0x1]
    %v297 = vlaneseq
    %v298 = vshrl.u32 %v297, 7
    %v299 = vsub.s32 0, %v298
    %v300 = vrot.slane %v296, %v299
    %vm301 = vcmp.eq.s32.totalorder %v300, %v294
    %vm302 = vcmp.eq.s32.totalorder %v300, %v295
    %v303 = vsel %vm301, 1, 0
    %v304 = vsel %vm302, 1, 0
    %v305 = vcvt.s32.f32 %v303
    %v306 = vcvt.s32.f32 %v304
    %v307 = vpack.c.bf16 %v306, %v305
    %v308 = vld [vmem:[#allocation8] sm:$0x1]
    %v309 = vlaneseq
    %v310 = vshrl.u32 %v309, 7
    %v311 = vsub.s32 0, %v310
    %v312 = vrot.slane %v308, %v311
    %vm313 = vcmp.eq.s32.totalorder %v312, %v294
    %v314 = vsel %vm313, 1, 0
    %v315 = vcvt.s32.f32 %v314
    %v316 = vpack.c.bf16 %v315, %v315
    %vm317 = vcmask 123904
    %v318 = vsel %vm317, %v315, 0.0
    %319 = vadd.xlane.f32.xlu0 %v318
    %v320 = vpop.xlane.xlu0 %319
    %v321 = vmax.f32 %v320, 1.0
    %v322 = vrcp.pop %v321
    %v323 = vmul.f32 1.0, %v322
    %v324 = vld [vmem:[#allocation9] sm:$0xff]
    %v325 = vld [vmem:[#allocation9 + $0x8] sm:$0xff]
    %v326 = vld [vmem:[#allocation9 + $0x10] sm:$0xff]
    %v327 = vld [vmem:[#allocation9 + $0x18] sm:$0xff]
    %v328 = vld [vmem:[#allocation9 + $0x20] sm:$0xff]
    %v329 = vld [vmem:[#allocation3] sm:$0xff]
    %v330 = vld [vmem:[#allocation3 + $0x8] sm:$0xff]
    %v331 = vpack.c.bf16 %v330, %v329
    %v332 = vld [vmem:[#allocation11] sm:$0xf]
    %v333 = vld [vmem:[#allocation11 + $0x4] sm:$0xf]
    %v334 = vld [vmem:[#allocation11 + $0x8] sm:$0xf]
    %v335 = vld [vmem:[#allocation11 + $0xc] sm:$0xf]
    %v336 = vld [vmem:[#allocation11 + $0x10] sm:$0xf]
    %v337 = vld [vmem:[#allocation11 + $0x14] sm:$0xf]
    %v338 = vld [vmem:[#allocation11 + $0x18] sm:$0xf]
    %v339 = vld [vmem:[#allocation11 + $0x1c] sm:$0xf]
    %v340 = vld [vmem:[#allocation11 + $0x20] sm:$0xf]
    %v341 = vld [vmem:[#allocation11 + $0x24] sm:$0xf]
    %v342 = vld [vmem:[#allocation11 + $0x28] sm:$0xf]
    %v343 = vld [vmem:[#allocation11 + $0x2c] sm:$0xf]
    %v344 = vld [vmem:[#allocation11 + $0x30] sm:$0xf]
    %v345 = vld [vmem:[#allocation11 + $0x34] sm:$0xf]
    %v346 = vld [vmem:[#allocation11 + $0x38] sm:$0xf]
    %v347 = vld [vmem:[#allocation11 + $0x3c] sm:$0xf]
    %v348 = vld [vmem:[#allocation12] sm:$0x1]
    %v350 = vlaneseq
    %v351 = vshrl.u32 %v350, 7
    %v352 = vsub.s32 0, %v351
    %v353 = vrot.slane %v348, %v352
    %v371 = vunpack.c.l.b16 %v332
    %v372 = vunpack.c.l.b16 %v333
    %v373 = vunpack.c.l.b16 %v334
    %v374 = vunpack.c.l.b16 %v335
    %v375 = vunpack.c.l.b16 %v336
    %v376 = vunpack.c.l.b16 %v337
    %v377 = vunpack.c.l.b16 %v338
    %v378 = vunpack.c.l.b16 %v339
    %v379 = vunpack.c.l.b16 %v340
    %v380 = vunpack.c.l.b16 %v341
    %v381 = vunpack.c.l.b16 %v342
    %v382 = vunpack.c.l.b16 %v343
    %v383 = vunpack.c.l.b16 %v344
    %v384 = vunpack.c.l.b16 %v345
    %v385 = vunpack.c.l.b16 %v346
    %v386 = vunpack.c.l.b16 %v347
    %v387 = vpack.c.b16 %v372, %v371
    %v388 = vpack.c.b16 %v374, %v373
    %v389 = vpack.c.b16 %v376, %v375
    %v390 = vpack.c.b16 %v378, %v377
    %v391 = vpack.c.b16 %v380, %v379
    %v392 = vpack.c.b16 %v382, %v381
    %v393 = vpack.c.b16 %v384, %v383
    %v394 = vpack.c.b16 %v386, %v385
    %403 = vmatprep.subr.bf16.mxu0 0
    %404 = vmatpush1.bf16.msra.mxu0 %v387
    %405 = vmatprep.subr.bf16.mxu0 0
    %406 = vmatpush1.bf16.msra.mxu0 %v388
    %407 = vmatprep.subr.bf16.mxu0 0
    %408 = vmatpush1.bf16.msra.mxu0 %v389
    %409 = vmatprep.subr.bf16.mxu0 0
    %410 = vmatpush1.bf16.msra.mxu0 %v390
    %411 = vmatprep.subr.bf16.mxu0 0
    %412 = vmatpush1.bf16.msra.mxu0 %v391
    %413 = vmatprep.subr.bf16.mxu0 0
    %414 = vmatpush1.bf16.msra.mxu0 %v392
    %415 = vmatprep.subr.bf16.mxu0 0
    %416 = vmatpush1.bf16.msra.mxu0 %v393
    %417 = vmatprep.subr.bf16.mxu0 0
    %418 = vmatpush1.bf16.msra.mxu0 %v394
    %419 = vmatprep.subr.bf16.mxu0 0
    %420 = vmatpush1.bf16.msra.mxu0 0
    %421 = vmatprep.subr.bf16.mxu0 0
    %422 = vmatpush1.bf16.msra.mxu0 0
    %423 = vmatprep.subr.bf16.mxu0 0
    %424 = vmatpush1.bf16.msra.mxu0 0
    %425 = vmatprep.subr.bf16.mxu0 0
    %426 = vmatpush1.bf16.msra.mxu0 0
    %427 = vmatprep.subr.bf16.mxu0 0
    %428 = vmatpush1.bf16.msra.mxu0 0
    %429 = vmatprep.subr.bf16.mxu0 0
    %430 = vmatpush1.bf16.msra.mxu0 0
    %431 = vmatprep.subr.bf16.mxu0 0
    %432 = vmatpush1.bf16.msra.mxu0 0
    %433 = vmatprep.subr.bf16.mxu0 0
    %434 = vmatpush1.bf16.msra.mxu0 0
    %435 = vmatprep.mubr.bf16.mxu0 0
    %436 = vmatmul.mubr.bf16.gmra.mrb[0].mxu0 %v331
    %v437 = vpop.f32.mrb[0].mxu0
    %v438 = vadd.f32 %v353, %v437
    %v439 = vpop.f32.mrb[0].mxu0
    %v440 = vpop.f32.mrb[0].mxu0
    %v441 = vadd.f32 %v353, %v440
    %v442 = vpop.f32.mrb[0].mxu0
    %443 = vdwg.mxu0
    %444 = vst [vmem:[#allocation2] sm:$0xff] %v438
    %445 = vst [vmem:[#allocation2 + $0x8] sm:$0xff] %v441
    %v446 = vld [vmem:[#allocation2] sm:$0xff]
    %v447 = vld [vmem:[#allocation2 + $0x8] sm:$0xff]
    %v448 = vpack.c.bf16 %v447, %v446
    %vm449 = vcmask 130048
    %v451 = vsel %vm449, %v290, 0
    %v454 = vsel %vm449, %v291, 0
    %v457 = vsel %vm449, %v292, 0
    %459 = vmatprep.subr.bf16.mxu0 0
    %460 = vmatpush1.bf16.msra.mxu0 %v448
    %461 = vmatprep.subr.bf16.mxu0 0
    %462 = vmatpush1.bf16.msra.mxu0 0
    %463 = vmatprep.subr.bf16.mxu0 0
    %464 = vmatpush1.bf16.msra.mxu0 0
    %465 = vmatprep.subr.bf16.mxu0 0
    %466 = vmatpush1.bf16.msra.mxu0 0
    %467 = vmatprep.subr.bf16.mxu0 0
    %468 = vmatpush1.bf16.msra.mxu0 0
    %469 = vmatprep.subr.bf16.mxu0 0
    %470 = vmatpush1.bf16.msra.mxu0 0
    %471 = vmatprep.subr.bf16.mxu0 0
    %472 = vmatpush1.bf16.msra.mxu0 0
    %473 = vmatprep.subr.bf16.mxu0 0
    %474 = vmatpush1.bf16.msra.mxu0 0
    %475 = vmatprep.subr.bf16.mxu0 0
    %476 = vmatpush1.bf16.msra.mxu0 0
    %477 = vmatprep.subr.bf16.mxu0 0
    %478 = vmatpush1.bf16.msra.mxu0 0
    %479 = vmatprep.subr.bf16.mxu0 0
    %480 = vmatpush1.bf16.msra.mxu0 0
    %481 = vmatprep.subr.bf16.mxu0 0
    %482 = vmatpush1.bf16.msra.mxu0 0
    %483 = vmatprep.subr.bf16.mxu0 0
    %484 = vmatpush1.bf16.msra.mxu0 0
    %485 = vmatprep.subr.bf16.mxu0 0
    %486 = vmatpush1.bf16.msra.mxu0 0
    %487 = vmatprep.subr.bf16.mxu0 0
    %488 = vmatpush1.bf16.msra.mxu0 0
    %489 = vmatprep.subr.bf16.mxu0 0
    %490 = vmatpush1.bf16.msra.mxu0 0
    %491 = vmatprep.mubr.bf16.mxu0 0
    %492 = vmatmul.mubr.bf16.gmra.mrb[0].mxu0 %v451
    %v493 = vpop.f32.mrb[0].mxu0
    %v494 = vadd.f32 0.0, %v493
    %v495 = vpop.f32.mrb[0].mxu0
    %v496 = vpop.f32.mrb[0].mxu0
    %v497 = vadd.f32 0.0, %v496
    %v498 = vpop.f32.mrb[0].mxu0
    %499 = vmatprep.mubr.bf16.mxu0 0
    %500 = vmatmul.mubr.bf16.gmra.mrb[0].mxu0 %v454
    %v501 = vpop.f32.mrb[0].mxu0
    %v502 = vadd.f32 0.0, %v501
    %v503 = vpop.f32.mrb[0].mxu0
    %v504 = vpop.f32.mrb[0].mxu0
    %v505 = vadd.f32 0.0, %v504
    %v506 = vpop.f32.mrb[0].mxu0
    %507 = vmatprep.mubr.bf16.mxu0 0
    %508 = vmatmul.mubr.bf16.gmra.mrb[0].mxu0 %v457
    %v509 = vpop.f32.mrb[0].mxu0
    %v510 = vadd.f32 0.0, %v509
    %v511 = vpop.f32.mrb[0].mxu0
    %v512 = vpop.f32.mrb[0].mxu0
    %v513 = vpop.f32.mrb[0].mxu0
    %514 = vdwg.mxu0
    %515 = vrot.lane.b32.xlu0 %v494, 32
    %v516 = vpop.permute.xlu0 %515
    %517 = vrot.lane.b32.xlu0 %v497, 32
    %v518 = vpop.permute.xlu0 %517
    %519 = vrot.lane.b32.xlu0 %v502, 32
    %v520 = vpop.permute.xlu0 %519
    %521 = vrot.lane.b32.xlu0 %v505, 32
    %v522 = vpop.permute.xlu0 %521
    %523 = vrot.lane.b32.xlu0 %v510, 32
    %v524 = vpop.permute.xlu0 %523
    %v526 = vsel %vm449, %v252, 0
    %v529 = vsel %vm449, %v253, 0
    %v532 = vsel %vm449, %v254, 0
    %534 = vmatprep.subr.bf16.mxu0 0
    %535 = vmatpush1.bf16.msra.mxu0 %v448
    %536 = vmatprep.subr.bf16.mxu0 0
    %537 = vmatpush1.bf16.msra.mxu0 0
    %538 = vmatprep.subr.bf16.mxu0 0
    %539 = vmatpush1.bf16.msra.mxu0 0
    %540 = vmatprep.subr.bf16.mxu0 0
    %541 = vmatpush1.bf16.msra.mxu0 0
    %542 = vmatprep.subr.bf16.mxu0 0
    %543 = vmatpush1.bf16.msra.mxu0 0
    %544 = vmatprep.subr.bf16.mxu0 0
    %545 = vmatpush1.bf16.msra.mxu0 0
    %546 = vmatprep.subr.bf16.mxu0 0
    %547 = vmatpush1.bf16.msra.mxu0 0
    %548 = vmatprep.subr.bf16.mxu0 0
    %549 = vmatpush1.bf16.msra.mxu0 0
    %550 = vmatprep.subr.bf16.mxu0 0
    %551 = vmatpush1.bf16.msra.mxu0 0
    %552 = vmatprep.subr.bf16.mxu0 0
    %553 = vmatpush1.bf16.msra.mxu0 0
    %554 = vmatprep.subr.bf16.mxu0 0
    %555 = vmatpush1.bf16.msra.mxu0 0
    %556 = vmatprep.subr.bf16.mxu0 0
    %557 = vmatpush1.bf16.msra.mxu0 0
    %558 = vmatprep.subr.bf16.mxu0 0
    %559 = vmatpush1.bf16.msra.mxu0 0
    %560 = vmatprep.subr.bf16.mxu0 0
    %561 = vmatpush1.bf16.msra.mxu0 0
    %562 = vmatprep.subr.bf16.mxu0 0
    %563 = vmatpush1.bf16.msra.mxu0 0
    %564 = vmatprep.subr.bf16.mxu0 0
    %565 = vmatpush1.bf16.msra.mxu0 0
    %566 = vmatprep.mubr.bf16.mxu0 0
    %567 = vmatmul.mubr.bf16.gmra.mrb[0].mxu0 %v526
    %v568 = vpop.f32.mrb[0].mxu0
    %v569 = vadd.f32 %v516, %v568
    %v570 = vpop.f32.mrb[0].mxu0
    %v571 = vpop.f32.mrb[0].mxu0
    %v572 = vadd.f32 %v518, %v571
    %v573 = vpop.f32.mrb[0].mxu0
    %574 = vmatprep.mubr.bf16.mxu0 0
    %575 = vmatmul.mubr.bf16.gmra.mrb[0].mxu0 %v529
    %v576 = vpop.f32.mrb[0].mxu0
    %v577 = vadd.f32 %v520, %v576
    %v578 = vpop.f32.mrb[0].mxu0
    %v579 = vpop.f32.mrb[0].mxu0
    %v580 = vadd.f32 %v522, %v579
    %v581 = vpop.f32.mrb[0].mxu0
    %582 = vmatprep.mubr.bf16.mxu0 0
    %583 = vmatmul.mubr.bf16.gmra.mrb[0].mxu0 %v532
    %v584 = vpop.f32.mrb[0].mxu0
    %v585 = vadd.f32 %v524, %v584
    %v586 = vpop.f32.mrb[0].mxu0
    %v587 = vpop.f32.mrb[0].mxu0
    %v588 = vpop.f32.mrb[0].mxu0
    %589 = vdwg.mxu0
    %v590 = vadd.f32 %v569, %v324
    %v591 = vadd.f32 %v572, %v325
    %v592 = vadd.f32 %v577, %v326
    %v593 = vadd.f32 %v580, %v327
    %v594 = vadd.f32 %v585, %v328
    %v595 = vpack.c.bf16 %v591, %v590
    %v596 = vpack.c.bf16 %v593, %v592
    %v597 = vpack.c.bf16 %v594, %v594
    %v598 = vld [vmem:[#allocation14] sm:$0xf]
    %v599 = vld [vmem:[#allocation14 + $0x4] sm:$0xf]
    %v600 = vld [vmem:[#allocation14 + $0x8] sm:$0xf]
    %v601 = vld [vmem:[#allocation14 + $0xc] sm:$0xf]
    %v602 = vld [vmem:[#allocation14 + $0x10] sm:$0xf]
    %v603 = vld [vmem:[#allocation14 + $0x14] sm:$0xf]
    %v604 = vld [vmem:[#allocation14 + $0x18] sm:$0xf]
    %v605 = vld [vmem:[#allocation14 + $0x1c] sm:$0xf]
    %v606 = vld [vmem:[#allocation14 + $0x20] sm:$0xf]
    %v607 = vld [vmem:[#allocation14 + $0x24] sm:$0xf]
    %v608 = vld [vmem:[#allocation14 + $0x28] sm:$0xf]
    %v609 = vld [vmem:[#allocation14 + $0x2c] sm:$0xf]
    %v610 = vld [vmem:[#allocation14 + $0x30] sm:$0xf]
    %v611 = vld [vmem:[#allocation14 + $0x34] sm:$0xf]
    %v612 = vld [vmem:[#allocation14 + $0x38] sm:$0xf]
    %v613 = vld [vmem:[#allocation14 + $0x3c] sm:$0xf]
    %v614 = vld [vmem:[%s9] sm:$0x1]
    %v616 = vlaneseq
    %v617 = vshrl.u32 %v616, 7
    %v618 = vsub.s32 0, %v617
    %v619 = vrot.slane %v614, %v618
    %v637 = vunpack.c.l.b16 %v598
    %v638 = vunpack.c.l.b16 %v599
    %v639 = vunpack.c.l.b16 %v600
    %v640 = vunpack.c.l.b16 %v601
    %v641 = vunpack.c.l.b16 %v602
    %v642 = vunpack.c.l.b16 %v603
    %v643 = vunpack.c.l.b16 %v604
    %v644 = vunpack.c.l.b16 %v605
    %v645 = vunpack.c.l.b16 %v606
    %v646 = vunpack.c.l.b16 %v607
    %v647 = vunpack.c.l.b16 %v608
    %v648 = vunpack.c.l.b16 %v609
    %v649 = vunpack.c.l.b16 %v610
    %v650 = vunpack.c.l.b16 %v611
    %v651 = vunpack.c.l.b16 %v612
    %v652 = vunpack.c.l.b16 %v613
    %v653 = vpack.c.b16 %v638, %v637
    %v654 = vpack.c.b16 %v640, %v639
    %v655 = vpack.c.b16 %v642, %v641
    %v656 = vpack.c.b16 %v644, %v643
    %v657 = vpack.c.b16 %v646, %v645
    %v658 = vpack.c.b16 %v648, %v647
    %v659 = vpack.c.b16 %v650, %v649
    %v660 = vpack.c.b16 %v652, %v651
    %669 = vmatprep.subr.bf16.mxu0 0
    %670 = vmatpush1.bf16.msra.mxu0 %v653
    %671 = vmatprep.subr.bf16.mxu0 0
    %672 = vmatpush1.bf16.msra.mxu0 %v654
    %673 = vmatprep.subr.bf16.mxu0 0
    %674 = vmatpush1.bf16.msra.mxu0 %v655
    %675 = vmatprep.subr.bf16.mxu0 0
    %676 = vmatpush1.bf16.msra.mxu0 %v656
    %677 = vmatprep.subr.bf16.mxu0 0
    %678 = vmatpush1.bf16.msra.mxu0 %v657
    %679 = vmatprep.subr.bf16.mxu0 0
    %680 = vmatpush1.bf16.msra.mxu0 %v658
    %681 = vmatprep.subr.bf16.mxu0 0
    %682 = vmatpush1.bf16.msra.mxu0 %v659
    %683 = vmatprep.subr.bf16.mxu0 0
    %684 = vmatpush1.bf16.msra.mxu0 %v660
    %685 = vmatprep.subr.bf16.mxu0 0
    %686 = vmatpush1.bf16.msra.mxu0 0
    %687 = vmatprep.subr.bf16.mxu0 0
    %688 = vmatpush1.bf16.msra.mxu0 0
    %689 = vmatprep.subr.bf16.mxu0 0
    %690 = vmatpush1.bf16.msra.mxu0 0
    %691 = vmatprep.subr.bf16.mxu0 0
    %692 = vmatpush1.bf16.msra.mxu0 0
    %693 = vmatprep.subr.bf16.mxu0 0
    %694 = vmatpush1.bf16.msra.mxu0 0
    %695 = vmatprep.subr.bf16.mxu0 0
    %696 = vmatpush1.bf16.msra.mxu0 0
    %697 = vmatprep.subr.bf16.mxu0 0
    %698 = vmatpush1.bf16.msra.mxu0 0
    %699 = vmatprep.subr.bf16.mxu0 0
    %700 = vmatpush1.bf16.msra.mxu0 0
    %701 = vmatprep.mubr.bf16.mxu0 0
    %702 = vmatmul.mubr.bf16.gmra.mrb[0].mxu0 %v595
    %v703 = vpop.f32.mrb[0].mxu0
    %v704 = vadd.f32 %v619, %v703
    %v705 = vpop.f32.mrb[0].mxu0
    %v706 = vpop.f32.mrb[0].mxu0
    %v707 = vadd.f32 %v619, %v706
    %v708 = vpop.f32.mrb[0].mxu0
    %709 = vmatprep.mubr.bf16.mxu0 0
    %710 = vmatmul.mubr.bf16.gmra.mrb[0].mxu0 %v596
    %v711 = vpop.f32.mrb[0].mxu0
    %v712 = vadd.f32 %v619, %v711
    %v713 = vpop.f32.mrb[0].mxu0
    %v714 = vpop.f32.mrb[0].mxu0
    %v715 = vadd.f32 %v619, %v714
    %v716 = vpop.f32.mrb[0].mxu0
    %717 = vmatprep.mubr.bf16.mxu0 0
    %718 = vmatmul.mubr.bf16.gmra.mrb[0].mxu0 %v597
    %v719 = vpop.f32.mrb[0].mxu0
    %v720 = vadd.f32 %v619, %v719
    %v721 = vpop.f32.mrb[0].mxu0
    %v722 = vpop.f32.mrb[0].mxu0
    %v723 = vpop.f32.mrb[0].mxu0
    %724 = vdwg.mxu0
    %v725 = vld [vmem:[%s10] sm:$0x1]
    %v726 = vld [vmem:[%s11] sm:$0x1]
    %v727 = vadd.f32 %v704, %v707
    %v728 = vadd.f32 %v727, %v712
    %v729 = vadd.f32 %v728, %v715
    %v730 = vadd.f32 %v729, %v720
    %v731 = vrot.slane %v730, 4
    %v732 = vadd.f32 %v730, %v731
    %v733 = vrot.slane %v732, 2
    %v734 = vadd.f32 %v732, %v733
    %v735 = vrot.slane %v734, 1
    %v736 = vadd.f32 %v734, %v735
    %v737 = vmul.f32 %v736, 0.025
    %v738 = vmul.f32 %v704, %v704
    %v739 = vmul.f32 %v707, %v707
    %v740 = vmul.f32 %v712, %v712
    %v741 = vmul.f32 %v715, %v715
    %v742 = vmul.f32 %v720, %v720
    %v743 = vadd.f32 %v738, %v739
    %v744 = vadd.f32 %v743, %v740
    %v745 = vadd.f32 %v744, %v741
    %v746 = vadd.f32 %v745, %v742
    %v747 = vrot.slane %v746, 4
    %v748 = vadd.f32 %v746, %v747
    %v749 = vrot.slane %v748, 2
    %v750 = vadd.f32 %v748, %v749
    %v751 = vrot.slane %v750, 1
    %v752 = vadd.f32 %v750, %v751
    %v753 = vmul.f32 %v752, 0.025
    %v754 = vmul.f32 %v737, %v737
    %v755 = vsub.f32 %v753, %v754
    %v756 = vmax.f32 %v755, 0.0
    %v757 = vadd.f32 %v756, 1e-05
    %v758 = vrsqrt.pop %v757
    %v759 = vmul.f32 %v725, %v758
    %v760 = vmul.f32 %v737, %v759
    %v761 = vsub.f32 %v726, %v760
    %v763 = vlaneseq
    %v764 = vshrl.u32 %v763, 7
    %v765 = vsub.s32 0, %v764
    %v766 = vrot.slane %v759, %v765
    %v768 = vmul.f32 %v704, %v766
    %v769 = vmul.f32 %v707, %v766
    %v770 = vmul.f32 %v712, %v766
    %v771 = vmul.f32 %v715, %v766
    %v772 = vmul.f32 %v720, %v766
    %v774 = vlaneseq
    %v775 = vshrl.u32 %v774, 7
    %v776 = vsub.s32 0, %v775
    %v777 = vrot.slane %v761, %v776
    %v779 = vadd.f32 %v768, %v777
    %v780 = vadd.f32 %v769, %v777
    %v781 = vadd.f32 %v770, %v777
    %v782 = vadd.f32 %v771, %v777
    %v783 = vadd.f32 %v772, %v777
    %v784 = vmax.f32 %v779, 0.0
    %v785 = vmax.f32 %v780, 0.0
    %v786 = vmax.f32 %v781, 0.0
    %v787 = vmax.f32 %v782, 0.0
    %v788 = vmax.f32 %v783, 0.0
    %v789 = vpack.c.bf16 %v785, %v784
    %v790 = vpack.c.bf16 %v787, %v786
    %v791 = vpack.c.bf16 %v788, %v788
    %v792 = vld [vmem:[#allocation15] sm:$0xf]
    %v793 = vld [vmem:[#allocation15 + $0x4] sm:$0xf]
    %v794 = vld [vmem:[#allocation15 + $0x8] sm:$0xf]
    %v795 = vld [vmem:[#allocation15 + $0xc] sm:$0xf]
    %v796 = vld [vmem:[#allocation15 + $0x10] sm:$0xf]
    %v797 = vld [vmem:[#allocation15 + $0x14] sm:$0xf]
    %v798 = vld [vmem:[#allocation15 + $0x18] sm:$0xf]
    %v799 = vld [vmem:[#allocation15 + $0x1c] sm:$0xf]
    %v800 = vld [vmem:[#allocation15 + $0x20] sm:$0xf]
    %v801 = vld [vmem:[#allocation15 + $0x24] sm:$0xf]
    %v802 = vld [vmem:[#allocation15 + $0x28] sm:$0xf]
    %v803 = vld [vmem:[#allocation15 + $0x2c] sm:$0xf]
    %v804 = vld [vmem:[#allocation15 + $0x30] sm:$0xf]
    %v805 = vld [vmem:[#allocation15 + $0x34] sm:$0xf]
    %v806 = vld [vmem:[#allocation15 + $0x38] sm:$0xf]
    %v807 = vld [vmem:[#allocation15 + $0x3c] sm:$0xf]
    %v808 = vld [vmem:[%s13] sm:$0x1]
    %v810 = vlaneseq
    %v811 = vshrl.u32 %v810, 7
    %v812 = vsub.s32 0, %v811
    %v813 = vrot.slane %v808, %v812
    %v831 = vunpack.c.l.b16 %v792
    %v832 = vunpack.c.l.b16 %v793
    %v833 = vunpack.c.l.b16 %v794
    %v834 = vunpack.c.l.b16 %v795
    %v835 = vunpack.c.l.b16 %v796
    %v836 = vunpack.c.l.b16 %v797
    %v837 = vunpack.c.l.b16 %v798
    %v838 = vunpack.c.l.b16 %v799
    %v839 = vunpack.c.l.b16 %v800
    %v840 = vunpack.c.l.b16 %v801
    %v841 = vunpack.c.l.b16 %v802
    %v842 = vunpack.c.l.b16 %v803
    %v843 = vunpack.c.l.b16 %v804
    %v844 = vunpack.c.l.b16 %v805
    %v845 = vunpack.c.l.b16 %v806
    %v846 = vunpack.c.l.b16 %v807
    %v847 = vpack.c.b16 %v832, %v831
    %v848 = vpack.c.b16 %v834, %v833
    %v849 = vpack.c.b16 %v836, %v835
    %v850 = vpack.c.b16 %v838, %v837
    %v851 = vpack.c.b16 %v840, %v839
    %v852 = vpack.c.b16 %v842, %v841
    %v853 = vpack.c.b16 %v844, %v843
    %v854 = vpack.c.b16 %v846, %v845
    %863 = vmatprep.subr.bf16.mxu0 0
    %864 = vmatpush1.bf16.msra.mxu0 %v847
    %865 = vmatprep.subr.bf16.mxu0 0
    %866 = vmatpush1.bf16.msra.mxu0 %v848
    %867 = vmatprep.subr.bf16.mxu0 0
    %868 = vmatpush1.bf16.msra.mxu0 %v849
    %869 = vmatprep.subr.bf16.mxu0 0
    %870 = vmatpush1.bf16.msra.mxu0 %v850
    %871 = vmatprep.subr.bf16.mxu0 0
    %872 = vmatpush1.bf16.msra.mxu0 %v851
    %873 = vmatprep.subr.bf16.mxu0 0
    %874 = vmatpush1.bf16.msra.mxu0 %v852
    %875 = vmatprep.subr.bf16.mxu0 0
    %876 = vmatpush1.bf16.msra.mxu0 %v853
    %877 = vmatprep.subr.bf16.mxu0 0
    %878 = vmatpush1.bf16.msra.mxu0 %v854
    %879 = vmatprep.subr.bf16.mxu0 0
    %880 = vmatpush1.bf16.msra.mxu0 0
    %881 = vmatprep.subr.bf16.mxu0 0
    %882 = vmatpush1.bf16.msra.mxu0 0
    %883 = vmatprep.subr.bf16.mxu0 0
    %884 = vmatpush1.bf16.msra.mxu0 0
    %885 = vmatprep.subr.bf16.mxu0 0
    %886 = vmatpush1.bf16.msra.mxu0 0
    %887 = vmatprep.subr.bf16.mxu0 0
    %888 = vmatpush1.bf16.msra.mxu0 0
    %889 = vmatprep.subr.bf16.mxu0 0
    %890 = vmatpush1.bf16.msra.mxu0 0
    %891 = vmatprep.subr.bf16.mxu0 0
    %892 = vmatpush1.bf16.msra.mxu0 0
    %893 = vmatprep.subr.bf16.mxu0 0
    %894 = vmatpush1.bf16.msra.mxu0 0
    %895 = vmatprep.mubr.bf16.mxu0 0
    %896 = vmatmul.mubr.bf16.gmra.mrb[0].mxu0 %v789
    %v897 = vpop.f32.mrb[0].mxu0
    %v898 = vadd.f32 %v813, %v897
    %v899 = vpop.f32.mrb[0].mxu0
    %v900 = vpop.f32.mrb[0].mxu0
    %v901 = vadd.f32 %v813, %v900
    %v902 = vpop.f32.mrb[0].mxu0
    %903 = vmatprep.mubr.bf16.mxu0 0
    %904 = vmatmul.mubr.bf16.gmra.mrb[0].mxu0 %v790
    %v905 = vpop.f32.mrb[0].mxu0
    %v906 = vadd.f32 %v813, %v905
    %v907 = vpop.f32.mrb[0].mxu0
    %v908 = vpop.f32.mrb[0].mxu0
    %v909 = vadd.f32 %v813, %v908
    %v910 = vpop.f32.mrb[0].mxu0
    %911 = vmatprep.mubr.bf16.mxu0 0
    %912 = vmatmul.mubr.bf16.gmra.mrb[0].mxu0 %v791
    %v913 = vpop.f32.mrb[0].mxu0
    %v914 = vadd.f32 %v813, %v913
    %v915 = vpop.f32.mrb[0].mxu0
    %v916 = vpop.f32.mrb[0].mxu0
    %v917 = vpop.f32.mrb[0].mxu0
    %918 = vdwg.mxu0
    %v919 = vld [vmem:[%s14] sm:$0x1]
    %v920 = vld [vmem:[%s15] sm:$0x1]
    %v921 = vadd.f32 %v898, %v901
    %v922 = vadd.f32 %v921, %v906
    %v923 = vadd.f32 %v922, %v909
    %v924 = vadd.f32 %v923, %v914
    %v925 = vrot.slane %v924, 4
    %v926 = vadd.f32 %v924, %v925
    %v927 = vrot.slane %v926, 2
    %v928 = vadd.f32 %v926, %v927
    %v929 = vrot.slane %v928, 1
    %v930 = vadd.f32 %v928, %v929
    %v931 = vmul.f32 %v930, 0.025
    %v932 = vmul.f32 %v898, %v898
    %v933 = vmul.f32 %v901, %v901
    %v934 = vmul.f32 %v906, %v906
    %v935 = vmul.f32 %v909, %v909
    %v936 = vmul.f32 %v914, %v914
    %v937 = vadd.f32 %v932, %v933
    %v938 = vadd.f32 %v937, %v934
    %v939 = vadd.f32 %v938, %v935
    %v940 = vadd.f32 %v939, %v936
    %v941 = vrot.slane %v940, 4
    %v942 = vadd.f32 %v940, %v941
    %v943 = vrot.slane %v942, 2
    %v944 = vadd.f32 %v942, %v943
    %v945 = vrot.slane %v944, 1
    %v946 = vadd.f32 %v944, %v945
    %v947 = vmul.f32 %v946, 0.025
    %v948 = vmul.f32 %v931, %v931
    %v949 = vsub.f32 %v947, %v948
    %v950 = vmax.f32 %v949, 0.0
    %v951 = vadd.f32 %v950, 1e-05
    %v952 = vrsqrt.pop %v951
    %v953 = vmul.f32 %v919, %v952
    %v954 = vmul.f32 %v931, %v953
    %v955 = vsub.f32 %v920, %v954
    %v957 = vlaneseq
    %v958 = vshrl.u32 %v957, 7
    %v959 = vsub.s32 0, %v958
    %v960 = vrot.slane %v953, %v959
    %v962 = vmul.f32 %v898, %v960
    %v963 = vmul.f32 %v901, %v960
    %v964 = vmul.f32 %v906, %v960
    %v965 = vmul.f32 %v909, %v960
    %v966 = vmul.f32 %v914, %v960
    %v968 = vlaneseq
    %v969 = vshrl.u32 %v968, 7
    %v970 = vsub.s32 0, %v969
    %v971 = vrot.slane %v955, %v970
    %v973 = vadd.f32 %v962, %v971
    %v974 = vadd.f32 %v963, %v971
    %v975 = vadd.f32 %v964, %v971
    %v976 = vadd.f32 %v965, %v971
    %v977 = vadd.f32 %v966, %v971
    %v978 = vmax.f32 %v973, 0.0
    %v979 = vmax.f32 %v974, 0.0
    %v980 = vmax.f32 %v975, 0.0
    %v981 = vmax.f32 %v976, 0.0
    %v982 = vmax.f32 %v977, 0.0
    %v983 = vpack.c.bf16 %v979, %v978
    %v984 = vpack.c.bf16 %v981, %v980
    %v985 = vpack.c.bf16 %v982, %v982
    %vm986 = vcmask 326656
    %v988 = vsel %vm986, %v307, 0
    %vm990 = vcmask 1043456
    %v992 = vsel %vm990, %v985, 0
    %994 = vmatprep.subr.bf16.mxu0 0
    %995 = vmatpush1.bf16.msra.mxu0 %v983
    %996 = vmatprep.subr.bf16.mxu0 0
    %997 = vmatpush1.bf16.msra.mxu0 %v984
    %998 = vmatprep.subr.bf16.mxu0 0
    %999 = vmatpush1.bf16.msra.mxu0 %v992
    %1000 = vmatprep.subr.bf16.mxu0 0
    %1001 = vmatpush1.bf16.msra.mxu0 0
    %1002 = vmatprep.subr.bf16.mxu0 0
    %1003 = vmatpush1.bf16.msra.mxu0 0
    %1004 = vmatprep.subr.bf16.mxu0 0
    %1005 = vmatpush1.bf16.msra.mxu0 0
    %1006 = vmatprep.subr.bf16.mxu0 0
    %1007 = vmatpush1.bf16.msra.mxu0 0
    %1008 = vmatprep.subr.bf16.mxu0 0
    %1009 = vmatpush1.bf16.msra.mxu0 0
    %1010 = vmatprep.subr.bf16.mxu0 0
    %1011 = vmatpush1.bf16.msra.mxu0 0
    %1012 = vmatprep.subr.bf16.mxu0 0
    %1013 = vmatpush1.bf16.msra.mxu0 0
    %1014 = vmatprep.subr.bf16.mxu0 0
    %1015 = vmatpush1.bf16.msra.mxu0 0
    %1016 = vmatprep.subr.bf16.mxu0 0
    %1017 = vmatpush1.bf16.msra.mxu0 0
    %1018 = vmatprep.subr.bf16.mxu0 0
    %1019 = vmatpush1.bf16.msra.mxu0 0
    %1020 = vmatprep.subr.bf16.mxu0 0
    %1021 = vmatpush1.bf16.msra.mxu0 0
    %1022 = vmatprep.subr.bf16.mxu0 0
    %1023 = vmatpush1.bf16.msra.mxu0 0
    %1024 = vmatprep.subr.bf16.mxu0 0
    %1025 = vmatpush1.bf16.msra.mxu0 0
    %1026 = vmatprep.mubr.bf16.mxu0 0
    %1027 = vmatmul.mubr.bf16.gmra.mrb[0].mxu0 %v988
    %v1028 = vpop.f32.mrb[0].mxu0
    %v1029 = vadd.f32 0.0, %v1028
    %v1030 = vpop.f32.mrb[0].mxu0
    %v1031 = vpop.f32.mrb[0].mxu0
    %v1032 = vadd.f32 0.0, %v1031
    %v1033 = vpop.f32.mrb[0].mxu0
    %1034 = vdwg.mxu0
    %1035 = vrot.lane.b32.xlu0 %v1029, 32
    %v1036 = vpop.permute.xlu0 %1035
    %1037 = vrot.lane.b32.xlu0 %v1032, 32
    %v1038 = vpop.permute.xlu0 %1037
    %v1039 = vadd.f32 %v446, %v1036
    %v1040 = vadd.f32 %v447, %v1038
    %v1041 = vpack.c.bf16 %v1040, %v1039
    %v1042 = vld [vmem:[%s16] sm:$0xf]
    %v1043 = vld [vmem:[%s16 + $0x4] sm:$0xf]
    %v1044 = vld [vmem:[%s16 + $0x8] sm:$0xf]
    %v1045 = vld [vmem:[%s16 + $0xc] sm:$0xf]
    %v1046 = vld [vmem:[%s16 + $0x10] sm:$0xf]
    %v1047 = vld [vmem:[%s16 + $0x14] sm:$0xf]
    %v1048 = vld [vmem:[%s16 + $0x18] sm:$0xf]
    %v1049 = vld [vmem:[%s16 + $0x1c] sm:$0xf]
    %v1050 = vld [vmem:[%s16 + $0x20] sm:$0xf]
    %v1051 = vld [vmem:[%s16 + $0x24] sm:$0xf]
    %v1052 = vld [vmem:[%s16 + $0x28] sm:$0xf]
    %v1053 = vld [vmem:[%s16 + $0x2c] sm:$0xf]
    %v1054 = vld [vmem:[%s16 + $0x30] sm:$0xf]
    %v1055 = vld [vmem:[%s16 + $0x34] sm:$0xf]
    %v1056 = vld [vmem:[%s16 + $0x38] sm:$0xf]
    %v1057 = vld [vmem:[%s16 + $0x3c] sm:$0xf]
    %v1058 = vld [vmem:[%s17] sm:$0x1]
    %v1060 = vlaneseq
    %v1061 = vshrl.u32 %v1060, 7
    %v1062 = vsub.s32 0, %v1061
    %v1063 = vrot.slane %v1058, %v1062
    %v1081 = vunpack.c.l.b16 %v1042
    %v1082 = vunpack.c.l.b16 %v1043
    %v1083 = vunpack.c.l.b16 %v1044
    %v1084 = vunpack.c.l.b16 %v1045
    %v1085 = vunpack.c.l.b16 %v1046
    %v1086 = vunpack.c.l.b16 %v1047
    %v1087 = vunpack.c.l.b16 %v1048
    %v1088 = vunpack.c.l.b16 %v1049
    %v1089 = vunpack.c.l.b16 %v1050
    %v1090 = vunpack.c.l.b16 %v1051
    %v1091 = vunpack.c.l.b16 %v1052
    %v1092 = vunpack.c.l.b16 %v1053
    %v1093 = vunpack.c.l.b16 %v1054
    %v1094 = vunpack.c.l.b16 %v1055
    %v1095 = vunpack.c.l.b16 %v1056
    %v1096 = vunpack.c.l.b16 %v1057
    %v1097 = vpack.c.b16 %v1082, %v1081
    %v1098 = vpack.c.b16 %v1084, %v1083
    %v1099 = vpack.c.b16 %v1086, %v1085
    %v1100 = vpack.c.b16 %v1088, %v1087
    %v1101 = vpack.c.b16 %v1090, %v1089
    %v1102 = vpack.c.b16 %v1092, %v1091
    %v1103 = vpack.c.b16 %v1094, %v1093
    %v1104 = vpack.c.b16 %v1096, %v1095
    %1113 = vmatprep.subr.bf16.mxu0 0
    %1114 = vmatpush1.bf16.msra.mxu0 %v1097
    %1115 = vmatprep.subr.bf16.mxu0 0
    %1116 = vmatpush1.bf16.msra.mxu0 %v1098
    %1117 = vmatprep.subr.bf16.mxu0 0
    %1118 = vmatpush1.bf16.msra.mxu0 %v1099
    %1119 = vmatprep.subr.bf16.mxu0 0
    %1120 = vmatpush1.bf16.msra.mxu0 %v1100
    %1121 = vmatprep.subr.bf16.mxu0 0
    %1122 = vmatpush1.bf16.msra.mxu0 %v1101
    %1123 = vmatprep.subr.bf16.mxu0 0
    %1124 = vmatpush1.bf16.msra.mxu0 %v1102
    %1125 = vmatprep.subr.bf16.mxu0 0
    %1126 = vmatpush1.bf16.msra.mxu0 %v1103
    %1127 = vmatprep.subr.bf16.mxu0 0
    %1128 = vmatpush1.bf16.msra.mxu0 %v1104
    %1129 = vmatprep.subr.bf16.mxu0 0
    %1130 = vmatpush1.bf16.msra.mxu0 0
    %1131 = vmatprep.subr.bf16.mxu0 0
    %1132 = vmatpush1.bf16.msra.mxu0 0
    %1133 = vmatprep.subr.bf16.mxu0 0
    %1134 = vmatpush1.bf16.msra.mxu0 0
    %1135 = vmatprep.subr.bf16.mxu0 0
    %1136 = vmatpush1.bf16.msra.mxu0 0
    %1137 = vmatprep.subr.bf16.mxu0 0
    %1138 = vmatpush1.bf16.msra.mxu0 0
    %1139 = vmatprep.subr.bf16.mxu0 0
    %1140 = vmatpush1.bf16.msra.mxu0 0
    %1141 = vmatprep.subr.bf16.mxu0 0
    %1142 = vmatpush1.bf16.msra.mxu0 0
    %1143 = vmatprep.subr.bf16.mxu0 0
    %1144 = vmatpush1.bf16.msra.mxu0 0
    %1145 = vmatprep.mubr.bf16.mxu0 0
    %1146 = vmatmul.mubr.bf16.gmra.mrb[0].mxu0 %v1041
    %v1147 = vpop.f32.mrb[0].mxu0
    %v1148 = vadd.f32 %v1063, %v1147
    %v1149 = vpop.f32.mrb[0].mxu0
    %v1150 = vpop.f32.mrb[0].mxu0
    %v1151 = vadd.f32 %v1063, %v1150
    %v1152 = vpop.f32.mrb[0].mxu0
    %1153 = vdwg.mxu0
    %v1154 = vld [vmem:[%s18] sm:$0x1]
    %v1155 = vld [vmem:[%s19] sm:$0x1]
    %v1156 = vadd.f32 %v1148, %v1151
    %v1157 = vrot.slane %v1156, 4
    %v1158 = vadd.f32 %v1156, %v1157
    %v1159 = vrot.slane %v1158, 2
    %v1160 = vadd.f32 %v1158, %v1159
    %v1161 = vrot.slane %v1160, 1
    %v1162 = vadd.f32 %v1160, %v1161
    %v1163 = vmul.f32 %v1162, 0.0625
    %v1164 = vmul.f32 %v1148, %v1148
    %v1165 = vmul.f32 %v1151, %v1151
    %v1166 = vadd.f32 %v1164, %v1165
    %v1167 = vrot.slane %v1166, 4
    %v1168 = vadd.f32 %v1166, %v1167
    %v1169 = vrot.slane %v1168, 2
    %v1170 = vadd.f32 %v1168, %v1169
    %v1171 = vrot.slane %v1170, 1
    %v1172 = vadd.f32 %v1170, %v1171
    %v1173 = vmul.f32 %v1172, 0.0625
    %v1174 = vmul.f32 %v1163, %v1163
    %v1175 = vsub.f32 %v1173, %v1174
    %v1176 = vmax.f32 %v1175, 0.0
    %v1177 = vadd.f32 %v1176, 1e-05
    %v1178 = vrsqrt.pop %v1177
    %v1179 = vmul.f32 %v1154, %v1178
    %v1180 = vmul.f32 %v1163, %v1179
    %v1181 = vsub.f32 %v1155, %v1180
    %v1183 = vlaneseq
    %v1184 = vshrl.u32 %v1183, 7
    %v1185 = vsub.s32 0, %v1184
    %v1186 = vrot.slane %v1179, %v1185
    %v1188 = vmul.f32 %v1148, %v1186
    %v1189 = vmul.f32 %v1151, %v1186
    %v1191 = vlaneseq
    %v1192 = vshrl.u32 %v1191, 7
    %v1193 = vsub.s32 0, %v1192
    %v1194 = vrot.slane %v1181, %v1193
    %v1196 = vadd.f32 %v1188, %v1194
    %v1197 = vadd.f32 %v1189, %v1194
    %v1198 = vmax.f32 %v1196, 0.0
    %v1199 = vmax.f32 %v1197, 0.0
    %v1200 = vpack.c.bf16 %v1199, %v1198
    %v1201 = vld [vmem:[#allocation17] sm:$0xf]
    %v1202 = vld [vmem:[#allocation17 + $0x4] sm:$0xf]
    %v1203 = vld [vmem:[#allocation17 + $0x8] sm:$0xf]
    %v1204 = vld [vmem:[#allocation17 + $0xc] sm:$0xf]
    %v1205 = vld [vmem:[#allocation17 + $0x10] sm:$0xf]
    %v1206 = vld [vmem:[#allocation17 + $0x14] sm:$0xf]
    %v1207 = vld [vmem:[#allocation17 + $0x18] sm:$0xf]
    %v1208 = vld [vmem:[#allocation17 + $0x1c] sm:$0xf]
    %v1209 = vld [vmem:[#allocation17 + $0x20] sm:$0xf]
    %v1210 = vld [vmem:[#allocation17 + $0x24] sm:$0xf]
    %v1211 = vld [vmem:[#allocation17 + $0x28] sm:$0xf]
    %v1212 = vld [vmem:[#allocation17 + $0x2c] sm:$0xf]
    %v1213 = vld [vmem:[#allocation17 + $0x30] sm:$0xf]
    %v1214 = vld [vmem:[#allocation17 + $0x34] sm:$0xf]
    %v1215 = vld [vmem:[#allocation17 + $0x38] sm:$0xf]
    %v1216 = vld [vmem:[#allocation17 + $0x3c] sm:$0xf]
    %v1217 = vld [vmem:[%s21] sm:$0x1]
    %v1219 = vlaneseq
    %v1220 = vshrl.u32 %v1219, 7
    %v1221 = vsub.s32 0, %v1220
    %v1222 = vrot.slane %v1217, %v1221
    %v1240 = vunpack.c.l.b16 %v1201
    %v1241 = vunpack.c.l.b16 %v1202
    %v1242 = vunpack.c.l.b16 %v1203
    %v1243 = vunpack.c.l.b16 %v1204
    %v1244 = vunpack.c.l.b16 %v1205
    %v1245 = vunpack.c.l.b16 %v1206
    %v1246 = vunpack.c.l.b16 %v1207
    %v1247 = vunpack.c.l.b16 %v1208
    %v1248 = vunpack.c.l.b16 %v1209
    %v1249 = vunpack.c.l.b16 %v1210
    %v1250 = vunpack.c.l.b16 %v1211
    %v1251 = vunpack.c.l.b16 %v1212
    %v1252 = vunpack.c.l.b16 %v1213
    %v1253 = vunpack.c.l.b16 %v1214
    %v1254 = vunpack.c.l.b16 %v1215
    %v1255 = vunpack.c.l.b16 %v1216
    %v1256 = vpack.c.b16 %v1241, %v1240
    %v1257 = vpack.c.b16 %v1243, %v1242
    %v1258 = vpack.c.b16 %v1245, %v1244
    %v1259 = vpack.c.b16 %v1247, %v1246
    %v1260 = vpack.c.b16 %v1249, %v1248
    %v1261 = vpack.c.b16 %v1251, %v1250
    %v1262 = vpack.c.b16 %v1253, %v1252
    %v1263 = vpack.c.b16 %v1255, %v1254
    %1272 = vmatprep.subr.bf16.mxu0 0
    %1273 = vmatpush1.bf16.msra.mxu0 %v1256
    %1274 = vmatprep.subr.bf16.mxu0 0
    %1275 = vmatpush1.bf16.msra.mxu0 %v1257
    %1276 = vmatprep.subr.bf16.mxu0 0
    %1277 = vmatpush1.bf16.msra.mxu0 %v1258
    %1278 = vmatprep.subr.bf16.mxu0 0
    %1279 = vmatpush1.bf16.msra.mxu0 %v1259
    %1280 = vmatprep.subr.bf16.mxu0 0
    %1281 = vmatpush1.bf16.msra.mxu0 %v1260
    %1282 = vmatprep.subr.bf16.mxu0 0
    %1283 = vmatpush1.bf16.msra.mxu0 %v1261
    %1284 = vmatprep.subr.bf16.mxu0 0
    %1285 = vmatpush1.bf16.msra.mxu0 %v1262
    %1286 = vmatprep.subr.bf16.mxu0 0
    %1287 = vmatpush1.bf16.msra.mxu0 %v1263
    %1288 = vmatprep.subr.bf16.mxu0 0
    %1289 = vmatpush1.bf16.msra.mxu0 0
    %1290 = vmatprep.subr.bf16.mxu0 0
    %1291 = vmatpush1.bf16.msra.mxu0 0
    %1292 = vmatprep.subr.bf16.mxu0 0
    %1293 = vmatpush1.bf16.msra.mxu0 0
    %1294 = vmatprep.subr.bf16.mxu0 0
    %1295 = vmatpush1.bf16.msra.mxu0 0
    %1296 = vmatprep.subr.bf16.mxu0 0
    %1297 = vmatpush1.bf16.msra.mxu0 0
    %1298 = vmatprep.subr.bf16.mxu0 0
    %1299 = vmatpush1.bf16.msra.mxu0 0
    %1300 = vmatprep.subr.bf16.mxu0 0
    %1301 = vmatpush1.bf16.msra.mxu0 0
    %1302 = vmatprep.subr.bf16.mxu0 0
    %1303 = vmatpush1.bf16.msra.mxu0 0
    %1304 = vmatprep.mubr.bf16.mxu0 0
    %1305 = vmatmul.mubr.bf16.gmra.mrb[0].mxu0 %v1200
    %v1306 = vpop.f32.mrb[0].mxu0
    %v1307 = vadd.f32 %v1222, %v1306
    %v1308 = vpop.f32.mrb[0].mxu0
    %v1309 = vpop.f32.mrb[0].mxu0
    %v1310 = vadd.f32 %v1222, %v1309
    %v1311 = vpop.f32.mrb[0].mxu0
    %1312 = vdwg.mxu0
    %v1313 = vld [vmem:[%s22] sm:$0x1]
    %v1314 = vld [vmem:[%s23] sm:$0x1]
    %v1315 = vadd.f32 %v1307, %v1310
    %v1316 = vrot.slane %v1315, 4
    %v1317 = vadd.f32 %v1315, %v1316
    %v1318 = vrot.slane %v1317, 2
    %v1319 = vadd.f32 %v1317, %v1318
    %v1320 = vrot.slane %v1319, 1
    %v1321 = vadd.f32 %v1319, %v1320
    %v1322 = vmul.f32 %v1321, 0.0625
    %v1323 = vmul.f32 %v1307, %v1307
    %v1324 = vmul.f32 %v1310, %v1310
    %v1325 = vadd.f32 %v1323, %v1324
    %v1326 = vrot.slane %v1325, 4
    %v1327 = vadd.f32 %v1325, %v1326
    %v1328 = vrot.slane %v1327, 2
    %v1329 = vadd.f32 %v1327, %v1328
    %v1330 = vrot.slane %v1329, 1
    %v1331 = vadd.f32 %v1329, %v1330
    %v1332 = vmul.f32 %v1331, 0.0625
    %v1333 = vmul.f32 %v1322, %v1322
    %v1334 = vsub.f32 %v1332, %v1333
    %v1335 = vmax.f32 %v1334, 0.0
    %v1336 = vadd.f32 %v1335, 1e-05
    %v1337 = vrsqrt.pop %v1336
    %v1338 = vmul.f32 %v1313, %v1337
    %v1339 = vmul.f32 %v1322, %v1338
    %v1340 = vsub.f32 %v1314, %v1339
    %v1342 = vlaneseq
    %v1343 = vshrl.u32 %v1342, 7
    %v1344 = vsub.s32 0, %v1343
    %v1345 = vrot.slane %v1338, %v1344
    %v1347 = vmul.f32 %v1307, %v1345
    %v1348 = vmul.f32 %v1310, %v1345
    %v1350 = vlaneseq
    %v1351 = vshrl.u32 %v1350, 7
    %v1352 = vsub.s32 0, %v1351
    %v1353 = vrot.slane %v1340, %v1352
    %v1355 = vadd.f32 %v1347, %v1353
    %v1356 = vadd.f32 %v1348, %v1353
    %v1357 = vmax.f32 %v1355, 0.0
    %v1358 = vmax.f32 %v1356, 0.0
    %v1359 = vadd.f32 %v446, %v1357
    %v1360 = vadd.f32 %v447, %v1358
    %1361 = vst [vmem:[#allocation2] sm:$0xff] %v1359
    %1362 = vst [vmem:[#allocation2 + $0x8] sm:$0xff] %v1360
    %v1363 = vld [vmem:[#allocation2] sm:$0xff]
    %v1364 = vld [vmem:[#allocation2 + $0x8] sm:$0xff]
    %v1365 = vpack.c.bf16 %v1364, %v1363
    %1366 = vmatprep.subr.bf16.mxu0 0
    %1367 = vmatpush1.bf16.msra.mxu0 %v1365
    %1368 = vmatprep.subr.bf16.mxu0 0
    %1369 = vmatpush1.bf16.msra.mxu0 0
    %1370 = vmatprep.subr.bf16.mxu0 0
    %1371 = vmatpush1.bf16.msra.mxu0 0
    %1372 = vmatprep.subr.bf16.mxu0 0
    %1373 = vmatpush1.bf16.msra.mxu0 0
    %1374 = vmatprep.subr.bf16.mxu0 0
    %1375 = vmatpush1.bf16.msra.mxu0 0
    %1376 = vmatprep.subr.bf16.mxu0 0
    %1377 = vmatpush1.bf16.msra.mxu0 0
    %1378 = vmatprep.subr.bf16.mxu0 0
    %1379 = vmatpush1.bf16.msra.mxu0 0
    %1380 = vmatprep.subr.bf16.mxu0 0
    %1381 = vmatpush1.bf16.msra.mxu0 0
    %1382 = vmatprep.subr.bf16.mxu0 0
    %1383 = vmatpush1.bf16.msra.mxu0 0
    %1384 = vmatprep.subr.bf16.mxu0 0
    %1385 = vmatpush1.bf16.msra.mxu0 0
    %1386 = vmatprep.subr.bf16.mxu0 0
    %1387 = vmatpush1.bf16.msra.mxu0 0
    %1388 = vmatprep.subr.bf16.mxu0 0
    %1389 = vmatpush1.bf16.msra.mxu0 0
    %1390 = vmatprep.subr.bf16.mxu0 0
    %1391 = vmatpush1.bf16.msra.mxu0 0
    %1392 = vmatprep.subr.bf16.mxu0 0
    %1393 = vmatpush1.bf16.msra.mxu0 0
    %1394 = vmatprep.subr.bf16.mxu0 0
    %1395 = vmatpush1.bf16.msra.mxu0 0
    %1396 = vmatprep.subr.bf16.mxu0 0
    %1397 = vmatpush1.bf16.msra.mxu0 0
    %1398 = vmatprep.mubr.bf16.mxu0 0
    %1399 = vmatmul.mubr.bf16.gmra.mrb[0].mxu0 %v451
    %v1400 = vpop.f32.mrb[0].mxu0
    %v1401 = vadd.f32 0.0, %v1400
    %v1402 = vpop.f32.mrb[0].mxu0
    %v1403 = vpop.f32.mrb[0].mxu0
    %v1404 = vadd.f32 0.0, %v1403
    %v1405 = vpop.f32.mrb[0].mxu0
    %1406 = vmatprep.mubr.bf16.mxu0 0
    %1407 = vmatmul.mubr.bf16.gmra.mrb[0].mxu0 %v454
    %v1408 = vpop.f32.mrb[0].mxu0
    %v1409 = vadd.f32 0.0, %v1408
    %v1410 = vpop.f32.mrb[0].mxu0
    %v1411 = vpop.f32.mrb[0].mxu0
    %v1412 = vadd.f32 0.0, %v1411
    %v1413 = vpop.f32.mrb[0].mxu0
    %1414 = vmatprep.mubr.bf16.mxu0 0
    %1415 = vmatmul.mubr.bf16.gmra.mrb[0].mxu0 %v457
    %v1416 = vpop.f32.mrb[0].mxu0
    %v1417 = vadd.f32 0.0, %v1416
    %v1418 = vpop.f32.mrb[0].mxu0
    %v1419 = vpop.f32.mrb[0].mxu0
    %v1420 = vpop.f32.mrb[0].mxu0
    %1421 = vdwg.mxu0
    %1422 = vrot.lane.b32.xlu0 %v1401, 32
    %v1423 = vpop.permute.xlu0 %1422
    %1424 = vrot.lane.b32.xlu0 %v1404, 32
    %v1425 = vpop.permute.xlu0 %1424
    %1426 = vrot.lane.b32.xlu0 %v1409, 32
    %v1427 = vpop.permute.xlu0 %1426
    %1428 = vrot.lane.b32.xlu0 %v1412, 32
    %v1429 = vpop.permute.xlu0 %1428
    %1430 = vrot.lane.b32.xlu0 %v1417, 32
    %v1431 = vpop.permute.xlu0 %1430
    %1432 = vmatprep.subr.bf16.mxu0 0
    %1433 = vmatpush1.bf16.msra.mxu0 %v1365
    %1434 = vmatprep.subr.bf16.mxu0 0
    %1435 = vmatpush1.bf16.msra.mxu0 0
    %1436 = vmatprep.subr.bf16.mxu0 0
    %1437 = vmatpush1.bf16.msra.mxu0 0
    %1438 = vmatprep.subr.bf16.mxu0 0
    %1439 = vmatpush1.bf16.msra.mxu0 0
    %1440 = vmatprep.subr.bf16.mxu0 0
    %1441 = vmatpush1.bf16.msra.mxu0 0
    %1442 = vmatprep.subr.bf16.mxu0 0
    %1443 = vmatpush1.bf16.msra.mxu0 0
    %1444 = vmatprep.subr.bf16.mxu0 0
    %1445 = vmatpush1.bf16.msra.mxu0 0
    %1446 = vmatprep.subr.bf16.mxu0 0
    %1447 = vmatpush1.bf16.msra.mxu0 0
    %1448 = vmatprep.subr.bf16.mxu0 0
    %1449 = vmatpush1.bf16.msra.mxu0 0
    %1450 = vmatprep.subr.bf16.mxu0 0
    %1451 = vmatpush1.bf16.msra.mxu0 0
    %1452 = vmatprep.subr.bf16.mxu0 0
    %1453 = vmatpush1.bf16.msra.mxu0 0
    %1454 = vmatprep.subr.bf16.mxu0 0
    %1455 = vmatpush1.bf16.msra.mxu0 0
    %1456 = vmatprep.subr.bf16.mxu0 0
    %1457 = vmatpush1.bf16.msra.mxu0 0
    %1458 = vmatprep.subr.bf16.mxu0 0
    %1459 = vmatpush1.bf16.msra.mxu0 0
    %1460 = vmatprep.subr.bf16.mxu0 0
    %1461 = vmatpush1.bf16.msra.mxu0 0
    %1462 = vmatprep.subr.bf16.mxu0 0
    %1463 = vmatpush1.bf16.msra.mxu0 0
    %1464 = vmatprep.mubr.bf16.mxu0 0
    %1465 = vmatmul.mubr.bf16.gmra.mrb[0].mxu0 %v526
    %v1466 = vpop.f32.mrb[0].mxu0
    %v1467 = vadd.f32 %v1423, %v1466
    %v1468 = vpop.f32.mrb[0].mxu0
    %v1469 = vpop.f32.mrb[0].mxu0
    %v1470 = vadd.f32 %v1425, %v1469
    %v1471 = vpop.f32.mrb[0].mxu0
    %1472 = vmatprep.mubr.bf16.mxu0 0
    %1473 = vmatmul.mubr.bf16.gmra.mrb[0].mxu0 %v529
    %v1474 = vpop.f32.mrb[0].mxu0
    %v1475 = vadd.f32 %v1427, %v1474
    %v1476 = vpop.f32.mrb[0].mxu0
    %v1477 = vpop.f32.mrb[0].mxu0
    %v1478 = vadd.f32 %v1429, %v1477
    %v1479 = vpop.f32.mrb[0].mxu0
    %1480 = vmatprep.mubr.bf16.mxu0 0
    %1481 = vmatmul.mubr.bf16.gmra.mrb[0].mxu0 %v532
    %v1482 = vpop.f32.mrb[0].mxu0
    %v1483 = vadd.f32 %v1431, %v1482
    %v1484 = vpop.f32.mrb[0].mxu0
    %v1485 = vpop.f32.mrb[0].mxu0
    %v1486 = vpop.f32.mrb[0].mxu0
    %1487 = vdwg.mxu0
    %v1488 = vadd.f32 %v1467, %v324
    %v1489 = vadd.f32 %v1470, %v325
    %v1490 = vadd.f32 %v1475, %v326
    %v1491 = vadd.f32 %v1478, %v327
    %v1492 = vadd.f32 %v1483, %v328
    %v1493 = vpack.c.bf16 %v1489, %v1488
    %v1494 = vpack.c.bf16 %v1491, %v1490
    %v1495 = vpack.c.bf16 %v1492, %v1492
    %s1496 = scalar_lea.vmem [#allocation14], 64
    %v1497 = vld [vmem:[%s1496] sm:$0xf]
    %v1498 = vld [vmem:[%s1496 + $0x4] sm:$0xf]
    %v1499 = vld [vmem:[%s1496 + $0x8] sm:$0xf]
    %v1500 = vld [vmem:[%s1496 + $0xc] sm:$0xf]
    %v1501 = vld [vmem:[%s1496 + $0x10] sm:$0xf]
    %v1502 = vld [vmem:[%s1496 + $0x14] sm:$0xf]
    %v1503 = vld [vmem:[%s1496 + $0x18] sm:$0xf]
    %v1504 = vld [vmem:[%s1496 + $0x1c] sm:$0xf]
    %v1505 = vld [vmem:[%s1496 + $0x20] sm:$0xf]
    %v1506 = vld [vmem:[%s1496 + $0x24] sm:$0xf]
    %v1507 = vld [vmem:[%s1496 + $0x28] sm:$0xf]
    %v1508 = vld [vmem:[%s1496 + $0x2c] sm:$0xf]
    %v1509 = vld [vmem:[%s1496 + $0x30] sm:$0xf]
    %v1510 = vld [vmem:[%s1496 + $0x34] sm:$0xf]
    %v1511 = vld [vmem:[%s1496 + $0x38] sm:$0xf]
    %v1512 = vld [vmem:[%s1496 + $0x3c] sm:$0xf]
    %s1513 = scalar_lea.vmem %s9, 1
    %v1514 = vld [vmem:[%s1513] sm:$0x1]
    %v1516 = vlaneseq
    %v1517 = vshrl.u32 %v1516, 7
    %v1518 = vsub.s32 0, %v1517
    %v1519 = vrot.slane %v1514, %v1518
    %v1537 = vunpack.c.l.b16 %v1497
    %v1538 = vunpack.c.l.b16 %v1498
    %v1539 = vunpack.c.l.b16 %v1499
    %v1540 = vunpack.c.l.b16 %v1500
    %v1541 = vunpack.c.l.b16 %v1501
    %v1542 = vunpack.c.l.b16 %v1502
    %v1543 = vunpack.c.l.b16 %v1503
    %v1544 = vunpack.c.l.b16 %v1504
    %v1545 = vunpack.c.l.b16 %v1505
    %v1546 = vunpack.c.l.b16 %v1506
    %v1547 = vunpack.c.l.b16 %v1507
    %v1548 = vunpack.c.l.b16 %v1508
    %v1549 = vunpack.c.l.b16 %v1509
    %v1550 = vunpack.c.l.b16 %v1510
    %v1551 = vunpack.c.l.b16 %v1511
    %v1552 = vunpack.c.l.b16 %v1512
    %v1553 = vpack.c.b16 %v1538, %v1537
    %v1554 = vpack.c.b16 %v1540, %v1539
    %v1555 = vpack.c.b16 %v1542, %v1541
    %v1556 = vpack.c.b16 %v1544, %v1543
    %v1557 = vpack.c.b16 %v1546, %v1545
    %v1558 = vpack.c.b16 %v1548, %v1547
    %v1559 = vpack.c.b16 %v1550, %v1549
    %v1560 = vpack.c.b16 %v1552, %v1551
    %1569 = vmatprep.subr.bf16.mxu0 0
    %1570 = vmatpush1.bf16.msra.mxu0 %v1553
    %1571 = vmatprep.subr.bf16.mxu0 0
    %1572 = vmatpush1.bf16.msra.mxu0 %v1554
    %1573 = vmatprep.subr.bf16.mxu0 0
    %1574 = vmatpush1.bf16.msra.mxu0 %v1555
    %1575 = vmatprep.subr.bf16.mxu0 0
    %1576 = vmatpush1.bf16.msra.mxu0 %v1556
    %1577 = vmatprep.subr.bf16.mxu0 0
    %1578 = vmatpush1.bf16.msra.mxu0 %v1557
    %1579 = vmatprep.subr.bf16.mxu0 0
    %1580 = vmatpush1.bf16.msra.mxu0 %v1558
    %1581 = vmatprep.subr.bf16.mxu0 0
    %1582 = vmatpush1.bf16.msra.mxu0 %v1559
    %1583 = vmatprep.subr.bf16.mxu0 0
    %1584 = vmatpush1.bf16.msra.mxu0 %v1560
    %1585 = vmatprep.subr.bf16.mxu0 0
    %1586 = vmatpush1.bf16.msra.mxu0 0
    %1587 = vmatprep.subr.bf16.mxu0 0
    %1588 = vmatpush1.bf16.msra.mxu0 0
    %1589 = vmatprep.subr.bf16.mxu0 0
    %1590 = vmatpush1.bf16.msra.mxu0 0
    %1591 = vmatprep.subr.bf16.mxu0 0
    %1592 = vmatpush1.bf16.msra.mxu0 0
    %1593 = vmatprep.subr.bf16.mxu0 0
    %1594 = vmatpush1.bf16.msra.mxu0 0
    %1595 = vmatprep.subr.bf16.mxu0 0
    %1596 = vmatpush1.bf16.msra.mxu0 0
    %1597 = vmatprep.subr.bf16.mxu0 0
    %1598 = vmatpush1.bf16.msra.mxu0 0
    %1599 = vmatprep.subr.bf16.mxu0 0
    %1600 = vmatpush1.bf16.msra.mxu0 0
    %1601 = vmatprep.mubr.bf16.mxu0 0
    %1602 = vmatmul.mubr.bf16.gmra.mrb[0].mxu0 %v1493
    %v1603 = vpop.f32.mrb[0].mxu0
    %v1604 = vadd.f32 %v1519, %v1603
    %v1605 = vpop.f32.mrb[0].mxu0
    %v1606 = vpop.f32.mrb[0].mxu0
    %v1607 = vadd.f32 %v1519, %v1606
    %v1608 = vpop.f32.mrb[0].mxu0
    %1609 = vmatprep.mubr.bf16.mxu0 0
    %1610 = vmatmul.mubr.bf16.gmra.mrb[0].mxu0 %v1494
    %v1611 = vpop.f32.mrb[0].mxu0
    %v1612 = vadd.f32 %v1519, %v1611
    %v1613 = vpop.f32.mrb[0].mxu0
    %v1614 = vpop.f32.mrb[0].mxu0
    %v1615 = vadd.f32 %v1519, %v1614
    %v1616 = vpop.f32.mrb[0].mxu0
    %1617 = vmatprep.mubr.bf16.mxu0 0
    %1618 = vmatmul.mubr.bf16.gmra.mrb[0].mxu0 %v1495
    %v1619 = vpop.f32.mrb[0].mxu0
    %v1620 = vadd.f32 %v1519, %v1619
    %v1621 = vpop.f32.mrb[0].mxu0
    %v1622 = vpop.f32.mrb[0].mxu0
    %v1623 = vpop.f32.mrb[0].mxu0
    %1624 = vdwg.mxu0
    %s1625 = scalar_lea.vmem %s10, 1
    %v1626 = vld [vmem:[%s1625] sm:$0x1]
    %s1627 = scalar_lea.vmem %s11, 1
    %v1628 = vld [vmem:[%s1627] sm:$0x1]
    %v1629 = vadd.f32 %v1604, %v1607
    %v1630 = vadd.f32 %v1629, %v1612
    %v1631 = vadd.f32 %v1630, %v1615
    %v1632 = vadd.f32 %v1631, %v1620
    %v1633 = vrot.slane %v1632, 4
    %v1634 = vadd.f32 %v1632, %v1633
    %v1635 = vrot.slane %v1634, 2
    %v1636 = vadd.f32 %v1634, %v1635
    %v1637 = vrot.slane %v1636, 1
    %v1638 = vadd.f32 %v1636, %v1637
    %v1639 = vmul.f32 %v1638, 0.025
    %v1640 = vmul.f32 %v1604, %v1604
    %v1641 = vmul.f32 %v1607, %v1607
    %v1642 = vmul.f32 %v1612, %v1612
    %v1643 = vmul.f32 %v1615, %v1615
    %v1644 = vmul.f32 %v1620, %v1620
    %v1645 = vadd.f32 %v1640, %v1641
    %v1646 = vadd.f32 %v1645, %v1642
    %v1647 = vadd.f32 %v1646, %v1643
    %v1648 = vadd.f32 %v1647, %v1644
    %v1649 = vrot.slane %v1648, 4
    %v1650 = vadd.f32 %v1648, %v1649
    %v1651 = vrot.slane %v1650, 2
    %v1652 = vadd.f32 %v1650, %v1651
    %v1653 = vrot.slane %v1652, 1
    %v1654 = vadd.f32 %v1652, %v1653
    %v1655 = vmul.f32 %v1654, 0.025
    %v1656 = vmul.f32 %v1639, %v1639
    %v1657 = vsub.f32 %v1655, %v1656
    %v1658 = vmax.f32 %v1657, 0.0
    %v1659 = vadd.f32 %v1658, 1e-05
    %v1660 = vrsqrt.pop %v1659
    %v1661 = vmul.f32 %v1626, %v1660
    %v1662 = vmul.f32 %v1639, %v1661
    %v1663 = vsub.f32 %v1628, %v1662
    %v1665 = vlaneseq
    %v1666 = vshrl.u32 %v1665, 7
    %v1667 = vsub.s32 0, %v1666
    %v1668 = vrot.slane %v1661, %v1667
    %v1670 = vmul.f32 %v1604, %v1668
    %v1671 = vmul.f32 %v1607, %v1668
    %v1672 = vmul.f32 %v1612, %v1668
    %v1673 = vmul.f32 %v1615, %v1668
    %v1674 = vmul.f32 %v1620, %v1668
    %v1676 = vlaneseq
    %v1677 = vshrl.u32 %v1676, 7
    %v1678 = vsub.s32 0, %v1677
    %v1679 = vrot.slane %v1663, %v1678
    %v1681 = vadd.f32 %v1670, %v1679
    %v1682 = vadd.f32 %v1671, %v1679
    %v1683 = vadd.f32 %v1672, %v1679
    %v1684 = vadd.f32 %v1673, %v1679
    %v1685 = vadd.f32 %v1674, %v1679
    %v1686 = vmax.f32 %v1681, 0.0
    %v1687 = vmax.f32 %v1682, 0.0
    %v1688 = vmax.f32 %v1683, 0.0
    %v1689 = vmax.f32 %v1684, 0.0
    %v1690 = vmax.f32 %v1685, 0.0
    %v1691 = vpack.c.bf16 %v1687, %v1686
    %v1692 = vpack.c.bf16 %v1689, %v1688
    %v1693 = vpack.c.bf16 %v1690, %v1690
    %s1694 = scalar_lea.vmem [#allocation15], 64
    %v1695 = vld [vmem:[%s1694] sm:$0xf]
    %v1696 = vld [vmem:[%s1694 + $0x4] sm:$0xf]
    %v1697 = vld [vmem:[%s1694 + $0x8] sm:$0xf]
    %v1698 = vld [vmem:[%s1694 + $0xc] sm:$0xf]
    %v1699 = vld [vmem:[%s1694 + $0x10] sm:$0xf]
    %v1700 = vld [vmem:[%s1694 + $0x14] sm:$0xf]
    %v1701 = vld [vmem:[%s1694 + $0x18] sm:$0xf]
    %v1702 = vld [vmem:[%s1694 + $0x1c] sm:$0xf]
    %v1703 = vld [vmem:[%s1694 + $0x20] sm:$0xf]
    %v1704 = vld [vmem:[%s1694 + $0x24] sm:$0xf]
    %v1705 = vld [vmem:[%s1694 + $0x28] sm:$0xf]
    %v1706 = vld [vmem:[%s1694 + $0x2c] sm:$0xf]
    %v1707 = vld [vmem:[%s1694 + $0x30] sm:$0xf]
    %v1708 = vld [vmem:[%s1694 + $0x34] sm:$0xf]
    %v1709 = vld [vmem:[%s1694 + $0x38] sm:$0xf]
    %v1710 = vld [vmem:[%s1694 + $0x3c] sm:$0xf]
    %s1711 = scalar_lea.vmem %s13, 1
    %v1712 = vld [vmem:[%s1711] sm:$0x1]
    %v1714 = vlaneseq
    %v1715 = vshrl.u32 %v1714, 7
    %v1716 = vsub.s32 0, %v1715
    %v1717 = vrot.slane %v1712, %v1716
    %v1735 = vunpack.c.l.b16 %v1695
    %v1736 = vunpack.c.l.b16 %v1696
    %v1737 = vunpack.c.l.b16 %v1697
    %v1738 = vunpack.c.l.b16 %v1698
    %v1739 = vunpack.c.l.b16 %v1699
    %v1740 = vunpack.c.l.b16 %v1700
    %v1741 = vunpack.c.l.b16 %v1701
    %v1742 = vunpack.c.l.b16 %v1702
    %v1743 = vunpack.c.l.b16 %v1703
    %v1744 = vunpack.c.l.b16 %v1704
    %v1745 = vunpack.c.l.b16 %v1705
    %v1746 = vunpack.c.l.b16 %v1706
    %v1747 = vunpack.c.l.b16 %v1707
    %v1748 = vunpack.c.l.b16 %v1708
    %v1749 = vunpack.c.l.b16 %v1709
    %v1750 = vunpack.c.l.b16 %v1710
    %v1751 = vpack.c.b16 %v1736, %v1735
    %v1752 = vpack.c.b16 %v1738, %v1737
    %v1753 = vpack.c.b16 %v1740, %v1739
    %v1754 = vpack.c.b16 %v1742, %v1741
    %v1755 = vpack.c.b16 %v1744, %v1743
    %v1756 = vpack.c.b16 %v1746, %v1745
    %v1757 = vpack.c.b16 %v1748, %v1747
    %v1758 = vpack.c.b16 %v1750, %v1749
    %1767 = vmatprep.subr.bf16.mxu0 0
    %1768 = vmatpush1.bf16.msra.mxu0 %v1751
    %1769 = vmatprep.subr.bf16.mxu0 0
    %1770 = vmatpush1.bf16.msra.mxu0 %v1752
    %1771 = vmatprep.subr.bf16.mxu0 0
    %1772 = vmatpush1.bf16.msra.mxu0 %v1753
    %1773 = vmatprep.subr.bf16.mxu0 0
    %1774 = vmatpush1.bf16.msra.mxu0 %v1754
    %1775 = vmatprep.subr.bf16.mxu0 0
    %1776 = vmatpush1.bf16.msra.mxu0 %v1755
    %1777 = vmatprep.subr.bf16.mxu0 0
    %1778 = vmatpush1.bf16.msra.mxu0 %v1756
    %1779 = vmatprep.subr.bf16.mxu0 0
    %1780 = vmatpush1.bf16.msra.mxu0 %v1757
    %1781 = vmatprep.subr.bf16.mxu0 0
    %1782 = vmatpush1.bf16.msra.mxu0 %v1758
    %1783 = vmatprep.subr.bf16.mxu0 0
    %1784 = vmatpush1.bf16.msra.mxu0 0
    %1785 = vmatprep.subr.bf16.mxu0 0
    %1786 = vmatpush1.bf16.msra.mxu0 0
    %1787 = vmatprep.subr.bf16.mxu0 0
    %1788 = vmatpush1.bf16.msra.mxu0 0
    %1789 = vmatprep.subr.bf16.mxu0 0
    %1790 = vmatpush1.bf16.msra.mxu0 0
    %1791 = vmatprep.subr.bf16.mxu0 0
    %1792 = vmatpush1.bf16.msra.mxu0 0
    %1793 = vmatprep.subr.bf16.mxu0 0
    %1794 = vmatpush1.bf16.msra.mxu0 0
    %1795 = vmatprep.subr.bf16.mxu0 0
    %1796 = vmatpush1.bf16.msra.mxu0 0
    %1797 = vmatprep.subr.bf16.mxu0 0
    %1798 = vmatpush1.bf16.msra.mxu0 0
    %1799 = vmatprep.mubr.bf16.mxu0 0
    %1800 = vmatmul.mubr.bf16.gmra.mrb[0].mxu0 %v1691
    %v1801 = vpop.f32.mrb[0].mxu0
    %v1802 = vadd.f32 %v1717, %v1801
    %v1803 = vpop.f32.mrb[0].mxu0
    %v1804 = vpop.f32.mrb[0].mxu0
    %v1805 = vadd.f32 %v1717, %v1804
    %v1806 = vpop.f32.mrb[0].mxu0
    %1807 = vmatprep.mubr.bf16.mxu0 0
    %1808 = vmatmul.mubr.bf16.gmra.mrb[0].mxu0 %v1692
    %v1809 = vpop.f32.mrb[0].mxu0
    %v1810 = vadd.f32 %v1717, %v1809
    %v1811 = vpop.f32.mrb[0].mxu0
    %v1812 = vpop.f32.mrb[0].mxu0
    %v1813 = vadd.f32 %v1717, %v1812
    %v1814 = vpop.f32.mrb[0].mxu0
    %1815 = vmatprep.mubr.bf16.mxu0 0
    %1816 = vmatmul.mubr.bf16.gmra.mrb[0].mxu0 %v1693
    %v1817 = vpop.f32.mrb[0].mxu0
    %v1818 = vadd.f32 %v1717, %v1817
    %v1819 = vpop.f32.mrb[0].mxu0
    %v1820 = vpop.f32.mrb[0].mxu0
    %v1821 = vpop.f32.mrb[0].mxu0
    %1822 = vdwg.mxu0
    %s1823 = scalar_lea.vmem %s14, 1
    %v1824 = vld [vmem:[%s1823] sm:$0x1]
    %s1825 = scalar_lea.vmem %s15, 1
    %v1826 = vld [vmem:[%s1825] sm:$0x1]
    %v1827 = vadd.f32 %v1802, %v1805
    %v1828 = vadd.f32 %v1827, %v1810
    %v1829 = vadd.f32 %v1828, %v1813
    %v1830 = vadd.f32 %v1829, %v1818
    %v1831 = vrot.slane %v1830, 4
    %v1832 = vadd.f32 %v1830, %v1831
    %v1833 = vrot.slane %v1832, 2
    %v1834 = vadd.f32 %v1832, %v1833
    %v1835 = vrot.slane %v1834, 1
    %v1836 = vadd.f32 %v1834, %v1835
    %v1837 = vmul.f32 %v1836, 0.025
    %v1838 = vmul.f32 %v1802, %v1802
    %v1839 = vmul.f32 %v1805, %v1805
    %v1840 = vmul.f32 %v1810, %v1810
    %v1841 = vmul.f32 %v1813, %v1813
    %v1842 = vmul.f32 %v1818, %v1818
    %v1843 = vadd.f32 %v1838, %v1839
    %v1844 = vadd.f32 %v1843, %v1840
    %v1845 = vadd.f32 %v1844, %v1841
    %v1846 = vadd.f32 %v1845, %v1842
    %v1847 = vrot.slane %v1846, 4
    %v1848 = vadd.f32 %v1846, %v1847
    %v1849 = vrot.slane %v1848, 2
    %v1850 = vadd.f32 %v1848, %v1849
    %v1851 = vrot.slane %v1850, 1
    %v1852 = vadd.f32 %v1850, %v1851
    %v1853 = vmul.f32 %v1852, 0.025
    %v1854 = vmul.f32 %v1837, %v1837
    %v1855 = vsub.f32 %v1853, %v1854
    %v1856 = vmax.f32 %v1855, 0.0
    %v1857 = vadd.f32 %v1856, 1e-05
    %v1858 = vrsqrt.pop %v1857
    %v1859 = vmul.f32 %v1824, %v1858
    %v1860 = vmul.f32 %v1837, %v1859
    %v1861 = vsub.f32 %v1826, %v1860
    %v1863 = vlaneseq
    %v1864 = vshrl.u32 %v1863, 7
    %v1865 = vsub.s32 0, %v1864
    %v1866 = vrot.slane %v1859, %v1865
    %v1868 = vmul.f32 %v1802, %v1866
    %v1869 = vmul.f32 %v1805, %v1866
    %v1870 = vmul.f32 %v1810, %v1866
    %v1871 = vmul.f32 %v1813, %v1866
    %v1872 = vmul.f32 %v1818, %v1866
    %v1874 = vlaneseq
    %v1875 = vshrl.u32 %v1874, 7
    %v1876 = vsub.s32 0, %v1875
    %v1877 = vrot.slane %v1861, %v1876
    %v1879 = vadd.f32 %v1868, %v1877
    %v1880 = vadd.f32 %v1869, %v1877
    %v1881 = vadd.f32 %v1870, %v1877
    %v1882 = vadd.f32 %v1871, %v1877
    %v1883 = vadd.f32 %v1872, %v1877
    %v1884 = vmax.f32 %v1879, 0.0
    %v1885 = vmax.f32 %v1880, 0.0
    %v1886 = vmax.f32 %v1881, 0.0
    %v1887 = vmax.f32 %v1882, 0.0
    %v1888 = vmax.f32 %v1883, 0.0
    %v1889 = vpack.c.bf16 %v1885, %v1884
    %v1890 = vpack.c.bf16 %v1887, %v1886
    %v1891 = vpack.c.bf16 %v1888, %v1888
    %v1893 = vsel %vm990, %v1891, 0
    %1895 = vmatprep.subr.bf16.mxu0 0
    %1896 = vmatpush1.bf16.msra.mxu0 %v1889
    %1897 = vmatprep.subr.bf16.mxu0 0
    %1898 = vmatpush1.bf16.msra.mxu0 %v1890
    %1899 = vmatprep.subr.bf16.mxu0 0
    %1900 = vmatpush1.bf16.msra.mxu0 %v1893
    %1901 = vmatprep.subr.bf16.mxu0 0
    %1902 = vmatpush1.bf16.msra.mxu0 0
    %1903 = vmatprep.subr.bf16.mxu0 0
    %1904 = vmatpush1.bf16.msra.mxu0 0
    %1905 = vmatprep.subr.bf16.mxu0 0
    %1906 = vmatpush1.bf16.msra.mxu0 0
    %1907 = vmatprep.subr.bf16.mxu0 0
    %1908 = vmatpush1.bf16.msra.mxu0 0
    %1909 = vmatprep.subr.bf16.mxu0 0
    %1910 = vmatpush1.bf16.msra.mxu0 0
    %1911 = vmatprep.subr.bf16.mxu0 0
    %1912 = vmatpush1.bf16.msra.mxu0 0
    %1913 = vmatprep.subr.bf16.mxu0 0
    %1914 = vmatpush1.bf16.msra.mxu0 0
    %1915 = vmatprep.subr.bf16.mxu0 0
    %1916 = vmatpush1.bf16.msra.mxu0 0
    %1917 = vmatprep.subr.bf16.mxu0 0
    %1918 = vmatpush1.bf16.msra.mxu0 0
    %1919 = vmatprep.subr.bf16.mxu0 0
    %1920 = vmatpush1.bf16.msra.mxu0 0
    %1921 = vmatprep.subr.bf16.mxu0 0
    %1922 = vmatpush1.bf16.msra.mxu0 0
    %1923 = vmatprep.subr.bf16.mxu0 0
    %1924 = vmatpush1.bf16.msra.mxu0 0
    %1925 = vmatprep.subr.bf16.mxu0 0
    %1926 = vmatpush1.bf16.msra.mxu0 0
    %1927 = vmatprep.mubr.bf16.mxu0 0
    %1928 = vmatmul.mubr.bf16.gmra.mrb[0].mxu0 %v988
    %v1929 = vpop.f32.mrb[0].mxu0
    %v1930 = vadd.f32 0.0, %v1929
    %v1931 = vpop.f32.mrb[0].mxu0
    %v1932 = vpop.f32.mrb[0].mxu0
    %v1933 = vadd.f32 0.0, %v1932
    %v1934 = vpop.f32.mrb[0].mxu0
    %1935 = vdwg.mxu0
    %1936 = vrot.lane.b32.xlu0 %v1930, 32
    %v1937 = vpop.permute.xlu0 %1936
    %1938 = vrot.lane.b32.xlu0 %v1933, 32
    %v1939 = vpop.permute.xlu0 %1938
    %v1940 = vadd.f32 %v1363, %v1937
    %v1941 = vadd.f32 %v1364, %v1939
    %v1942 = vpack.c.bf16 %v1941, %v1940
    %s1943 = scalar_lea.vmem %s16, 64
    %v1944 = vld [vmem:[%s1943] sm:$0xf]
    %v1945 = vld [vmem:[%s1943 + $0x4] sm:$0xf]
    %v1946 = vld [vmem:[%s1943 + $0x8] sm:$0xf]
    %v1947 = vld [vmem:[%s1943 + $0xc] sm:$0xf]
    %v1948 = vld [vmem:[%s1943 + $0x10] sm:$0xf]
    %v1949 = vld [vmem:[%s1943 + $0x14] sm:$0xf]
    %v1950 = vld [vmem:[%s1943 + $0x18] sm:$0xf]
    %v1951 = vld [vmem:[%s1943 + $0x1c] sm:$0xf]
    %v1952 = vld [vmem:[%s1943 + $0x20] sm:$0xf]
    %v1953 = vld [vmem:[%s1943 + $0x24] sm:$0xf]
    %v1954 = vld [vmem:[%s1943 + $0x28] sm:$0xf]
    %v1955 = vld [vmem:[%s1943 + $0x2c] sm:$0xf]
    %v1956 = vld [vmem:[%s1943 + $0x30] sm:$0xf]
    %v1957 = vld [vmem:[%s1943 + $0x34] sm:$0xf]
    %v1958 = vld [vmem:[%s1943 + $0x38] sm:$0xf]
    %v1959 = vld [vmem:[%s1943 + $0x3c] sm:$0xf]
    %s1960 = scalar_lea.vmem %s17, 1
    %v1961 = vld [vmem:[%s1960] sm:$0x1]
    %v1963 = vlaneseq
    %v1964 = vshrl.u32 %v1963, 7
    %v1965 = vsub.s32 0, %v1964
    %v1966 = vrot.slane %v1961, %v1965
    %v1984 = vunpack.c.l.b16 %v1944
    %v1985 = vunpack.c.l.b16 %v1945
    %v1986 = vunpack.c.l.b16 %v1946
    %v1987 = vunpack.c.l.b16 %v1947
    %v1988 = vunpack.c.l.b16 %v1948
    %v1989 = vunpack.c.l.b16 %v1949
    %v1990 = vunpack.c.l.b16 %v1950
    %v1991 = vunpack.c.l.b16 %v1951
    %v1992 = vunpack.c.l.b16 %v1952
    %v1993 = vunpack.c.l.b16 %v1953
    %v1994 = vunpack.c.l.b16 %v1954
    %v1995 = vunpack.c.l.b16 %v1955
    %v1996 = vunpack.c.l.b16 %v1956
    %v1997 = vunpack.c.l.b16 %v1957
    %v1998 = vunpack.c.l.b16 %v1958
    %v1999 = vunpack.c.l.b16 %v1959
    %v2000 = vpack.c.b16 %v1985, %v1984
    %v2001 = vpack.c.b16 %v1987, %v1986
    %v2002 = vpack.c.b16 %v1989, %v1988
    %v2003 = vpack.c.b16 %v1991, %v1990
    %v2004 = vpack.c.b16 %v1993, %v1992
    %v2005 = vpack.c.b16 %v1995, %v1994
    %v2006 = vpack.c.b16 %v1997, %v1996
    %v2007 = vpack.c.b16 %v1999, %v1998
    %2016 = vmatprep.subr.bf16.mxu0 0
    %2017 = vmatpush1.bf16.msra.mxu0 %v2000
    %2018 = vmatprep.subr.bf16.mxu0 0
    %2019 = vmatpush1.bf16.msra.mxu0 %v2001
    %2020 = vmatprep.subr.bf16.mxu0 0
    %2021 = vmatpush1.bf16.msra.mxu0 %v2002
    %2022 = vmatprep.subr.bf16.mxu0 0
    %2023 = vmatpush1.bf16.msra.mxu0 %v2003
    %2024 = vmatprep.subr.bf16.mxu0 0
    %2025 = vmatpush1.bf16.msra.mxu0 %v2004
    %2026 = vmatprep.subr.bf16.mxu0 0
    %2027 = vmatpush1.bf16.msra.mxu0 %v2005
    %2028 = vmatprep.subr.bf16.mxu0 0
    %2029 = vmatpush1.bf16.msra.mxu0 %v2006
    %2030 = vmatprep.subr.bf16.mxu0 0
    %2031 = vmatpush1.bf16.msra.mxu0 %v2007
    %2032 = vmatprep.subr.bf16.mxu0 0
    %2033 = vmatpush1.bf16.msra.mxu0 0
    %2034 = vmatprep.subr.bf16.mxu0 0
    %2035 = vmatpush1.bf16.msra.mxu0 0
    %2036 = vmatprep.subr.bf16.mxu0 0
    %2037 = vmatpush1.bf16.msra.mxu0 0
    %2038 = vmatprep.subr.bf16.mxu0 0
    %2039 = vmatpush1.bf16.msra.mxu0 0
    %2040 = vmatprep.subr.bf16.mxu0 0
    %2041 = vmatpush1.bf16.msra.mxu0 0
    %2042 = vmatprep.subr.bf16.mxu0 0
    %2043 = vmatpush1.bf16.msra.mxu0 0
    %2044 = vmatprep.subr.bf16.mxu0 0
    %2045 = vmatpush1.bf16.msra.mxu0 0
    %2046 = vmatprep.subr.bf16.mxu0 0
    %2047 = vmatpush1.bf16.msra.mxu0 0
    %2048 = vmatprep.mubr.bf16.mxu0 0
    %2049 = vmatmul.mubr.bf16.gmra.mrb[0].mxu0 %v1942
    %v2050 = vpop.f32.mrb[0].mxu0
    %v2051 = vadd.f32 %v1966, %v2050
    %v2052 = vpop.f32.mrb[0].mxu0
    %v2053 = vpop.f32.mrb[0].mxu0
    %v2054 = vadd.f32 %v1966, %v2053
    %v2055 = vpop.f32.mrb[0].mxu0
    %2056 = vdwg.mxu0
    %s2057 = scalar_lea.vmem %s18, 1
    %v2058 = vld [vmem:[%s2057] sm:$0x1]
    %s2059 = scalar_lea.vmem %s19, 1
    %v2060 = vld [vmem:[%s2059] sm:$0x1]
    %v2061 = vadd.f32 %v2051, %v2054
    %v2062 = vrot.slane %v2061, 4
    %v2063 = vadd.f32 %v2061, %v2062
    %v2064 = vrot.slane %v2063, 2
    %v2065 = vadd.f32 %v2063, %v2064
    %v2066 = vrot.slane %v2065, 1
    %v2067 = vadd.f32 %v2065, %v2066
    %v2068 = vmul.f32 %v2067, 0.0625
    %v2069 = vmul.f32 %v2051, %v2051
    %v2070 = vmul.f32 %v2054, %v2054
    %v2071 = vadd.f32 %v2069, %v2070
    %v2072 = vrot.slane %v2071, 4
    %v2073 = vadd.f32 %v2071, %v2072
    %v2074 = vrot.slane %v2073, 2
    %v2075 = vadd.f32 %v2073, %v2074
    %v2076 = vrot.slane %v2075, 1
    %v2077 = vadd.f32 %v2075, %v2076
    %v2078 = vmul.f32 %v2077, 0.0625
    %v2079 = vmul.f32 %v2068, %v2068
    %v2080 = vsub.f32 %v2078, %v2079
    %v2081 = vmax.f32 %v2080, 0.0
    %v2082 = vadd.f32 %v2081, 1e-05
    %v2083 = vrsqrt.pop %v2082
    %v2084 = vmul.f32 %v2058, %v2083
    %v2085 = vmul.f32 %v2068, %v2084
    %v2086 = vsub.f32 %v2060, %v2085
    %v2088 = vlaneseq
    %v2089 = vshrl.u32 %v2088, 7
    %v2090 = vsub.s32 0, %v2089
    %v2091 = vrot.slane %v2084, %v2090
    %v2093 = vmul.f32 %v2051, %v2091
    %v2094 = vmul.f32 %v2054, %v2091
    %v2096 = vlaneseq
    %v2097 = vshrl.u32 %v2096, 7
    %v2098 = vsub.s32 0, %v2097
    %v2099 = vrot.slane %v2086, %v2098
    %v2101 = vadd.f32 %v2093, %v2099
    %v2102 = vadd.f32 %v2094, %v2099
    %v2103 = vmax.f32 %v2101, 0.0
    %v2104 = vmax.f32 %v2102, 0.0
    %v2105 = vpack.c.bf16 %v2104, %v2103
    %s2106 = scalar_lea.vmem [#allocation17], 64
    %v2107 = vld [vmem:[%s2106] sm:$0xf]
    %v2108 = vld [vmem:[%s2106 + $0x4] sm:$0xf]
    %v2109 = vld [vmem:[%s2106 + $0x8] sm:$0xf]
    %v2110 = vld [vmem:[%s2106 + $0xc] sm:$0xf]
    %v2111 = vld [vmem:[%s2106 + $0x10] sm:$0xf]
    %v2112 = vld [vmem:[%s2106 + $0x14] sm:$0xf]
    %v2113 = vld [vmem:[%s2106 + $0x18] sm:$0xf]
    %v2114 = vld [vmem:[%s2106 + $0x1c] sm:$0xf]
    %v2115 = vld [vmem:[%s2106 + $0x20] sm:$0xf]
    %v2116 = vld [vmem:[%s2106 + $0x24] sm:$0xf]
    %v2117 = vld [vmem:[%s2106 + $0x28] sm:$0xf]
    %v2118 = vld [vmem:[%s2106 + $0x2c] sm:$0xf]
    %v2119 = vld [vmem:[%s2106 + $0x30] sm:$0xf]
    %v2120 = vld [vmem:[%s2106 + $0x34] sm:$0xf]
    %v2121 = vld [vmem:[%s2106 + $0x38] sm:$0xf]
    %v2122 = vld [vmem:[%s2106 + $0x3c] sm:$0xf]
    %s2123 = scalar_lea.vmem %s21, 1
    %v2124 = vld [vmem:[%s2123] sm:$0x1]
    %v2126 = vlaneseq
    %v2127 = vshrl.u32 %v2126, 7
    %v2128 = vsub.s32 0, %v2127
    %v2129 = vrot.slane %v2124, %v2128
    %v2147 = vunpack.c.l.b16 %v2107
    %v2148 = vunpack.c.l.b16 %v2108
    %v2149 = vunpack.c.l.b16 %v2109
    %v2150 = vunpack.c.l.b16 %v2110
    %v2151 = vunpack.c.l.b16 %v2111
    %v2152 = vunpack.c.l.b16 %v2112
    %v2153 = vunpack.c.l.b16 %v2113
    %v2154 = vunpack.c.l.b16 %v2114
    %v2155 = vunpack.c.l.b16 %v2115
    %v2156 = vunpack.c.l.b16 %v2116
    %v2157 = vunpack.c.l.b16 %v2117
    %v2158 = vunpack.c.l.b16 %v2118
    %v2159 = vunpack.c.l.b16 %v2119
    %v2160 = vunpack.c.l.b16 %v2120
    %v2161 = vunpack.c.l.b16 %v2121
    %v2162 = vunpack.c.l.b16 %v2122
    %v2163 = vpack.c.b16 %v2148, %v2147
    %v2164 = vpack.c.b16 %v2150, %v2149
    %v2165 = vpack.c.b16 %v2152, %v2151
    %v2166 = vpack.c.b16 %v2154, %v2153
    %v2167 = vpack.c.b16 %v2156, %v2155
    %v2168 = vpack.c.b16 %v2158, %v2157
    %v2169 = vpack.c.b16 %v2160, %v2159
    %v2170 = vpack.c.b16 %v2162, %v2161
    %2179 = vmatprep.subr.bf16.mxu0 0
    %2180 = vmatpush1.bf16.msra.mxu0 %v2163
    %2181 = vmatprep.subr.bf16.mxu0 0
    %2182 = vmatpush1.bf16.msra.mxu0 %v2164
    %2183 = vmatprep.subr.bf16.mxu0 0
    %2184 = vmatpush1.bf16.msra.mxu0 %v2165
    %2185 = vmatprep.subr.bf16.mxu0 0
    %2186 = vmatpush1.bf16.msra.mxu0 %v2166
    %2187 = vmatprep.subr.bf16.mxu0 0
    %2188 = vmatpush1.bf16.msra.mxu0 %v2167
    %2189 = vmatprep.subr.bf16.mxu0 0
    %2190 = vmatpush1.bf16.msra.mxu0 %v2168
    %2191 = vmatprep.subr.bf16.mxu0 0
    %2192 = vmatpush1.bf16.msra.mxu0 %v2169
    %2193 = vmatprep.subr.bf16.mxu0 0
    %2194 = vmatpush1.bf16.msra.mxu0 %v2170
    %2195 = vmatprep.subr.bf16.mxu0 0
    %2196 = vmatpush1.bf16.msra.mxu0 0
    %2197 = vmatprep.subr.bf16.mxu0 0
    %2198 = vmatpush1.bf16.msra.mxu0 0
    %2199 = vmatprep.subr.bf16.mxu0 0
    %2200 = vmatpush1.bf16.msra.mxu0 0
    %2201 = vmatprep.subr.bf16.mxu0 0
    %2202 = vmatpush1.bf16.msra.mxu0 0
    %2203 = vmatprep.subr.bf16.mxu0 0
    %2204 = vmatpush1.bf16.msra.mxu0 0
    %2205 = vmatprep.subr.bf16.mxu0 0
    %2206 = vmatpush1.bf16.msra.mxu0 0
    %2207 = vmatprep.subr.bf16.mxu0 0
    %2208 = vmatpush1.bf16.msra.mxu0 0
    %2209 = vmatprep.subr.bf16.mxu0 0
    %2210 = vmatpush1.bf16.msra.mxu0 0
    %2211 = vmatprep.mubr.bf16.mxu0 0
    %2212 = vmatmul.mubr.bf16.gmra.mrb[0].mxu0 %v2105
    %v2213 = vpop.f32.mrb[0].mxu0
    %v2214 = vadd.f32 %v2129, %v2213
    %v2215 = vpop.f32.mrb[0].mxu0
    %v2216 = vpop.f32.mrb[0].mxu0
    %v2217 = vadd.f32 %v2129, %v2216
    %v2218 = vpop.f32.mrb[0].mxu0
    %2219 = vdwg.mxu0
    %s2220 = scalar_lea.vmem %s22, 1
    %v2221 = vld [vmem:[%s2220] sm:$0x1]
    %s2222 = scalar_lea.vmem %s23, 1
    %v2223 = vld [vmem:[%s2222] sm:$0x1]
    %v2224 = vadd.f32 %v2214, %v2217
    %v2225 = vrot.slane %v2224, 4
    %v2226 = vadd.f32 %v2224, %v2225
    %v2227 = vrot.slane %v2226, 2
    %v2228 = vadd.f32 %v2226, %v2227
    %v2229 = vrot.slane %v2228, 1
    %v2230 = vadd.f32 %v2228, %v2229
    %v2231 = vmul.f32 %v2230, 0.0625
    %v2232 = vmul.f32 %v2214, %v2214
    %v2233 = vmul.f32 %v2217, %v2217
    %v2234 = vadd.f32 %v2232, %v2233
    %v2235 = vrot.slane %v2234, 4
    %v2236 = vadd.f32 %v2234, %v2235
    %v2237 = vrot.slane %v2236, 2
    %v2238 = vadd.f32 %v2236, %v2237
    %v2239 = vrot.slane %v2238, 1
    %v2240 = vadd.f32 %v2238, %v2239
    %v2241 = vmul.f32 %v2240, 0.0625
    %v2242 = vmul.f32 %v2231, %v2231
    %v2243 = vsub.f32 %v2241, %v2242
    %v2244 = vmax.f32 %v2243, 0.0
    %v2245 = vadd.f32 %v2244, 1e-05
    %v2246 = vrsqrt.pop %v2245
    %v2247 = vmul.f32 %v2221, %v2246
    %v2248 = vmul.f32 %v2231, %v2247
    %v2249 = vsub.f32 %v2223, %v2248
    %v2251 = vlaneseq
    %v2252 = vshrl.u32 %v2251, 7
    %v2253 = vsub.s32 0, %v2252
    %v2254 = vrot.slane %v2247, %v2253
    %v2256 = vmul.f32 %v2214, %v2254
    %v2257 = vmul.f32 %v2217, %v2254
    %v2259 = vlaneseq
    %v2260 = vshrl.u32 %v2259, 7
    %v2261 = vsub.s32 0, %v2260
    %v2262 = vrot.slane %v2249, %v2261
    %v2264 = vadd.f32 %v2256, %v2262
    %v2265 = vadd.f32 %v2257, %v2262
    %v2266 = vmax.f32 %v2264, 0.0
    %v2267 = vmax.f32 %v2265, 0.0
    %v2268 = vadd.f32 %v1363, %v2266
    %v2269 = vadd.f32 %v1364, %v2267
    %2270 = vst [vmem:[#allocation2] sm:$0xff] %v2268
    %2271 = vst [vmem:[#allocation2 + $0x8] sm:$0xff] %v2269
    %v2272 = vld [vmem:[#allocation2] sm:$0xff]
    %v2273 = vld [vmem:[#allocation2 + $0x8] sm:$0xff]
    %v2274 = vpack.c.bf16 %v2273, %v2272
    %v2276 = vsel %vm449, %v316, 0
    %2278 = vmatprep.subr.bf16.mxu0 0
    %2279 = vmatpush1.bf16.msra.mxu0 %v2274
    %2280 = vmatprep.subr.bf16.mxu0 0
    %2281 = vmatpush1.bf16.msra.mxu0 0
    %2282 = vmatprep.subr.bf16.mxu0 0
    %2283 = vmatpush1.bf16.msra.mxu0 0
    %2284 = vmatprep.subr.bf16.mxu0 0
    %2285 = vmatpush1.bf16.msra.mxu0 0
    %2286 = vmatprep.subr.bf16.mxu0 0
    %2287 = vmatpush1.bf16.msra.mxu0 0
    %2288 = vmatprep.subr.bf16.mxu0 0
    %2289 = vmatpush1.bf16.msra.mxu0 0
    %2290 = vmatprep.subr.bf16.mxu0 0
    %2291 = vmatpush1.bf16.msra.mxu0 0
    %2292 = vmatprep.subr.bf16.mxu0 0
    %2293 = vmatpush1.bf16.msra.mxu0 0
    %2294 = vmatprep.subr.bf16.mxu0 0
    %2295 = vmatpush1.bf16.msra.mxu0 0
    %2296 = vmatprep.subr.bf16.mxu0 0
    %2297 = vmatpush1.bf16.msra.mxu0 0
    %2298 = vmatprep.subr.bf16.mxu0 0
    %2299 = vmatpush1.bf16.msra.mxu0 0
    %2300 = vmatprep.subr.bf16.mxu0 0
    %2301 = vmatpush1.bf16.msra.mxu0 0
    %2302 = vmatprep.subr.bf16.mxu0 0
    %2303 = vmatpush1.bf16.msra.mxu0 0
    %2304 = vmatprep.subr.bf16.mxu0 0
    %2305 = vmatpush1.bf16.msra.mxu0 0
    %2306 = vmatprep.subr.bf16.mxu0 0
    %2307 = vmatpush1.bf16.msra.mxu0 0
    %2308 = vmatprep.subr.bf16.mxu0 0
    %2309 = vmatpush1.bf16.msra.mxu0 0
    %2310 = vmatprep.mubr.bf16.mxu0 0
    %2311 = vmatmul.mubr.bf16.gmra.mrb[0].mxu0 %v2276
    %v2312 = vpop.f32.mrb[0].mxu0
    %v2313 = vadd.f32 0.0, %v2312
    %v2314 = vpop.f32.mrb[0].mxu0
    %v2315 = vpop.f32.mrb[0].mxu0
    %v2316 = vpop.f32.mrb[0].mxu0
    %2317 = vdwg.mxu0
    %v2318 = vmul.f32 %v2313, %v323
    %v2319 = vpack.c.bf16 %v2318, %v2318
    %v2320 = vld [vmem:[#allocation18] sm:$0xf]
    %v2321 = vld [vmem:[#allocation18 + $0x4] sm:$0xf]
    %v2322 = vld [vmem:[#allocation18 + $0x8] sm:$0xf]
    %v2323 = vld [vmem:[#allocation18 + $0xc] sm:$0xf]
    %v2324 = vld [vmem:[#allocation18 + $0x10] sm:$0xf]
    %v2325 = vld [vmem:[#allocation18 + $0x14] sm:$0xf]
    %v2326 = vld [vmem:[#allocation18 + $0x18] sm:$0xf]
    %v2327 = vld [vmem:[#allocation18 + $0x1c] sm:$0xf]
    %v2328 = vld [vmem:[#allocation18 + $0x20] sm:$0xf]
    %v2329 = vld [vmem:[#allocation18 + $0x24] sm:$0xf]
    %v2330 = vld [vmem:[#allocation18 + $0x28] sm:$0xf]
    %v2331 = vld [vmem:[#allocation18 + $0x2c] sm:$0xf]
    %v2332 = vld [vmem:[#allocation18 + $0x30] sm:$0xf]
    %v2333 = vld [vmem:[#allocation18 + $0x34] sm:$0xf]
    %v2334 = vld [vmem:[#allocation18 + $0x38] sm:$0xf]
    %v2335 = vld [vmem:[#allocation18 + $0x3c] sm:$0xf]
    %v2336 = vld [vmem:[%s25] sm:$0x1]
    %v2338 = vlaneseq
    %v2339 = vshrl.u32 %v2338, 7
    %v2340 = vsub.s32 0, %v2339
    %v2341 = vrot.slane %v2336, %v2340
    %v2359 = vunpack.c.l.b16 %v2320
    %v2360 = vunpack.c.l.b16 %v2321
    %v2361 = vunpack.c.l.b16 %v2322
    %v2362 = vunpack.c.l.b16 %v2323
    %v2363 = vunpack.c.l.b16 %v2324
    %v2364 = vunpack.c.l.b16 %v2325
    %v2365 = vunpack.c.l.b16 %v2326
    %v2366 = vunpack.c.l.b16 %v2327
    %v2367 = vunpack.c.l.b16 %v2328
    %v2368 = vunpack.c.l.b16 %v2329
    %v2369 = vunpack.c.l.b16 %v2330
    %v2370 = vunpack.c.l.b16 %v2331
    %v2371 = vunpack.c.l.b16 %v2332
    %v2372 = vunpack.c.l.b16 %v2333
    %v2373 = vunpack.c.l.b16 %v2334
    %v2374 = vunpack.c.l.b16 %v2335
    %v2375 = vpack.c.b16 %v2360, %v2359
    %v2376 = vpack.c.b16 %v2362, %v2361
    %v2377 = vpack.c.b16 %v2364, %v2363
    %v2378 = vpack.c.b16 %v2366, %v2365
    %v2379 = vpack.c.b16 %v2368, %v2367
    %v2380 = vpack.c.b16 %v2370, %v2369
    %v2381 = vpack.c.b16 %v2372, %v2371
    %v2382 = vpack.c.b16 %v2374, %v2373
    %2391 = vmatprep.subr.bf16.mxu0 0
    %2392 = vmatpush1.bf16.msra.mxu0 %v2375
    %2393 = vmatprep.subr.bf16.mxu0 0
    %2394 = vmatpush1.bf16.msra.mxu0 %v2376
    %2395 = vmatprep.subr.bf16.mxu0 0
    %2396 = vmatpush1.bf16.msra.mxu0 %v2377
    %2397 = vmatprep.subr.bf16.mxu0 0
    %2398 = vmatpush1.bf16.msra.mxu0 %v2378
    %2399 = vmatprep.subr.bf16.mxu0 0
    %2400 = vmatpush1.bf16.msra.mxu0 %v2379
    %2401 = vmatprep.subr.bf16.mxu0 0
    %2402 = vmatpush1.bf16.msra.mxu0 %v2380
    %2403 = vmatprep.subr.bf16.mxu0 0
    %2404 = vmatpush1.bf16.msra.mxu0 %v2381
    %2405 = vmatprep.subr.bf16.mxu0 0
    %2406 = vmatpush1.bf16.msra.mxu0 %v2382
    %2407 = vmatprep.subr.bf16.mxu0 0
    %2408 = vmatpush1.bf16.msra.mxu0 0
    %2409 = vmatprep.subr.bf16.mxu0 0
    %2410 = vmatpush1.bf16.msra.mxu0 0
    %2411 = vmatprep.subr.bf16.mxu0 0
    %2412 = vmatpush1.bf16.msra.mxu0 0
    %2413 = vmatprep.subr.bf16.mxu0 0
    %2414 = vmatpush1.bf16.msra.mxu0 0
    %2415 = vmatprep.subr.bf16.mxu0 0
    %2416 = vmatpush1.bf16.msra.mxu0 0
    %2417 = vmatprep.subr.bf16.mxu0 0
    %2418 = vmatpush1.bf16.msra.mxu0 0
    %2419 = vmatprep.subr.bf16.mxu0 0
    %2420 = vmatpush1.bf16.msra.mxu0 0
    %2421 = vmatprep.subr.bf16.mxu0 0
    %2422 = vmatpush1.bf16.msra.mxu0 0
    %2423 = vmatprep.mubr.bf16.mxu0 0
    %2424 = vmatmul.mubr.bf16.gmra.mrb[0].mxu0 %v2319
    %v2425 = vpop.f32.mrb[0].mxu0
    %v2426 = vadd.f32 %v2341, %v2425
    %v2427 = vpop.f32.mrb[0].mxu0
    %v2428 = vpop.f32.mrb[0].mxu0
    %v2429 = vpop.f32.mrb[0].mxu0
    %2430 = vdwg.mxu0
    %2431 = vst [vmem:[#allocation20] sm:$0x3] %v2426
    // Predicated region
    $region146: #{tpu_custom_call.1} parent=1 // pred_check
      _
    $region147: #{tpu_custom_call.1} parent=1 // pred_check_branch
      %2433 = sbr.rel (0) target = $region149
    $region148: #{tpu_custom_call.1} parent=1 // pred_region
      %s2435 = ssub.s32 32, 32
      %2436 = vsyncadd [#allocation5], %s2435
      %s2438 = sshll.u32 [#allocation20], 4
      %s2439 = int_to_ptr.vmem [resolvable:$true] %s2438
      %2441 = dma.vmem_to_hbm [thread:$0]  %s2439, 32, %s26, [#allocation5]
    $region149: #{tpu_custom_call.1} parent=1 // pred_fallthru
      _
    // Predicated region
    $region150: #{tpu_custom_call.1} parent=1 // pred_check
      _
    $region151: #{tpu_custom_call.1} parent=1 // pred_check_branch
      %2443 = sbr.rel (0) target = $region153
    $region152: #{tpu_custom_call.1} parent=1 // pred_region
      %2444 = dma.done [#allocation5], 32
    $region153: #{tpu_custom_call.1} parent=1 // pred_fallthru
      _
    %2445 = vsyncpa [#allocation4], 1
    %2446 = vsyncpa [#allocation7], 1
    %2447 = vsyncpa [#allocation10], 1
    %2448 = vsyncpa [#allocation13], 1
    %2449 = vsyncpa [#allocation16], 1
    %2450 = vsyncpa [#allocation19], 1
    %2451 = vsyncpa [#allocation5], 1

</llo_original>
